<compile_context>
chip_gen: v6e
topology: v6e:2x2x1
jax: 0.10.0
libtpu: 0.0.40
codegen_flags: <defaults>
</compile_context>

<pallas_src>
import functools

import jax
import jax.numpy as jnp
from jax.experimental import pallas as pl
from jax.experimental.pallas import tpu as pltpu


# --------------------------------------------------------------------------- #
# helpers
# --------------------------------------------------------------------------- #

def _layer_norm(x, gamma, beta, eps):
    """LayerNorm over the last axis (biased variance), f32 math."""
    mean = jnp.mean(x, axis=-1, keepdims=True)
    var = jnp.mean(jnp.square(x - mean), axis=-1, keepdims=True)
    return (x - mean) * jax.lax.rsqrt(var + eps) * gamma + beta


def _sin(x):
    """sin(x) via exact range reduction + odd polynomial.

    Built only from floor / mul / add / where (all guaranteed Mosaic-supported),
    so the whole decoder stays in-kernel. |error| < 1e-6 for f32 inputs.
    """
    two_pi = 6.283185307179586
    pi = 3.141592653589793
    half_pi = 1.5707963267948966
    k = jnp.floor(x * (1.0 / two_pi) + 0.5)
    r = x - k * two_pi                        # r in [-pi, pi]
    r = jnp.where(r > half_pi, pi - r, r)
    r = jnp.where(r < -half_pi, -pi - r, r)   # r in [-pi/2, pi/2]
    r2 = r * r
    # Horner on the odd Taylor series up to r^13 (truncation error < 3e-10 on [-pi/2, pi/2])
    p = 1.0 / 6227020800.0
    p = p * r2 - 1.0 / 39916800.0
    p = p * r2 + 1.0 / 362880.0
    p = p * r2 - 1.0 / 5040.0
    p = p * r2 + 1.0 / 120.0
    p = p * r2 - 1.0 / 6.0
    return r + r * r2 * p


# --------------------------------------------------------------------------- #
# kernel 1: input projection
# --------------------------------------------------------------------------- #

def input_proj_kernel(x_ref, w_ref, b_ref, out_ref):
    out_ref[0] = (jnp.dot(x_ref[0], w_ref[...], preferred_element_type=jnp.float32)
                  + b_ref[...]).astype(out_ref.dtype)


def input_proj(x, w, b):
    B, S, F = x.shape
    D = w.shape[1]
    return pl.pallas_call(
        input_proj_kernel,
        out_shape=jax.ShapeDtypeStruct((B, S, D), jnp.float32),
        grid=(B,),
        in_specs=[
            pl.BlockSpec((1, S, F), lambda b: (b, 0, 0)),
            pl.BlockSpec((F, D), lambda b: (0, 0)),
            pl.BlockSpec((1, D), lambda b: (0, 0)),
        ],
        out_specs=pl.BlockSpec((1, S, D), lambda b: (b, 0, 0)),
        compiler_params=pltpu.CompilerParams(dimension_semantics=("parallel",)),
    )(x, w, b)


# --------------------------------------------------------------------------- #
# kernel 2: fused encoder layer (MHA + residuals/LayerNorms + FFN)
# --------------------------------------------------------------------------- #

def encoder_layer_kernel(
    x_ref,                                    # (1, S, D)  f32, full sequence (resident across q tiles)
    wq_ref, wk_ref, wv_ref,                   # (D, H*dk), (D, H*dk), (D, H*dv)   bf16
    wfc_ref,                                  # (H, d_v, D)                        bf16
    g_attn_ref, b_attn_ref,                   # (1, D) f32   attention-internal LN (eps=1e-6)
    g1_ref, b1_ref,                           # (1, D) f32   layernorm1 (eps=1e-5)
    w1_ref, bf1_ref, w2_ref, bf2_ref,         # (D, dff) bf16, (1, dff) f32, (dff, D) bf16, (1, D) f32
    g2_ref, b2_ref,                           # (1, D) f32   layernorm2 (eps=1e-5)
    out_ref,                                  # (1, TQ, D) f32
    qh_sc, kh_sc, vh_sc,                      # VMEM scratch: (H, TQ, dk), (H, S, dk), (H, S, dv) f32
    *, n_heads, d_k, d_v, tq,
):
    qi = pl.program_id(1)
    q0 = pl.multiple_of(qi * tq, tq)

    x_full = x_ref[0]                              # (S, D)  f32
    xq = x_ref[0, pl.ds(q0, tq), :]                # (TQ, D) f32 residual path
    x_bf = x_full.astype(jnp.bfloat16)
    xq_bf = xq.astype(jnp.bfloat16)

    # ---- Q/K/V projections: bf16 MXU operands, f32 accumulation ----------------
    q = jnp.dot(xq_bf, wq_ref[...], preferred_element_type=jnp.float32)   # (TQ, H*dk)
    k = jnp.dot(x_bf, wk_ref[...], preferred_element_type=jnp.float32)    # (S,  H*dk)
    v = jnp.dot(x_bf, wv_ref[...], preferred_element_type=jnp.float32)    # (S,  H*dv)

    # ---- split heads onto the leading (batch) axis via VMEM scratch ------------
    # (avoids any lane-axis concatenation / value transposes)
    for h in range(n_heads):
        qh_sc[h] = q[:, h * d_k:(h + 1) * d_k]
        kh_sc[h] = k[:, h * d_k:(h + 1) * d_k]
        vh_sc[h] = v[:, h * d_v:(h + 1) * d_v]
    qh = qh_sc[...].astype(jnp.bfloat16)           # (H, TQ, dk)
    kh = kh_sc[...].astype(jnp.bfloat16)           # (H, S,  dk)
    vh = vh_sc[...].astype(jnp.bfloat16)           # (H, S,  dv)

    # ---- scaled dot-product attention, heads batched ---------------------------
    inv_scale = jnp.float32(1.0 / (d_k ** 0.5))
    scores = jnp.einsum("hqd,hkd->hqk", qh, kh,
                        preferred_element_type=jnp.float32) * inv_scale   # (H, TQ, S)
    m = jnp.max(scores, axis=-1, keepdims=True)
    e = jnp.exp(scores - m)
    denom = jnp.sum(e, axis=-1, keepdims=True)
    probs = (e * pl.reciprocal(denom, approx=True)).astype(jnp.bfloat16)
    ctx = jnp.einsum("hqk,hkv->hqv", probs, vh,
                     preferred_element_type=jnp.float32)                  # (H, TQ, dv)

    # ---- output projection folded per head (wfc is (H, dv, D)); sum over heads -
    attn_h = jnp.einsum("hqv,hvd->hqd", ctx.astype(jnp.bfloat16), wfc_ref[...],
                        preferred_element_type=jnp.float32)               # (H, TQ, D)
    attn = jnp.sum(attn_h, axis=0)                                        # (TQ, D)

    # dropout layers are identity (eval mode)
    attn_out = _layer_norm(xq + attn, g_attn_ref[...], b_attn_ref[...], 1e-6)
    x1 = _layer_norm(xq + attn_out, g1_ref[...], b1_ref[...], 1e-5)

    # ---- FFN (bf16 MXU operands, f32 accumulation; ReLU in f32) ----------------
    h1 = jnp.dot(x1.astype(jnp.bfloat16), w1_ref[...],
                 preferred_element_type=jnp.float32) + bf1_ref[...]
    h1 = jnp.maximum(h1, 0.0)
    ffn = jnp.dot(h1.astype(jnp.bfloat16), w2_ref[...],
                  preferred_element_type=jnp.float32) + bf2_ref[...]

    out_ref[0] = _layer_norm(x1 + ffn, g2_ref[...], b2_ref[...], 1e-5).astype(out_ref.dtype)


def encoder_layer(x, lp, *, n_heads, d_k, d_v):
    B, S, D = x.shape
    d_ff = lp["w1"].shape[1]
    hdk, hdv = n_heads * d_k, n_heads * d_v
    tq = S if S <= 128 else 128          # query tile (full S when small; 128 rows otherwise)
    assert S % tq == 0
    n_q = S // tq

    w2d = lambda shape: pl.BlockSpec(shape, lambda b, q: (0, 0))
    w3d = lambda shape: pl.BlockSpec(shape, lambda b, q: (0, 0, 0))

    flops = 2 * B * (S * D * (2 * hdk + hdv)            # q/k/v projections
                     + n_heads * S * S * (d_k + d_v)    # attention matmuls
                     + S * hdv * D                      # output projection
                     + 2 * S * D * d_ff)                # FFN
    weight_bytes = sum(int(a.size) * a.dtype.itemsize for a in lp.values())
    cost = pl.CostEstimate(flops=int(flops),
                           transcendentals=int(B * n_heads * S * S),
                           bytes_accessed=int(2 * x.size * 4 + weight_bytes))

    kernel = functools.partial(encoder_layer_kernel,
                               n_heads=n_heads, d_k=d_k, d_v=d_v, tq=tq)
    return pl.pallas_call(
        kernel,
        out_shape=jax.ShapeDtypeStruct((B, S, D), jnp.float32),
        grid=(B, n_q),
        in_specs=[
            pl.BlockSpec((1, S, D), lambda b, q: (b, 0, 0)),   # x (resident across q tiles)
            w2d((D, hdk)), w2d((D, hdk)), w2d((D, hdv)),       # wq, wk, wv
            w3d((n_heads, d_v, D)),                            # wfc (H, d_v, D)
            w2d((1, D)), w2d((1, D)),                          # attention LN gamma/beta
            w2d((1, D)), w2d((1, D)),                          # layernorm1 gamma/beta
            w2d((D, d_ff)), w2d((1, d_ff)),                    # FFN W1, b1
            w2d((d_ff, D)), w2d((1, D)),                       # FFN W2, b2
            w2d((1, D)), w2d((1, D)),                          # layernorm2 gamma/beta
        ],
        out_specs=pl.BlockSpec((1, tq, D), lambda b, q: (b, q, 0)),
        scratch_shapes=[
            pltpu.VMEM((n_heads, tq, d_k), jnp.float32),
            pltpu.VMEM((n_heads, S, d_k), jnp.float32),
            pltpu.VMEM((n_heads, S, d_v), jnp.float32),
        ],
        compiler_params=pltpu.CompilerParams(
            dimension_semantics=("parallel", "parallel"),
            vmem_limit_bytes=32 * 1024 * 1024),
        cost_estimate=cost,
    )(
        x,
        lp["wq"], lp["wk"], lp["wv"], lp["wfc"],
        lp["g_attn"], lp["b_attn"], lp["g1"], lp["b1"],
        lp["w1"], lp["bf1"], lp["w2"], lp["bf2"],
        lp["g2"], lp["b2"],
    )


# --------------------------------------------------------------------------- #
# kernel 3: final LayerNorm + max pool over sequence + sin-MLP decoder
# --------------------------------------------------------------------------- #

def pool_decoder_kernel(x_ref, g_ref, b_ref, wd1_ref, bd1_ref, wd2_ref, bd2_ref, out_ref):
    x = x_ref[...]                                               # (B, S, D) f32
    xn = _layer_norm(x, g_ref[...], b_ref[...], 1e-5)            # encoder-final LayerNorm
    pooled = jnp.max(xn, axis=1)                                 # max over the sequence axis
    h = jnp.dot(pooled, wd1_ref[...], preferred_element_type=jnp.float32) + bd1_ref[...]
    h = _sin(h)                                                  # Sin() activation
    y = jnp.dot(h, wd2_ref[...], preferred_element_type=jnp.float32) + bd2_ref[...]
    out_ref[...] = y.astype(out_ref.dtype)


def pool_and_decode(x, g, b, wd1, bd1, wd2, bd2):
    B = x.shape[0]
    return pl.pallas_call(
        pool_decoder_kernel,
        out_shape=jax.ShapeDtypeStruct((B, wd2.shape[1]), jnp.float32),
    )(x, g, b, wd1, bd1, wd2, bd2)


# --------------------------------------------------------------------------- #
# full model forward
# --------------------------------------------------------------------------- #

def multi_head_atten_forward(x, params, *, n_heads, d_k, d_v):
    h = input_proj(x, params["proj_w"], params["proj_b"])
    for lp in params["layers"]:
        h = encoder_layer(h, lp, n_heads=n_heads, d_k=d_k, d_v=d_v)
    return pool_and_decode(h, params["norm_g"], params["norm_b"],
                           params["dec_w1"], params["dec_b1"],
                           params["dec_w2"], params["dec_b2"])


# --------------------------------------------------------------------------- #
# pure-JAX reference (PyTorch semantics, f32 activations, same bf16-rounded weights)
# --------------------------------------------------------------------------- #

def multi_head_atten_ref(x, params, *, n_heads, d_k, d_v):
    f32 = lambda a: a.astype(jnp.float32)

    def ln(z, g, b, eps):
        m = jnp.mean(z, -1, keepdims=True)
        v = jnp.mean((z - m) ** 2, -1, keepdims=True)
        return (z - m) / jnp.sqrt(v + eps) * g + b

    h = x @ params["proj_w"] + params["proj_b"][0]
    for lp in params["layers"]:
        B, S, D = h.shape
        q = (h @ f32(lp["wq"])).reshape(B, S, n_heads, d_k).transpose(0, 2, 1, 3)
        k = (h @ f32(lp["wk"])).reshape(B, S, n_heads, d_k).transpose(0, 2, 1, 3)
        v = (h @ f32(lp["wv"])).reshape(B, S, n_heads, d_v).transpose(0, 2, 1, 3)
        s = jnp.einsum("bhqd,bhkd->bhqk", q, k) / (d_k ** 0.5)
        a = jax.nn.softmax(s, axis=-1)
        o = jnp.einsum("bhqk,bhkd->bhqd", a, v).transpose(0, 2, 1, 3).reshape(B, S, -1)
        o = o @ f32(lp["wfc"]).reshape(n_heads * d_v, D)
        attn_out = ln(h + o, lp["g_attn"], lp["b_attn"], 1e-6)
        x1 = ln(h + attn_out, lp["g1"], lp["b1"], 1e-5)
        ffn = jnp.maximum(x1 @ f32(lp["w1"]) + lp["bf1"][0], 0.0) @ f32(lp["w2"]) + lp["bf2"][0]
        h = ln(x1 + ffn, lp["g2"], lp["b2"], 1e-5)
    hn = ln(h, params["norm_g"], params["norm_b"], 1e-5)
    pooled = jnp.max(hn, axis=1)
    d1 = pooled @ params["dec_w1"] + params["dec_b1"][0]
    return jnp.sin(d1) @ params["dec_w2"] + params["dec_b2"][0]


# --------------------------------------------------------------------------- #
# main
# --------------------------------------------------------------------------- #

if __name__ == "__main__":
    # Shapes consistent with MultiHeadAtten defaults (input_dim=49, d_model=64,
    # n_heads=8, d_k=d_v=8, d_ff=256) at a small batch / sequence.
    B, S, F_IN = 2, 8, 49
    D, H, DK, DV, DFF, N_LAYERS = 64, 8, 8, 8, 256, 2

    key = jax.random.PRNGKey(0)
    keys = iter(jax.random.split(key, 8 + 16 * N_LAYERS))

    def nrm(shape, scale=0.1):
        return (scale * jax.random.normal(next(keys), shape)).astype(jnp.float32)

    def make_layer():
        return {
            # matmul weights stored in bf16 (MXU inputs); LN params / biases stay f32
            "wq": nrm((D, H * DK)).astype(jnp.bfloat16),
            "wk": nrm((D, H * DK)).astype(jnp.bfloat16),
            "wv": nrm((D, H * DV)).astype(jnp.bfloat16),
            "wfc": nrm((H * DV, D)).astype(jnp.bfloat16).reshape(H, DV, D),
            "g_attn": 1.0 + nrm((1, D), 0.05),
            "b_attn": nrm((1, D), 0.05),
            "g1": 1.0 + nrm((1, D), 0.05),
            "b1": nrm((1, D), 0.05),
            "w1": nrm((D, DFF)).astype(jnp.bfloat16),
            "bf1": nrm((1, DFF), 0.05),
            "w2": nrm((DFF, D)).astype(jnp.bfloat16),
            "bf2": nrm((1, D), 0.05),
            "g2": 1.0 + nrm((1, D), 0.05),
            "b2": nrm((1, D), 0.05),
        }

    params = {
        "proj_w": nrm((F_IN, D)),
        "proj_b": nrm((1, D), 0.05),
        "layers": [make_layer() for _ in range(N_LAYERS)],
        "norm_g": 1.0 + nrm((1, D), 0.05),
        "norm_b": nrm((1, D), 0.05),
        "dec_w1": nrm((D, 32)),
        "dec_b1": nrm((1, 32), 0.05),
        "dec_w2": nrm((32, 1)),
        "dec_b2": nrm((1, 1), 0.05),
    }

    x = jax.random.normal(next(keys), (B, S, F_IN), dtype=jnp.float32)

    fwd = jax.jit(functools.partial(multi_head_atten_forward,
                                    n_heads=H, d_k=DK, d_v=DV))
    out = jax.block_until_ready(fwd(x, params))

    ref = multi_head_atten_ref(x, params, n_heads=H, d_k=DK, d_v=DV)
    assert out.shape == (B, 1)
    assert jnp.allclose(out, ref, atol=5e-2, rtol=5e-2), (
        f"mismatch vs reference: max abs err = {jnp.max(jnp.abs(out - ref))}")

    print("KERNEL_OK")
</pallas_src>

<mosaic_0001>
module attributes {stable_mosaic.version = 11 : i64} {
  func.func @encoder_layer_kernel(%arg0: i32, %arg1: i32, %arg2: memref<1x8x64xf32, #tpu.memory_space<vmem>>, %arg3: memref<64x64xbf16, #tpu.memory_space<vmem>>, %arg4: memref<64x64xbf16, #tpu.memory_space<vmem>>, %arg5: memref<64x64xbf16, #tpu.memory_space<vmem>>, %arg6: memref<8x8x64xbf16, #tpu.memory_space<vmem>>, %arg7: memref<1x64xf32, #tpu.memory_space<vmem>>, %arg8: memref<1x64xf32, #tpu.memory_space<vmem>>, %arg9: memref<1x64xf32, #tpu.memory_space<vmem>>, %arg10: memref<1x64xf32, #tpu.memory_space<vmem>>, %arg11: memref<64x256xbf16, #tpu.memory_space<vmem>>, %arg12: memref<1x256xf32, #tpu.memory_space<vmem>>, %arg13: memref<256x64xbf16, #tpu.memory_space<vmem>>, %arg14: memref<1x64xf32, #tpu.memory_space<vmem>>, %arg15: memref<1x64xf32, #tpu.memory_space<vmem>>, %arg16: memref<1x64xf32, #tpu.memory_space<vmem>>, %arg17: memref<1x8x64xf32, #tpu.memory_space<vmem>>, %arg18: memref<8x8x8xf32, #tpu.memory_space<vmem>>, %arg19: memref<8x8x8xf32, #tpu.memory_space<vmem>>, %arg20: memref<8x8x8xf32, #tpu.memory_space<vmem>>) attributes {dimension_semantics = [#tpu.dimension_semantics<parallel>, #tpu.dimension_semantics<parallel>], iteration_bounds = array<i64: 2, 1>, scalar_prefetch = 0 : i64, scratch_operands = 3 : i64, tpu.core_type = #tpu.core_type<tc>, window_params = [{transform_indices = @transform_0, window_bounds = array<i64: 1, 8, 64>}, {pipeline_mode = #tpu.pipeline_mode<synchronous>, transform_indices = @transform_1, window_bounds = array<i64: 64, 64>}, {pipeline_mode = #tpu.pipeline_mode<synchronous>, transform_indices = @transform_2, window_bounds = array<i64: 64, 64>}, {pipeline_mode = #tpu.pipeline_mode<synchronous>, transform_indices = @transform_3, window_bounds = array<i64: 64, 64>}, {pipeline_mode = #tpu.pipeline_mode<synchronous>, transform_indices = @transform_4, window_bounds = array<i64: 8, 8, 64>}, {pipeline_mode = #tpu.pipeline_mode<synchronous>, transform_indices = @transform_5, window_bounds = array<i64: 1, 64>}, {pipeline_mode = #tpu.pipeline_mode<synchronous>, transform_indices = @transform_6, window_bounds = array<i64: 1, 64>}, {pipeline_mode = #tpu.pipeline_mode<synchronous>, transform_indices = @transform_7, window_bounds = array<i64: 1, 64>}, {pipeline_mode = #tpu.pipeline_mode<synchronous>, transform_indices = @transform_8, window_bounds = array<i64: 1, 64>}, {pipeline_mode = #tpu.pipeline_mode<synchronous>, transform_indices = @transform_9, window_bounds = array<i64: 64, 256>}, {pipeline_mode = #tpu.pipeline_mode<synchronous>, transform_indices = @transform_10, window_bounds = array<i64: 1, 256>}, {pipeline_mode = #tpu.pipeline_mode<synchronous>, transform_indices = @transform_11, window_bounds = array<i64: 256, 64>}, {pipeline_mode = #tpu.pipeline_mode<synchronous>, transform_indices = @transform_12, window_bounds = array<i64: 1, 64>}, {pipeline_mode = #tpu.pipeline_mode<synchronous>, transform_indices = @transform_13, window_bounds = array<i64: 1, 64>}, {pipeline_mode = #tpu.pipeline_mode<synchronous>, transform_indices = @transform_14, window_bounds = array<i64: 1, 64>}, {transform_indices = @transform_15, window_bounds = array<i64: 1, 8, 64>}]} {
    %c8_i32 = arith.constant 8 : i32
    %0 = arith.muli %arg1, %c8_i32 : i32
    %1 = tpu.assume_multiple %0, 8 : i32
    %c0 = arith.constant 0 : index
    %c0_0 = arith.constant 0 : index
    %c0_1 = arith.constant 0 : index
    %2 = vector.load %arg2[%c0, %c0_0, %c0_1] : memref<1x8x64xf32, #tpu.memory_space<vmem>>, vector<1x8x64xf32>
    %3 = vector.shape_cast %2 : vector<1x8x64xf32> to vector<8x64xf32>
    %c0_2 = arith.constant 0 : index
    %4 = arith.index_cast %1 : i32 to index
    %c0_3 = arith.constant 0 : index
    %5 = vector.load %arg2[%c0_2, %4, %c0_3] : memref<1x8x64xf32, #tpu.memory_space<vmem>>, vector<1x8x64xf32>
    %6 = vector.shape_cast %5 : vector<1x8x64xf32> to vector<8x64xf32>
    %7 = arith.truncf %3 : vector<8x64xf32> to vector<8x64xbf16>
    %8 = arith.truncf %6 : vector<8x64xf32> to vector<8x64xbf16>
    %c0_4 = arith.constant 0 : index
    %c0_5 = arith.constant 0 : index
    %9 = vector.load %arg3[%c0_4, %c0_5] : memref<64x64xbf16, #tpu.memory_space<vmem>>, vector<64x64xbf16>
    %cst = arith.constant dense<0.000000e+00> : vector<8x64xf32>
    %10 = tpu.matmul %8, %9, %cst {dimension_numbers = #tpu.dot_dimension_numbers<[1], [0], [0], [1], [0, 0, 1, 1], [], []>} : vector<8x64xbf16>, vector<64x64xbf16>, vector<8x64xf32> -> vector<8x64xf32>
    %c0_6 = arith.constant 0 : index
    %c0_7 = arith.constant 0 : index
    %11 = vector.load %arg4[%c0_6, %c0_7] : memref<64x64xbf16, #tpu.memory_space<vmem>>, vector<64x64xbf16>
    %cst_8 = arith.constant dense<0.000000e+00> : vector<8x64xf32>
    %12 = tpu.matmul %7, %11, %cst_8 {dimension_numbers = #tpu.dot_dimension_numbers<[1], [0], [0], [1], [0, 0, 1, 1], [], []>} : vector<8x64xbf16>, vector<64x64xbf16>, vector<8x64xf32> -> vector<8x64xf32>
    %c0_9 = arith.constant 0 : index
    %c0_10 = arith.constant 0 : index
    %13 = vector.load %arg5[%c0_9, %c0_10] : memref<64x64xbf16, #tpu.memory_space<vmem>>, vector<64x64xbf16>
    %cst_11 = arith.constant dense<0.000000e+00> : vector<8x64xf32>
    %14 = tpu.matmul %7, %13, %cst_11 {dimension_numbers = #tpu.dot_dimension_numbers<[1], [0], [0], [1], [0, 0, 1, 1], [], []>} : vector<8x64xbf16>, vector<64x64xbf16>, vector<8x64xf32> -> vector<8x64xf32>
    %15 = vector.extract_strided_slice %10 {offsets = [0, 0], sizes = [8, 8], strides = [1, 1]} : vector<8x64xf32> to vector<8x8xf32>
    %c0_12 = arith.constant 0 : index
    %c0_13 = arith.constant 0 : index
    %c0_14 = arith.constant 0 : index
    %16 = vector.load %arg18[%c0_12, %c0_13, %c0_14] : memref<8x8x8xf32, #tpu.memory_space<vmem>>, vector<1x8x8xf32>
    %17 = vector.shape_cast %16 : vector<1x8x8xf32> to vector<8x8xf32>
    %18 = vector.shape_cast %15 : vector<8x8xf32> to vector<1x8x8xf32>
    tpu.vector_store %arg18[%c0_12, %c0_13, %c0_14], %18 {strides = array<i32>} : memref<8x8x8xf32, #tpu.memory_space<vmem>>, vector<1x8x8xf32>,
    %19 = vector.extract_strided_slice %12 {offsets = [0, 0], sizes = [8, 8], strides = [1, 1]} : vector<8x64xf32> to vector<8x8xf32>
    %c0_15 = arith.constant 0 : index
    %c0_16 = arith.constant 0 : index
    %c0_17 = arith.constant 0 : index
    %20 = vector.load %arg19[%c0_15, %c0_16, %c0_17] : memref<8x8x8xf32, #tpu.memory_space<vmem>>, vector<1x8x8xf32>
    %21 = vector.shape_cast %20 : vector<1x8x8xf32> to vector<8x8xf32>
    %22 = vector.shape_cast %19 : vector<8x8xf32> to vector<1x8x8xf32>
    tpu.vector_store %arg19[%c0_15, %c0_16, %c0_17], %22 {strides = array<i32>} : memref<8x8x8xf32, #tpu.memory_space<vmem>>, vector<1x8x8xf32>,
    %23 = vector.extract_strided_slice %14 {offsets = [0, 0], sizes = [8, 8], strides = [1, 1]} : vector<8x64xf32> to vector<8x8xf32>
    %c0_18 = arith.constant 0 : index
    %c0_19 = arith.constant 0 : index
    %c0_20 = arith.constant 0 : index
    %24 = vector.load %arg20[%c0_18, %c0_19, %c0_20] : memref<8x8x8xf32, #tpu.memory_space<vmem>>, vector<1x8x8xf32>
    %25 = vector.shape_cast %24 : vector<1x8x8xf32> to vector<8x8xf32>
    %26 = vector.shape_cast %23 : vector<8x8xf32> to vector<1x8x8xf32>
    tpu.vector_store %arg20[%c0_18, %c0_19, %c0_20], %26 {strides = array<i32>} : memref<8x8x8xf32, #tpu.memory_space<vmem>>, vector<1x8x8xf32>,
    %27 = vector.extract_strided_slice %10 {offsets = [0, 8], sizes = [8, 8], strides = [1, 1]} : vector<8x64xf32> to vector<8x8xf32>
    %c1 = arith.constant 1 : index
    %c0_21 = arith.constant 0 : index
    %c0_22 = arith.constant 0 : index
    %28 = vector.load %arg18[%c1, %c0_21, %c0_22] : memref<8x8x8xf32, #tpu.memory_space<vmem>>, vector<1x8x8xf32>
    %29 = vector.shape_cast %28 : vector<1x8x8xf32> to vector<8x8xf32>
    %30 = vector.shape_cast %27 : vector<8x8xf32> to vector<1x8x8xf32>
    tpu.vector_store %arg18[%c1, %c0_21, %c0_22], %30 {strides = array<i32>} : memref<8x8x8xf32, #tpu.memory_space<vmem>>, vector<1x8x8xf32>,
    %31 = vector.extract_strided_slice %12 {offsets = [0, 8], sizes = [8, 8], strides = [1, 1]} : vector<8x64xf32> to vector<8x8xf32>
    %c1_23 = arith.constant 1 : index
    %c0_24 = arith.constant 0 : index
    %c0_25 = arith.constant 0 : index
    %32 = vector.load %arg19[%c1_23, %c0_24, %c0_25] : memref<8x8x8xf32, #tpu.memory_space<vmem>>, vector<1x8x8xf32>
    %33 = vector.shape_cast %32 : vector<1x8x8xf32> to vector<8x8xf32>
    %34 = vector.shape_cast %31 : vector<8x8xf32> to vector<1x8x8xf32>
    tpu.vector_store %arg19[%c1_23, %c0_24, %c0_25], %34 {strides = array<i32>} : memref<8x8x8xf32, #tpu.memory_space<vmem>>, vector<1x8x8xf32>,
    %35 = vector.extract_strided_slice %14 {offsets = [0, 8], sizes = [8, 8], strides = [1, 1]} : vector<8x64xf32> to vector<8x8xf32>
    %c1_26 = arith.constant 1 : index
    %c0_27 = arith.constant 0 : index
    %c0_28 = arith.constant 0 : index
    %36 = vector.load %arg20[%c1_26, %c0_27, %c0_28] : memref<8x8x8xf32, #tpu.memory_space<vmem>>, vector<1x8x8xf32>
    %37 = vector.shape_cast %36 : vector<1x8x8xf32> to vector<8x8xf32>
    %38 = vector.shape_cast %35 : vector<8x8xf32> to vector<1x8x8xf32>
    tpu.vector_store %arg20[%c1_26, %c0_27, %c0_28], %38 {strides = array<i32>} : memref<8x8x8xf32, #tpu.memory_space<vmem>>, vector<1x8x8xf32>,
    %39 = vector.extract_strided_slice %10 {offsets = [0, 16], sizes = [8, 8], strides = [1, 1]} : vector<8x64xf32> to vector<8x8xf32>
    %c2 = arith.constant 2 : index
    %c0_29 = arith.constant 0 : index
    %c0_30 = arith.constant 0 : index
    %40 = vector.load %arg18[%c2, %c0_29, %c0_30] : memref<8x8x8xf32, #tpu.memory_space<vmem>>, vector<1x8x8xf32>
    %41 = vector.shape_cast %40 : vector<1x8x8xf32> to vector<8x8xf32>
    %42 = vector.shape_cast %39 : vector<8x8xf32> to vector<1x8x8xf32>
    tpu.vector_store %arg18[%c2, %c0_29, %c0_30], %42 {strides = array<i32>} : memref<8x8x8xf32, #tpu.memory_space<vmem>>, vector<1x8x8xf32>,
    %43 = vector.extract_strided_slice %12 {offsets = [0, 16], sizes = [8, 8], strides = [1, 1]} : vector<8x64xf32> to vector<8x8xf32>
    %c2_31 = arith.constant 2 : index
    %c0_32 = arith.constant 0 : index
    %c0_33 = arith.constant 0 : index
    %44 = vector.load %arg19[%c2_31, %c0_32, %c0_33] : memref<8x8x8xf32, #tpu.memory_space<vmem>>, vector<1x8x8xf32>
    %45 = vector.shape_cast %44 : vector<1x8x8xf32> to vector<8x8xf32>
    %46 = vector.shape_cast %43 : vector<8x8xf32> to vector<1x8x8xf32>
    tpu.vector_store %arg19[%c2_31, %c0_32, %c0_33], %46 {strides = array<i32>} : memref<8x8x8xf32, #tpu.memory_space<vmem>>, vector<1x8x8xf32>,
    %47 = vector.extract_strided_slice %14 {offsets = [0, 16], sizes = [8, 8], strides = [1, 1]} : vector<8x64xf32> to vector<8x8xf32>
    %c2_34 = arith.constant 2 : index
    %c0_35 = arith.constant 0 : index
    %c0_36 = arith.constant 0 : index
    %48 = vector.load %arg20[%c2_34, %c0_35, %c0_36] : memref<8x8x8xf32, #tpu.memory_space<vmem>>, vector<1x8x8xf32>
    %49 = vector.shape_cast %48 : vector<1x8x8xf32> to vector<8x8xf32>
    %50 = vector.shape_cast %47 : vector<8x8xf32> to vector<1x8x8xf32>
    tpu.vector_store %arg20[%c2_34, %c0_35, %c0_36], %50 {strides = array<i32>} : memref<8x8x8xf32, #tpu.memory_space<vmem>>, vector<1x8x8xf32>,
    %51 = vector.extract_strided_slice %10 {offsets = [0, 24], sizes = [8, 8], strides = [1, 1]} : vector<8x64xf32> to vector<8x8xf32>
    %c3 = arith.constant 3 : index
    %c0_37 = arith.constant 0 : index
    %c0_38 = arith.constant 0 : index
    %52 = vector.load %arg18[%c3, %c0_37, %c0_38] : memref<8x8x8xf32, #tpu.memory_space<vmem>>, vector<1x8x8xf32>
    %53 = vector.shape_cast %52 : vector<1x8x8xf32> to vector<8x8xf32>
    %54 = vector.shape_cast %51 : vector<8x8xf32> to vector<1x8x8xf32>
    tpu.vector_store %arg18[%c3, %c0_37, %c0_38], %54 {strides = array<i32>} : memref<8x8x8xf32, #tpu.memory_space<vmem>>, vector<1x8x8xf32>,
    %55 = vector.extract_strided_slice %12 {offsets = [0, 24], sizes = [8, 8], strides = [1, 1]} : vector<8x64xf32> to vector<8x8xf32>
    %c3_39 = arith.constant 3 : index
    %c0_40 = arith.constant 0 : index
    %c0_41 = arith.constant 0 : index
    %56 = vector.load %arg19[%c3_39, %c0_40, %c0_41] : memref<8x8x8xf32, #tpu.memory_space<vmem>>, vector<1x8x8xf32>
    %57 = vector.shape_cast %56 : vector<1x8x8xf32> to vector<8x8xf32>
    %58 = vector.shape_cast %55 : vector<8x8xf32> to vector<1x8x8xf32>
    tpu.vector_store %arg19[%c3_39, %c0_40, %c0_41], %58 {strides = array<i32>} : memref<8x8x8xf32, #tpu.memory_space<vmem>>, vector<1x8x8xf32>,
    %59 = vector.extract_strided_slice %14 {offsets = [0, 24], sizes = [8, 8], strides = [1, 1]} : vector<8x64xf32> to vector<8x8xf32>
    %c3_42 = arith.constant 3 : index
    %c0_43 = arith.constant 0 : index
    %c0_44 = arith.constant 0 : index
    %60 = vector.load %arg20[%c3_42, %c0_43, %c0_44] : memref<8x8x8xf32, #tpu.memory_space<vmem>>, vector<1x8x8xf32>
    %61 = vector.shape_cast %60 : vector<1x8x8xf32> to vector<8x8xf32>
    %62 = vector.shape_cast %59 : vector<8x8xf32> to vector<1x8x8xf32>
    tpu.vector_store %arg20[%c3_42, %c0_43, %c0_44], %62 {strides = array<i32>} : memref<8x8x8xf32, #tpu.memory_space<vmem>>, vector<1x8x8xf32>,
    %63 = vector.extract_strided_slice %10 {offsets = [0, 32], sizes = [8, 8], strides = [1, 1]} : vector<8x64xf32> to vector<8x8xf32>
    %c4 = arith.constant 4 : index
    %c0_45 = arith.constant 0 : index
    %c0_46 = arith.constant 0 : index
    %64 = vector.load %arg18[%c4, %c0_45, %c0_46] : memref<8x8x8xf32, #tpu.memory_space<vmem>>, vector<1x8x8xf32>
    %65 = vector.shape_cast %64 : vector<1x8x8xf32> to vector<8x8xf32>
    %66 = vector.shape_cast %63 : vector<8x8xf32> to vector<1x8x8xf32>
    tpu.vector_store %arg18[%c4, %c0_45, %c0_46], %66 {strides = array<i32>} : memref<8x8x8xf32, #tpu.memory_space<vmem>>, vector<1x8x8xf32>,
    %67 = vector.extract_strided_slice %12 {offsets = [0, 32], sizes = [8, 8], strides = [1, 1]} : vector<8x64xf32> to vector<8x8xf32>
    %c4_47 = arith.constant 4 : index
    %c0_48 = arith.constant 0 : index
    %c0_49 = arith.constant 0 : index
    %68 = vector.load %arg19[%c4_47, %c0_48, %c0_49] : memref<8x8x8xf32, #tpu.memory_space<vmem>>, vector<1x8x8xf32>
    %69 = vector.shape_cast %68 : vector<1x8x8xf32> to vector<8x8xf32>
    %70 = vector.shape_cast %67 : vector<8x8xf32> to vector<1x8x8xf32>
    tpu.vector_store %arg19[%c4_47, %c0_48, %c0_49], %70 {strides = array<i32>} : memref<8x8x8xf32, #tpu.memory_space<vmem>>, vector<1x8x8xf32>,
    %71 = vector.extract_strided_slice %14 {offsets = [0, 32], sizes = [8, 8], strides = [1, 1]} : vector<8x64xf32> to vector<8x8xf32>
    %c4_50 = arith.constant 4 : index
    %c0_51 = arith.constant 0 : index
    %c0_52 = arith.constant 0 : index
    %72 = vector.load %arg20[%c4_50, %c0_51, %c0_52] : memref<8x8x8xf32, #tpu.memory_space<vmem>>, vector<1x8x8xf32>
    %73 = vector.shape_cast %72 : vector<1x8x8xf32> to vector<8x8xf32>
    %74 = vector.shape_cast %71 : vector<8x8xf32> to vector<1x8x8xf32>
    tpu.vector_store %arg20[%c4_50, %c0_51, %c0_52], %74 {strides = array<i32>} : memref<8x8x8xf32, #tpu.memory_space<vmem>>, vector<1x8x8xf32>,
    %75 = vector.extract_strided_slice %10 {offsets = [0, 40], sizes = [8, 8], strides = [1, 1]} : vector<8x64xf32> to vector<8x8xf32>
    %c5 = arith.constant 5 : index
    %c0_53 = arith.constant 0 : index
    %c0_54 = arith.constant 0 : index
    %76 = vector.load %arg18[%c5, %c0_53, %c0_54] : memref<8x8x8xf32, #tpu.memory_space<vmem>>, vector<1x8x8xf32>
    %77 = vector.shape_cast %76 : vector<1x8x8xf32> to vector<8x8xf32>
    %78 = vector.shape_cast %75 : vector<8x8xf32> to vector<1x8x8xf32>
    tpu.vector_store %arg18[%c5, %c0_53, %c0_54], %78 {strides = array<i32>} : memref<8x8x8xf32, #tpu.memory_space<vmem>>, vector<1x8x8xf32>,
    %79 = vector.extract_strided_slice %12 {offsets = [0, 40], sizes = [8, 8], strides = [1, 1]} : vector<8x64xf32> to vector<8x8xf32>
    %c5_55 = arith.constant 5 : index
    %c0_56 = arith.constant 0 : index
    %c0_57 = arith.constant 0 : index
    %80 = vector.load %arg19[%c5_55, %c0_56, %c0_57] : memref<8x8x8xf32, #tpu.memory_space<vmem>>, vector<1x8x8xf32>
    %81 = vector.shape_cast %80 : vector<1x8x8xf32> to vector<8x8xf32>
    %82 = vector.shape_cast %79 : vector<8x8xf32> to vector<1x8x8xf32>
    tpu.vector_store %arg19[%c5_55, %c0_56, %c0_57], %82 {strides = array<i32>} : memref<8x8x8xf32, #tpu.memory_space<vmem>>, vector<1x8x8xf32>,
    %83 = vector.extract_strided_slice %14 {offsets = [0, 40], sizes = [8, 8], strides = [1, 1]} : vector<8x64xf32> to vector<8x8xf32>
    %c5_58 = arith.constant 5 : index
    %c0_59 = arith.constant 0 : index
    %c0_60 = arith.constant 0 : index
    %84 = vector.load %arg20[%c5_58, %c0_59, %c0_60] : memref<8x8x8xf32, #tpu.memory_space<vmem>>, vector<1x8x8xf32>
    %85 = vector.shape_cast %84 : vector<1x8x8xf32> to vector<8x8xf32>
    %86 = vector.shape_cast %83 : vector<8x8xf32> to vector<1x8x8xf32>
    tpu.vector_store %arg20[%c5_58, %c0_59, %c0_60], %86 {strides = array<i32>} : memref<8x8x8xf32, #tpu.memory_space<vmem>>, vector<1x8x8xf32>,
    %87 = vector.extract_strided_slice %10 {offsets = [0, 48], sizes = [8, 8], strides = [1, 1]} : vector<8x64xf32> to vector<8x8xf32>
    %c6 = arith.constant 6 : index
    %c0_61 = arith.constant 0 : index
    %c0_62 = arith.constant 0 : index
    %88 = vector.load %arg18[%c6, %c0_61, %c0_62] : memref<8x8x8xf32, #tpu.memory_space<vmem>>, vector<1x8x8xf32>
    %89 = vector.shape_cast %88 : vector<1x8x8xf32> to vector<8x8xf32>
    %90 = vector.shape_cast %87 : vector<8x8xf32> to vector<1x8x8xf32>
    tpu.vector_store %arg18[%c6, %c0_61, %c0_62], %90 {strides = array<i32>} : memref<8x8x8xf32, #tpu.memory_space<vmem>>, vector<1x8x8xf32>,
    %91 = vector.extract_strided_slice %12 {offsets = [0, 48], sizes = [8, 8], strides = [1, 1]} : vector<8x64xf32> to vector<8x8xf32>
    %c6_63 = arith.constant 6 : index
    %c0_64 = arith.constant 0 : index
    %c0_65 = arith.constant 0 : index
    %92 = vector.load %arg19[%c6_63, %c0_64, %c0_65] : memref<8x8x8xf32, #tpu.memory_space<vmem>>, vector<1x8x8xf32>
    %93 = vector.shape_cast %92 : vector<1x8x8xf32> to vector<8x8xf32>
    %94 = vector.shape_cast %91 : vector<8x8xf32> to vector<1x8x8xf32>
    tpu.vector_store %arg19[%c6_63, %c0_64, %c0_65], %94 {strides = array<i32>} : memref<8x8x8xf32, #tpu.memory_space<vmem>>, vector<1x8x8xf32>,
    %95 = vector.extract_strided_slice %14 {offsets = [0, 48], sizes = [8, 8], strides = [1, 1]} : vector<8x64xf32> to vector<8x8xf32>
    %c6_66 = arith.constant 6 : index
    %c0_67 = arith.constant 0 : index
    %c0_68 = arith.constant 0 : index
    %96 = vector.load %arg20[%c6_66, %c0_67, %c0_68] : memref<8x8x8xf32, #tpu.memory_space<vmem>>, vector<1x8x8xf32>
    %97 = vector.shape_cast %96 : vector<1x8x8xf32> to vector<8x8xf32>
    %98 = vector.shape_cast %95 : vector<8x8xf32> to vector<1x8x8xf32>
    tpu.vector_store %arg20[%c6_66, %c0_67, %c0_68], %98 {strides = array<i32>} : memref<8x8x8xf32, #tpu.memory_space<vmem>>, vector<1x8x8xf32>,
    %99 = vector.extract_strided_slice %10 {offsets = [0, 56], sizes = [8, 8], strides = [1, 1]} : vector<8x64xf32> to vector<8x8xf32>
    %c7 = arith.constant 7 : index
    %c0_69 = arith.constant 0 : index
    %c0_70 = arith.constant 0 : index
    %100 = vector.load %arg18[%c7, %c0_69, %c0_70] : memref<8x8x8xf32, #tpu.memory_space<vmem>>, vector<1x8x8xf32>
    %101 = vector.shape_cast %100 : vector<1x8x8xf32> to vector<8x8xf32>
    %102 = vector.shape_cast %99 : vector<8x8xf32> to vector<1x8x8xf32>
    tpu.vector_store %arg18[%c7, %c0_69, %c0_70], %102 {strides = array<i32>} : memref<8x8x8xf32, #tpu.memory_space<vmem>>, vector<1x8x8xf32>,
    %103 = vector.extract_strided_slice %12 {offsets = [0, 56], sizes = [8, 8], strides = [1, 1]} : vector<8x64xf32> to vector<8x8xf32>
    %c7_71 = arith.constant 7 : index
    %c0_72 = arith.constant 0 : index
    %c0_73 = arith.constant 0 : index
    %104 = vector.load %arg19[%c7_71, %c0_72, %c0_73] : memref<8x8x8xf32, #tpu.memory_space<vmem>>, vector<1x8x8xf32>
    %105 = vector.shape_cast %104 : vector<1x8x8xf32> to vector<8x8xf32>
    %106 = vector.shape_cast %103 : vector<8x8xf32> to vector<1x8x8xf32>
    tpu.vector_store %arg19[%c7_71, %c0_72, %c0_73], %106 {strides = array<i32>} : memref<8x8x8xf32, #tpu.memory_space<vmem>>, vector<1x8x8xf32>,
    %107 = vector.extract_strided_slice %14 {offsets = [0, 56], sizes = [8, 8], strides = [1, 1]} : vector<8x64xf32> to vector<8x8xf32>
    %c7_74 = arith.constant 7 : index
    %c0_75 = arith.constant 0 : index
    %c0_76 = arith.constant 0 : index
    %108 = vector.load %arg20[%c7_74, %c0_75, %c0_76] : memref<8x8x8xf32, #tpu.memory_space<vmem>>, vector<1x8x8xf32>
    %109 = vector.shape_cast %108 : vector<1x8x8xf32> to vector<8x8xf32>
    %110 = vector.shape_cast %107 : vector<8x8xf32> to vector<1x8x8xf32>
    tpu.vector_store %arg20[%c7_74, %c0_75, %c0_76], %110 {strides = array<i32>} : memref<8x8x8xf32, #tpu.memory_space<vmem>>, vector<1x8x8xf32>,
    %c0_77 = arith.constant 0 : index
    %c0_78 = arith.constant 0 : index
    %c0_79 = arith.constant 0 : index
    %111 = vector.load %arg18[%c0_77, %c0_78, %c0_79] : memref<8x8x8xf32, #tpu.memory_space<vmem>>, vector<8x8x8xf32>
    %112 = arith.truncf %111 : vector<8x8x8xf32> to vector<8x8x8xbf16>
    %c0_80 = arith.constant 0 : index
    %c0_81 = arith.constant 0 : index
    %c0_82 = arith.constant 0 : index
    %113 = vector.load %arg19[%c0_80, %c0_81, %c0_82] : memref<8x8x8xf32, #tpu.memory_space<vmem>>, vector<8x8x8xf32>
    %114 = arith.truncf %113 : vector<8x8x8xf32> to vector<8x8x8xbf16>
    %c0_83 = arith.constant 0 : index
    %c0_84 = arith.constant 0 : index
    %c0_85 = arith.constant 0 : index
    %115 = vector.load %arg20[%c0_83, %c0_84, %c0_85] : memref<8x8x8xf32, #tpu.memory_space<vmem>>, vector<8x8x8xf32>
    %116 = arith.truncf %115 : vector<8x8x8xf32> to vector<8x8x8xbf16>
    "tpu.trace_start"() <{level = 10 : i32, message = "hqd,hkd->hqk"}> : () -> ()
    %cst_86 = arith.constant dense<0.000000e+00> : vector<8x8x8xf32>
    %117 = tpu.matmul %112, %114, %cst_86 {dimension_numbers = #tpu.dot_dimension_numbers<[2], [2], [1], [1], [0, 0, 0, 1, 1, 1], [0], [0]>} : vector<8x8x8xbf16>, vector<8x8x8xbf16>, vector<8x8x8xf32> -> vector<8x8x8xf32>
    "tpu.trace_stop"() : () -> ()
    %cst_87 = arith.constant 0.353553385 : f32
    %118 = vector.broadcast %cst_87 : f32 to vector<8x8x8xf32>
    %119 = arith.mulf %117, %118 : vector<8x8x8xf32>
    %cst_88 = arith.constant dense<0xFF800000> : vector<8x8xf32>
    %120 = vector.multi_reduction <maximumf>, %119, %cst_88 [2] : vector<8x8x8xf32> to vector<8x8xf32>
    %121 = vector.shape_cast %120 : vector<8x8xf32> to vector<8x8x1xf32>
    %122 = vector.broadcast %121 : vector<8x8x1xf32> to vector<8x8x8xf32>
    %123 = arith.subf %119, %122 : vector<8x8x8xf32>
    %124 = math.exp %123 : vector<8x8x8xf32>
    %cst_89 = arith.constant dense<0.000000e+00> : vector<8x8xf32>
    %125 = vector.multi_reduction <add>, %124, %cst_89 [2] : vector<8x8x8xf32> to vector<8x8xf32>
    %126 = vector.shape_cast %125 : vector<8x8xf32> to vector<8x8x1xf32>
    %127 = tpu.reciprocal %126 {approx = true} : vector<8x8x1xf32> -> vector<8x8x1xf32>
    %128 = vector.broadcast %127 : vector<8x8x1xf32> to vector<8x8x8xf32>
    %129 = arith.mulf %124, %128 : vector<8x8x8xf32>
    %130 = arith.truncf %129 : vector<8x8x8xf32> to vector<8x8x8xbf16>
    "tpu.trace_start"() <{level = 10 : i32, message = "hqk,hkv->hqv"}> : () -> ()
    %cst_90 = arith.constant dense<0.000000e+00> : vector<8x8x8xf32>
    %131 = tpu.matmul %130, %116, %cst_90 {dimension_numbers = #tpu.dot_dimension_numbers<[2], [1], [1], [2], [0, 0, 0, 1, 1, 2], [0], [0]>} : vector<8x8x8xbf16>, vector<8x8x8xbf16>, vector<8x8x8xf32> -> vector<8x8x8xf32>
    "tpu.trace_stop"() : () -> ()
    %132 = arith.truncf %131 : vector<8x8x8xf32> to vector<8x8x8xbf16>
    %c0_91 = arith.constant 0 : index
    %c0_92 = arith.constant 0 : index
    %c0_93 = arith.constant 0 : index
    %133 = vector.load %arg6[%c0_91, %c0_92, %c0_93] : memref<8x8x64xbf16, #tpu.memory_space<vmem>>, vector<8x8x64xbf16>
    "tpu.trace_start"() <{level = 10 : i32, message = "hqv,hvd->hqd"}> : () -> ()
    %cst_94 = arith.constant dense<0.000000e+00> : vector<8x8x64xf32>
    %134 = tpu.matmul %132, %133, %cst_94 {dimension_numbers = #tpu.dot_dimension_numbers<[2], [1], [1], [2], [0, 0, 0, 1, 1, 2], [0], [0]>} : vector<8x8x8xbf16>, vector<8x8x64xbf16>, vector<8x8x64xf32> -> vector<8x8x64xf32>
    "tpu.trace_stop"() : () -> ()
    %cst_95 = arith.constant dense<0.000000e+00> : vector<8x64xf32>
    %135 = vector.multi_reduction <add>, %134, %cst_95 [0] : vector<8x8x64xf32> to vector<8x64xf32>
    %136 = arith.addf %6, %135 : vector<8x64xf32>
    %c0_96 = arith.constant 0 : index
    %c0_97 = arith.constant 0 : index
    %137 = vector.load %arg7[%c0_96, %c0_97] : memref<1x64xf32, #tpu.memory_space<vmem>>, vector<1x64xf32>
    %c0_98 = arith.constant 0 : index
    %c0_99 = arith.constant 0 : index
    %138 = vector.load %arg8[%c0_98, %c0_99] : memref<1x64xf32, #tpu.memory_space<vmem>>, vector<1x64xf32>
    %cst_100 = arith.constant dense<0.000000e+00> : vector<8xf32>
    %139 = vector.multi_reduction <add>, %136, %cst_100 [1] : vector<8x64xf32> to vector<8xf32>
    %140 = vector.shape_cast %139 : vector<8xf32> to vector<8x1xf32>
    %cst_101 = arith.constant 6.400000e+01 : f32
    %141 = vector.broadcast %cst_101 : f32 to vector<8x1xf32>
    %142 = arith.divf %140, %141 : vector<8x1xf32>
    %143 = vector.broadcast %142 : vector<8x1xf32> to vector<8x64xf32>
    %144 = arith.subf %136, %143 : vector<8x64xf32>
    %145 = arith.mulf %144, %144 : vector<8x64xf32>
    %cst_102 = arith.constant dense<0.000000e+00> : vector<8xf32>
    %146 = vector.multi_reduction <add>, %145, %cst_102 [1] : vector<8x64xf32> to vector<8xf32>
    %147 = vector.shape_cast %146 : vector<8xf32> to vector<8x1xf32>
    %cst_103 = arith.constant 6.400000e+01 : f32
    %148 = vector.broadcast %cst_103 : f32 to vector<8x1xf32>
    %149 = arith.divf %147, %148 : vector<8x1xf32>
    %150 = vector.broadcast %142 : vector<8x1xf32> to vector<8x64xf32>
    %151 = arith.subf %136, %150 : vector<8x64xf32>
    %cst_104 = arith.constant 9.99999997E-7 : f32
    %152 = vector.broadcast %cst_104 : f32 to vector<8x1xf32>
    %153 = arith.addf %149, %152 : vector<8x1xf32>
    %154 = math.rsqrt %153 : vector<8x1xf32>
    %155 = vector.broadcast %154 : vector<8x1xf32> to vector<8x64xf32>
    %156 = arith.mulf %151, %155 : vector<8x64xf32>
    %157 = vector.broadcast %137 : vector<1x64xf32> to vector<8x64xf32>
    %158 = arith.mulf %156, %157 : vector<8x64xf32>
    %159 = vector.broadcast %138 : vector<1x64xf32> to vector<8x64xf32>
    %160 = arith.addf %158, %159 : vector<8x64xf32>
    %161 = arith.addf %6, %160 : vector<8x64xf32>
    %c0_105 = arith.constant 0 : index
    %c0_106 = arith.constant 0 : index
    %162 = vector.load %arg9[%c0_105, %c0_106] : memref<1x64xf32, #tpu.memory_space<vmem>>, vector<1x64xf32>
    %c0_107 = arith.constant 0 : index
    %c0_108 = arith.constant 0 : index
    %163 = vector.load %arg10[%c0_107, %c0_108] : memref<1x64xf32, #tpu.memory_space<vmem>>, vector<1x64xf32>
    %cst_109 = arith.constant dense<0.000000e+00> : vector<8xf32>
    %164 = vector.multi_reduction <add>, %161, %cst_109 [1] : vector<8x64xf32> to vector<8xf32>
    %165 = vector.shape_cast %164 : vector<8xf32> to vector<8x1xf32>
    %cst_110 = arith.constant 6.400000e+01 : f32
    %166 = vector.broadcast %cst_110 : f32 to vector<8x1xf32>
    %167 = arith.divf %165, %166 : vector<8x1xf32>
    %168 = vector.broadcast %167 : vector<8x1xf32> to vector<8x64xf32>
    %169 = arith.subf %161, %168 : vector<8x64xf32>
    %170 = arith.mulf %169, %169 : vector<8x64xf32>
    %cst_111 = arith.constant dense<0.000000e+00> : vector<8xf32>
    %171 = vector.multi_reduction <add>, %170, %cst_111 [1] : vector<8x64xf32> to vector<8xf32>
    %172 = vector.shape_cast %171 : vector<8xf32> to vector<8x1xf32>
    %cst_112 = arith.constant 6.400000e+01 : f32
    %173 = vector.broadcast %cst_112 : f32 to vector<8x1xf32>
    %174 = arith.divf %172, %173 : vector<8x1xf32>
    %175 = vector.broadcast %167 : vector<8x1xf32> to vector<8x64xf32>
    %176 = arith.subf %161, %175 : vector<8x64xf32>
    %cst_113 = arith.constant 9.99999974E-6 : f32
    %177 = vector.broadcast %cst_113 : f32 to vector<8x1xf32>
    %178 = arith.addf %174, %177 : vector<8x1xf32>
    %179 = math.rsqrt %178 : vector<8x1xf32>
    %180 = vector.broadcast %179 : vector<8x1xf32> to vector<8x64xf32>
    %181 = arith.mulf %176, %180 : vector<8x64xf32>
    %182 = vector.broadcast %162 : vector<1x64xf32> to vector<8x64xf32>
    %183 = arith.mulf %181, %182 : vector<8x64xf32>
    %184 = vector.broadcast %163 : vector<1x64xf32> to vector<8x64xf32>
    %185 = arith.addf %183, %184 : vector<8x64xf32>
    %186 = arith.truncf %185 : vector<8x64xf32> to vector<8x64xbf16>
    %c0_114 = arith.constant 0 : index
    %c0_115 = arith.constant 0 : index
    %187 = vector.load %arg11[%c0_114, %c0_115] : memref<64x256xbf16, #tpu.memory_space<vmem>>, vector<64x256xbf16>
    %cst_116 = arith.constant dense<0.000000e+00> : vector<8x256xf32>
    %188 = tpu.matmul %186, %187, %cst_116 {dimension_numbers = #tpu.dot_dimension_numbers<[1], [0], [0], [1], [0, 0, 1, 1], [], []>} : vector<8x64xbf16>, vector<64x256xbf16>, vector<8x256xf32> -> vector<8x256xf32>
    %c0_117 = arith.constant 0 : index
    %c0_118 = arith.constant 0 : index
    %189 = vector.load %arg12[%c0_117, %c0_118] : memref<1x256xf32, #tpu.memory_space<vmem>>, vector<1x256xf32>
    %190 = vector.broadcast %189 : vector<1x256xf32> to vector<8x256xf32>
    %191 = arith.addf %188, %190 : vector<8x256xf32>
    %cst_119 = arith.constant 0.000000e+00 : f32
    %192 = vector.broadcast %cst_119 : f32 to vector<8x256xf32>
    %193 = arith.maximumf %191, %192 : vector<8x256xf32>
    %194 = arith.truncf %193 : vector<8x256xf32> to vector<8x256xbf16>
    %c0_120 = arith.constant 0 : index
    %c0_121 = arith.constant 0 : index
    %195 = vector.load %arg13[%c0_120, %c0_121] : memref<256x64xbf16, #tpu.memory_space<vmem>>, vector<256x64xbf16>
    %cst_122 = arith.constant dense<0.000000e+00> : vector<8x64xf32>
    %196 = tpu.matmul %194, %195, %cst_122 {dimension_numbers = #tpu.dot_dimension_numbers<[1], [0], [0], [1], [0, 0, 1, 1], [], []>} : vector<8x256xbf16>, vector<256x64xbf16>, vector<8x64xf32> -> vector<8x64xf32>
    %c0_123 = arith.constant 0 : index
    %c0_124 = arith.constant 0 : index
    %197 = vector.load %arg14[%c0_123, %c0_124] : memref<1x64xf32, #tpu.memory_space<vmem>>, vector<1x64xf32>
    %198 = vector.broadcast %197 : vector<1x64xf32> to vector<8x64xf32>
    %199 = arith.addf %196, %198 : vector<8x64xf32>
    %200 = arith.addf %185, %199 : vector<8x64xf32>
    %c0_125 = arith.constant 0 : index
    %c0_126 = arith.constant 0 : index
    %201 = vector.load %arg15[%c0_125, %c0_126] : memref<1x64xf32, #tpu.memory_space<vmem>>, vector<1x64xf32>
    %c0_127 = arith.constant 0 : index
    %c0_128 = arith.constant 0 : index
    %202 = vector.load %arg16[%c0_127, %c0_128] : memref<1x64xf32, #tpu.memory_space<vmem>>, vector<1x64xf32>
    %cst_129 = arith.constant dense<0.000000e+00> : vector<8xf32>
    %203 = vector.multi_reduction <add>, %200, %cst_129 [1] : vector<8x64xf32> to vector<8xf32>
    %204 = vector.shape_cast %203 : vector<8xf32> to vector<8x1xf32>
    %cst_130 = arith.constant 6.400000e+01 : f32
    %205 = vector.broadcast %cst_130 : f32 to vector<8x1xf32>
    %206 = arith.divf %204, %205 : vector<8x1xf32>
    %207 = vector.broadcast %206 : vector<8x1xf32> to vector<8x64xf32>
    %208 = arith.subf %200, %207 : vector<8x64xf32>
    %209 = arith.mulf %208, %208 : vector<8x64xf32>
    %cst_131 = arith.constant dense<0.000000e+00> : vector<8xf32>
    %210 = vector.multi_reduction <add>, %209, %cst_131 [1] : vector<8x64xf32> to vector<8xf32>
    %211 = vector.shape_cast %210 : vector<8xf32> to vector<8x1xf32>
    %cst_132 = arith.constant 6.400000e+01 : f32
    %212 = vector.broadcast %cst_132 : f32 to vector<8x1xf32>
    %213 = arith.divf %211, %212 : vector<8x1xf32>
    %214 = vector.broadcast %206 : vector<8x1xf32> to vector<8x64xf32>
    %215 = arith.subf %200, %214 : vector<8x64xf32>
    %cst_133 = arith.constant 9.99999974E-6 : f32
    %216 = vector.broadcast %cst_133 : f32 to vector<8x1xf32>
    %217 = arith.addf %213, %216 : vector<8x1xf32>
    %218 = math.rsqrt %217 : vector<8x1xf32>
    %219 = vector.broadcast %218 : vector<8x1xf32> to vector<8x64xf32>
    %220 = arith.mulf %215, %219 : vector<8x64xf32>
    %221 = vector.broadcast %201 : vector<1x64xf32> to vector<8x64xf32>
    %222 = arith.mulf %220, %221 : vector<8x64xf32>
    %223 = vector.broadcast %202 : vector<1x64xf32> to vector<8x64xf32>
    %224 = arith.addf %222, %223 : vector<8x64xf32>
    %c0_134 = arith.constant 0 : index
    %c0_135 = arith.constant 0 : index
    %c0_136 = arith.constant 0 : index
    %225 = vector.load %arg17[%c0_134, %c0_135, %c0_136] : memref<1x8x64xf32, #tpu.memory_space<vmem>>, vector<1x8x64xf32>
    %226 = vector.shape_cast %225 : vector<1x8x64xf32> to vector<8x64xf32>
    %227 = vector.shape_cast %224 : vector<8x64xf32> to vector<1x8x64xf32>
    tpu.vector_store %arg17[%c0_134, %c0_135, %c0_136], %227 {strides = array<i32>} : memref<1x8x64xf32, #tpu.memory_space<vmem>>, vector<1x8x64xf32>,
    return
  }
  func.func @transform_0(%arg0: i32, %arg1: i32) -> (i32, i32, i32) {
    %c0_i32 = arith.constant 0 : i32
    %c0_i32_0 = arith.constant 0 : i32
    %c0_i32_1 = arith.constant 0 : i32
    return %arg0, %c0_i32, %c0_i32_0 : i32, i32, i32
  }
  func.func @transform_1(%arg0: i32, %arg1: i32) -> (i32, i32) {
    %c0_i32 = arith.constant 0 : i32
    %c0_i32_0 = arith.constant 0 : i32
    %c0_i32_1 = arith.constant 0 : i32
    return %c0_i32, %c0_i32_0 : i32, i32
  }
  func.func @transform_2(%arg0: i32, %arg1: i32) -> (i32, i32) {
    %c0_i32 = arith.constant 0 : i32
    %c0_i32_0 = arith.constant 0 : i32
    %c0_i32_1 = arith.constant 0 : i32
    return %c0_i32, %c0_i32_0 : i32, i32
  }
  func.func @transform_3(%arg0: i32, %arg1: i32) -> (i32, i32) {
    %c0_i32 = arith.constant 0 : i32
    %c0_i32_0 = arith.constant 0 : i32
    %c0_i32_1 = arith.constant 0 : i32
    return %c0_i32, %c0_i32_0 : i32, i32
  }
  func.func @transform_4(%arg0: i32, %arg1: i32) -> (i32, i32, i32) {
    %c0_i32 = arith.constant 0 : i32
    %c0_i32_0 = arith.constant 0 : i32
    %c0_i32_1 = arith.constant 0 : i32
    %c0_i32_2 = arith.constant 0 : i32
    return %c0_i32, %c0_i32_0, %c0_i32_1 : i32, i32, i32
  }
  func.func @transform_5(%arg0: i32, %arg1: i32) -> (i32, i32) {
    %c0_i32 = arith.constant 0 : i32
    %c0_i32_0 = arith.constant 0 : i32
    %c0_i32_1 = arith.constant 0 : i32
    return %c0_i32, %c0_i32_0 : i32, i32
  }
  func.func @transform_6(%arg0: i32, %arg1: i32) -> (i32, i32) {
    %c0_i32 = arith.constant 0 : i32
    %c0_i32_0 = arith.constant 0 : i32
    %c0_i32_1 = arith.constant 0 : i32
    return %c0_i32, %c0_i32_0 : i32, i32
  }
  func.func @transform_7(%arg0: i32, %arg1: i32) -> (i32, i32) {
    %c0_i32 = arith.constant 0 : i32
    %c0_i32_0 = arith.constant 0 : i32
    %c0_i32_1 = arith.constant 0 : i32
    return %c0_i32, %c0_i32_0 : i32, i32
  }
  func.func @transform_8(%arg0: i32, %arg1: i32) -> (i32, i32) {
    %c0_i32 = arith.constant 0 : i32
    %c0_i32_0 = arith.constant 0 : i32
    %c0_i32_1 = arith.constant 0 : i32
    return %c0_i32, %c0_i32_0 : i32, i32
  }
  func.func @transform_9(%arg0: i32, %arg1: i32) -> (i32, i32) {
    %c0_i32 = arith.constant 0 : i32
    %c0_i32_0 = arith.constant 0 : i32
    %c0_i32_1 = arith.constant 0 : i32
    return %c0_i32, %c0_i32_0 : i32, i32
  }
  func.func @transform_10(%arg0: i32, %arg1: i32) -> (i32, i32) {
    %c0_i32 = arith.constant 0 : i32
    %c0_i32_0 = arith.constant 0 : i32
    %c0_i32_1 = arith.constant 0 : i32
    return %c0_i32, %c0_i32_0 : i32, i32
  }
  func.func @transform_11(%arg0: i32, %arg1: i32) -> (i32, i32) {
    %c0_i32 = arith.constant 0 : i32
    %c0_i32_0 = arith.constant 0 : i32
    %c0_i32_1 = arith.constant 0 : i32
    return %c0_i32, %c0_i32_0 : i32, i32
  }
  func.func @transform_12(%arg0: i32, %arg1: i32) -> (i32, i32) {
    %c0_i32 = arith.constant 0 : i32
    %c0_i32_0 = arith.constant 0 : i32
    %c0_i32_1 = arith.constant 0 : i32
    return %c0_i32, %c0_i32_0 : i32, i32
  }
  func.func @transform_13(%arg0: i32, %arg1: i32) -> (i32, i32) {
    %c0_i32 = arith.constant 0 : i32
    %c0_i32_0 = arith.constant 0 : i32
    %c0_i32_1 = arith.constant 0 : i32
    return %c0_i32, %c0_i32_0 : i32, i32
  }
  func.func @transform_14(%arg0: i32, %arg1: i32) -> (i32, i32) {
    %c0_i32 = arith.constant 0 : i32
    %c0_i32_0 = arith.constant 0 : i32
    %c0_i32_1 = arith.constant 0 : i32
    return %c0_i32, %c0_i32_0 : i32, i32
  }
  func.func @transform_15(%arg0: i32, %arg1: i32) -> (i32, i32, i32) {
    %c0_i32 = arith.constant 0 : i32
    %c0_i32_0 = arith.constant 0 : i32
    return %arg0, %arg1, %c0_i32 : i32, i32, i32
  }
}

module attributes {stable_mosaic.version = 11 : i64} {
  func.func @input_proj_kernel(%arg0: i32, %arg1: memref<1x8x49xf32, #tpu.memory_space<vmem>>, %arg2: memref<49x64xf32, #tpu.memory_space<vmem>>, %arg3: memref<1x64xf32, #tpu.memory_space<vmem>>, %arg4: memref<1x8x64xf32, #tpu.memory_space<vmem>>) attributes {dimension_semantics = [#tpu.dimension_semantics<parallel>], iteration_bounds = array<i64: 2>, scalar_prefetch = 0 : i64, scratch_operands = 0 : i64, tpu.core_type = #tpu.core_type<tc>, window_params = [{transform_indices = @transform_0, window_bounds = array<i64: 1, 8, 49>}, {pipeline_mode = #tpu.pipeline_mode<synchronous>, transform_indices = @transform_1, window_bounds = array<i64: 49, 64>}, {pipeline_mode = #tpu.pipeline_mode<synchronous>, transform_indices = @transform_2, window_bounds = array<i64: 1, 64>}, {transform_indices = @transform_3, window_bounds = array<i64: 1, 8, 64>}]} {
    %c0 = arith.constant 0 : index
    %c0_0 = arith.constant 0 : index
    %c0_1 = arith.constant 0 : index
    %0 = vector.load %arg1[%c0, %c0_0, %c0_1] : memref<1x8x49xf32, #tpu.memory_space<vmem>>, vector<1x8x49xf32>
    %1 = vector.shape_cast %0 : vector<1x8x49xf32> to vector<8x49xf32>
    %c0_2 = arith.constant 0 : index
    %c0_3 = arith.constant 0 : index
    %2 = vector.load %arg2[%c0_2, %c0_3] : memref<49x64xf32, #tpu.memory_space<vmem>>, vector<49x64xf32>
    %cst = arith.constant dense<0.000000e+00> : vector<8x64xf32>
    %3 = tpu.matmul %1, %2, %cst {dimension_numbers = #tpu.dot_dimension_numbers<[1], [0], [0], [1], [0, 0, 1, 1], [], []>} : vector<8x49xf32>, vector<49x64xf32>, vector<8x64xf32> -> vector<8x64xf32>
    %c0_4 = arith.constant 0 : index
    %c0_5 = arith.constant 0 : index
    %4 = vector.load %arg3[%c0_4, %c0_5] : memref<1x64xf32, #tpu.memory_space<vmem>>, vector<1x64xf32>
    %5 = vector.broadcast %4 : vector<1x64xf32> to vector<8x64xf32>
    %6 = arith.addf %3, %5 : vector<8x64xf32>
    %c0_6 = arith.constant 0 : index
    %c0_7 = arith.constant 0 : index
    %c0_8 = arith.constant 0 : index
    %7 = vector.load %arg4[%c0_6, %c0_7, %c0_8] : memref<1x8x64xf32, #tpu.memory_space<vmem>>, vector<1x8x64xf32>
    %8 = vector.shape_cast %7 : vector<1x8x64xf32> to vector<8x64xf32>
    %9 = vector.shape_cast %6 : vector<8x64xf32> to vector<1x8x64xf32>
    tpu.vector_store %arg4[%c0_6, %c0_7, %c0_8], %9 {strides = array<i32>} : memref<1x8x64xf32, #tpu.memory_space<vmem>>, vector<1x8x64xf32>,
    return
  }
  func.func @transform_0(%arg0: i32) -> (i32, i32, i32) {
    %c0_i32 = arith.constant 0 : i32
    %c0_i32_0 = arith.constant 0 : i32
    %c0_i32_1 = arith.constant 0 : i32
    return %arg0, %c0_i32, %c0_i32_0 : i32, i32, i32
  }
  func.func @transform_1(%arg0: i32) -> (i32, i32) {
    %c0_i32 = arith.constant 0 : i32
    %c0_i32_0 = arith.constant 0 : i32
    %c0_i32_1 = arith.constant 0 : i32
    return %c0_i32, %c0_i32_0 : i32, i32
  }
  func.func @transform_2(%arg0: i32) -> (i32, i32) {
    %c0_i32 = arith.constant 0 : i32
    %c0_i32_0 = arith.constant 0 : i32
    %c0_i32_1 = arith.constant 0 : i32
    return %c0_i32, %c0_i32_0 : i32, i32
  }
  func.func @transform_3(%arg0: i32) -> (i32, i32, i32) {
    %c0_i32 = arith.constant 0 : i32
    %c0_i32_0 = arith.constant 0 : i32
    %c0_i32_1 = arith.constant 0 : i32
    return %arg0, %c0_i32, %c0_i32_0 : i32, i32, i32
  }
}

module attributes {stable_mosaic.version = 11 : i64} {
  func.func @pool_decoder_kernel(%arg0: memref<2x8x64xf32, #tpu.memory_space<vmem>>, %arg1: memref<1x64xf32, #tpu.memory_space<vmem>>, %arg2: memref<1x64xf32, #tpu.memory_space<vmem>>, %arg3: memref<64x32xf32, #tpu.memory_space<vmem>>, %arg4: memref<1x32xf32, #tpu.memory_space<vmem>>, %arg5: memref<32x1xf32, #tpu.memory_space<vmem>>, %arg6: memref<1x1xf32, #tpu.memory_space<vmem>>, %arg7: memref<2x1xf32, #tpu.memory_space<vmem>>) attributes {dimension_semantics = [], scalar_prefetch = 0 : i64, scratch_operands = 0 : i64, tpu.core_type = #tpu.core_type<tc>} {
    %c0 = arith.constant 0 : index
    %c0_0 = arith.constant 0 : index
    %c0_1 = arith.constant 0 : index
    %0 = vector.load %arg0[%c0, %c0_0, %c0_1] : memref<2x8x64xf32, #tpu.memory_space<vmem>>, vector<2x8x64xf32>
    %c0_2 = arith.constant 0 : index
    %c0_3 = arith.constant 0 : index
    %1 = vector.load %arg1[%c0_2, %c0_3] : memref<1x64xf32, #tpu.memory_space<vmem>>, vector<1x64xf32>
    %c0_4 = arith.constant 0 : index
    %c0_5 = arith.constant 0 : index
    %2 = vector.load %arg2[%c0_4, %c0_5] : memref<1x64xf32, #tpu.memory_space<vmem>>, vector<1x64xf32>
    %cst = arith.constant dense<0.000000e+00> : vector<2x8xf32>
    %3 = vector.multi_reduction <add>, %0, %cst [2] : vector<2x8x64xf32> to vector<2x8xf32>
    %4 = vector.shape_cast %3 : vector<2x8xf32> to vector<2x8x1xf32>
    %cst_6 = arith.constant 6.400000e+01 : f32
    %5 = vector.broadcast %cst_6 : f32 to vector<2x8x1xf32>
    %6 = arith.divf %4, %5 : vector<2x8x1xf32>
    %7 = vector.broadcast %6 : vector<2x8x1xf32> to vector<2x8x64xf32>
    %8 = arith.subf %0, %7 : vector<2x8x64xf32>
    %9 = arith.mulf %8, %8 : vector<2x8x64xf32>
    %cst_7 = arith.constant dense<0.000000e+00> : vector<2x8xf32>
    %10 = vector.multi_reduction <add>, %9, %cst_7 [2] : vector<2x8x64xf32> to vector<2x8xf32>
    %11 = vector.shape_cast %10 : vector<2x8xf32> to vector<2x8x1xf32>
    %cst_8 = arith.constant 6.400000e+01 : f32
    %12 = vector.broadcast %cst_8 : f32 to vector<2x8x1xf32>
    %13 = arith.divf %11, %12 : vector<2x8x1xf32>
    %14 = vector.broadcast %6 : vector<2x8x1xf32> to vector<2x8x64xf32>
    %15 = arith.subf %0, %14 : vector<2x8x64xf32>
    %cst_9 = arith.constant 9.99999974E-6 : f32
    %16 = vector.broadcast %cst_9 : f32 to vector<2x8x1xf32>
    %17 = arith.addf %13, %16 : vector<2x8x1xf32>
    %18 = math.rsqrt %17 : vector<2x8x1xf32>
    %19 = vector.broadcast %18 : vector<2x8x1xf32> to vector<2x8x64xf32>
    %20 = arith.mulf %15, %19 : vector<2x8x64xf32>
    %21 = vector.shape_cast %1 : vector<1x64xf32> to vector<1x1x64xf32>
    %22 = vector.broadcast %21 : vector<1x1x64xf32> to vector<2x8x64xf32>
    %23 = arith.mulf %20, %22 : vector<2x8x64xf32>
    %24 = vector.shape_cast %2 : vector<1x64xf32> to vector<1x1x64xf32>
    %25 = vector.broadcast %24 : vector<1x1x64xf32> to vector<2x8x64xf32>
    %26 = arith.addf %23, %25 : vector<2x8x64xf32>
    %cst_10 = arith.constant dense<0xFF800000> : vector<2x64xf32>
    %27 = vector.multi_reduction <maximumf>, %26, %cst_10 [1] : vector<2x8x64xf32> to vector<2x64xf32>
    %c0_11 = arith.constant 0 : index
    %c0_12 = arith.constant 0 : index
    %28 = vector.load %arg3[%c0_11, %c0_12] : memref<64x32xf32, #tpu.memory_space<vmem>>, vector<64x32xf32>
    %cst_13 = arith.constant dense<0.000000e+00> : vector<2x32xf32>
    %29 = tpu.matmul %27, %28, %cst_13 {dimension_numbers = #tpu.dot_dimension_numbers<[1], [0], [0], [1], [0, 0, 1, 1], [], []>} : vector<2x64xf32>, vector<64x32xf32>, vector<2x32xf32> -> vector<2x32xf32>
    %c0_14 = arith.constant 0 : index
    %c0_15 = arith.constant 0 : index
    %30 = vector.load %arg4[%c0_14, %c0_15] : memref<1x32xf32, #tpu.memory_space<vmem>>, vector<1x32xf32>
    %31 = vector.broadcast %30 : vector<1x32xf32> to vector<2x32xf32>
    %32 = arith.addf %29, %31 : vector<2x32xf32>
    %cst_16 = arith.constant 0.159154937 : f32
    %33 = vector.broadcast %cst_16 : f32 to vector<2x32xf32>
    %34 = arith.mulf %32, %33 : vector<2x32xf32>
    %cst_17 = arith.constant 5.000000e-01 : f32
    %35 = vector.broadcast %cst_17 : f32 to vector<2x32xf32>
    %36 = arith.addf %34, %35 : vector<2x32xf32>
    %37 = math.floor %36 : vector<2x32xf32>
    %cst_18 = arith.constant 6.28318548 : f32
    %38 = vector.broadcast %cst_18 : f32 to vector<2x32xf32>
    %39 = arith.mulf %37, %38 : vector<2x32xf32>
    %40 = arith.subf %32, %39 : vector<2x32xf32>
    %cst_19 = arith.constant 1.57079637 : f32
    %41 = vector.broadcast %cst_19 : f32 to vector<2x32xf32>
    %42 = arith.cmpf ogt, %40, %41 : vector<2x32xf32>
    %cst_20 = arith.constant 3.14159274 : f32
    %43 = vector.broadcast %cst_20 : f32 to vector<2x32xf32>
    %44 = arith.subf %43, %40 : vector<2x32xf32>
    %45 = arith.select %42, %44, %40 : vector<2x32xi1>, vector<2x32xf32>
    %cst_21 = arith.constant -1.57079637 : f32
    %46 = vector.broadcast %cst_21 : f32 to vector<2x32xf32>
    %47 = arith.cmpf olt, %45, %46 : vector<2x32xf32>
    %cst_22 = arith.constant -3.14159274 : f32
    %48 = vector.broadcast %cst_22 : f32 to vector<2x32xf32>
    %49 = arith.subf %48, %45 : vector<2x32xf32>
    %50 = arith.select %47, %49, %45 : vector<2x32xi1>, vector<2x32xf32>
    %51 = arith.mulf %50, %50 : vector<2x32xf32>
    %cst_23 = arith.constant 1.60590444E-10 : f32
    %52 = vector.broadcast %cst_23 : f32 to vector<2x32xf32>
    %53 = arith.mulf %52, %51 : vector<2x32xf32>
    %cst_24 = arith.constant 2.50521079E-8 : f32
    %54 = vector.broadcast %cst_24 : f32 to vector<2x32xf32>
    %55 = arith.subf %53, %54 : vector<2x32xf32>
    %56 = arith.mulf %55, %51 : vector<2x32xf32>
    %cst_25 = arith.constant 2.75573188E-6 : f32
    %57 = vector.broadcast %cst_25 : f32 to vector<2x32xf32>
    %58 = arith.addf %56, %57 : vector<2x32xf32>
    %59 = arith.mulf %58, %51 : vector<2x32xf32>
    %cst_26 = arith.constant 1.98412701E-4 : f32
    %60 = vector.broadcast %cst_26 : f32 to vector<2x32xf32>
    %61 = arith.subf %59, %60 : vector<2x32xf32>
    %62 = arith.mulf %61, %51 : vector<2x32xf32>
    %cst_27 = arith.constant 0.00833333377 : f32
    %63 = vector.broadcast %cst_27 : f32 to vector<2x32xf32>
    %64 = arith.addf %62, %63 : vector<2x32xf32>
    %65 = arith.mulf %64, %51 : vector<2x32xf32>
    %cst_28 = arith.constant 0.166666672 : f32
    %66 = vector.broadcast %cst_28 : f32 to vector<2x32xf32>
    %67 = arith.subf %65, %66 : vector<2x32xf32>
    %68 = arith.mulf %50, %51 : vector<2x32xf32>
    %69 = arith.mulf %68, %67 : vector<2x32xf32>
    %70 = arith.addf %50, %69 : vector<2x32xf32>
    %c0_29 = arith.constant 0 : index
    %c0_30 = arith.constant 0 : index
    %71 = vector.load %arg5[%c0_29, %c0_30] : memref<32x1xf32, #tpu.memory_space<vmem>>, vector<32x1xf32>
    %cst_31 = arith.constant dense<0.000000e+00> : vector<2x1xf32>
    %72 = tpu.matmul %70, %71, %cst_31 {dimension_numbers = #tpu.dot_dimension_numbers<[1], [0], [0], [1], [0, 0, 1, 1], [], []>} : vector<2x32xf32>, vector<32x1xf32>, vector<2x1xf32> -> vector<2x1xf32>
    %c0_32 = arith.constant 0 : index
    %c0_33 = arith.constant 0 : index
    %73 = vector.load %arg6[%c0_32, %c0_33] : memref<1x1xf32, #tpu.memory_space<vmem>>, vector<1x1xf32>
    %74 = vector.broadcast %73 : vector<1x1xf32> to vector<2x1xf32>
    %75 = arith.addf %72, %74 : vector<2x1xf32>
    %c0_34 = arith.constant 0 : index
    %c0_35 = arith.constant 0 : index
    %76 = vector.load %arg7[%c0_34, %c0_35] : memref<2x1xf32, #tpu.memory_space<vmem>>, vector<2x1xf32>
    tpu.vector_store %arg7[%c0_34, %c0_35], %75 {strides = array<i32>} : memref<2x1xf32, #tpu.memory_space<vmem>>, vector<2x1xf32>,
    return
  }
}

</mosaic_0001>

<llo_original>
// kernel: multi_head_atten_forward.4
$region0: #{multi_head_atten_forward.4}
  #allocation0 [shape = 'u32[]', space=smem, size = 0x4, offset = 0x4, fixed_abs, tag = 'smem constant byte address 0x4 - core index']
  #allocation1 [shape = 'u32[144,128]{1,0:T(1,128)}', space=vmem, size = 0x12000, scoped, tag = 'internal scratch']
  %s0 = inlined_call_operand.vmem [shape: f32[2,8,49], index: 0, kind: input, shape index: {}]
  %s1 = inlined_call_operand.vmem [shape: f32[49,64], index: 1, kind: input, shape index: {}]
  %s2 = inlined_call_operand.vmem [shape: f32[1,64], index: 2, kind: input, shape index: {}]
  %s3 = inlined_call_operand.vmem [shape: f32[2,8,64], index: 3, kind: output, shape index: {}]
  %s4 = sld [smem:[#allocation0]]
  $region45: #{multi_head_atten_forward.4} parent=0
    _
  %s6 = ssub.s32 1, %s4
  %s7 = scalar_select 0, %s6, %s4
  loop: start=0, step=1, limit=4
  $region2: #{multi_head_atten_forward.4} parent=0 // loop_pre_header
    _
  $region3: #{multi_head_atten_forward.4} parent=0 // loop_header
    %s9 = sphi 0, %s13
    %p10 = scmp.ge.s32.totalorder %s9, 4
    %s19 = sphi 0, %s21
    %s22 = sphi 0, %s19
    %s23 = sphi 0, %s22
    %s39 = sphi 0, %s23
    %s43 = sphi 0, %s43
    %s45 = sphi 0, %s43
    %s46 = sphi 0, %s45
    %s60 = sphi 0, %s46
    %s64 = sphi 0, %s64
    %s66 = sphi 0, %s64
    %s67 = sphi 0, %s66
    %s81 = sphi 0, %s67
    %s87 = sphi 0, %s89
    %s90 = sphi 0, %s87
    %s91 = sphi 0, %s90
    %s107 = sphi 0, %s91
  $region4: #{multi_head_atten_forward.4} parent=0 // loop_header_branch
    %12 = sbr.rel (%p10) target = $region8
  $region5: #{multi_head_atten_forward.4} parent=0 // loop_body
    %s14 = ssub.s32 %s9, 1
    %s15 = ssub.s32 %s9, 2
    %s16 = sadd.s32 %s9, 1
    %s17 = ssub.s32 %s9, %s16
    %p18 = scmp.eq.s32.totalorder %s17, 0
    %s20 = sadd.s32 %s19, 1
    %s21 = scalar_select %p18, %s19, %s20
    %p24 = pneg %p18
    %p25 = scmp.eq.s32.totalorder %s9, 1
    %p26 = por %p24, %p25
    %p27 = scmp.ne.s32.totalorder %s19, %s22
    %p28 = scmp.eq.s32.totalorder %s9, 0
    %p29 = por %p27, %p28
    %p30 = scmp.ne.s32.totalorder %s19, %s22
    %p31 = scmp.eq.s32.totalorder %s14, 1
    %p32 = por %p30, %p31
    %p33 = scmp.ne.s32.totalorder %s22, %s23
    %p34 = scmp.eq.s32.totalorder %s14, 0
    %p35 = por %p33, %p34
    %p36 = scmp.ne.s32.totalorder %s22, %s23
    %p37 = scmp.eq.s32.totalorder %s15, 1
    %p38 = por %p36, %p37
    %p40 = scmp.ne.s32.totalorder %s23, %s39
    %p41 = scmp.eq.s32.totalorder %s15, 0
    %p42 = por %p40, %p41
    %s44 = sadd.s32 %s43, 1
    %p47 = scmp.eq.s32.totalorder %s9, 1
    %p48 = scmp.ne.s32.totalorder %s43, %s45
    %p49 = scmp.eq.s32.totalorder %s9, 0
    %p50 = por %p48, %p49
    %p51 = scmp.ne.s32.totalorder %s43, %s45
    %p52 = scmp.eq.s32.totalorder %s14, 1
    %p53 = por %p51, %p52
    %p54 = scmp.ne.s32.totalorder %s45, %s46
    %p55 = scmp.eq.s32.totalorder %s14, 0
    %p56 = por %p54, %p55
    %p57 = scmp.ne.s32.totalorder %s45, %s46
    %p58 = scmp.eq.s32.totalorder %s15, 1
    %p59 = por %p57, %p58
    %p61 = scmp.ne.s32.totalorder %s46, %s60
    %p62 = scmp.eq.s32.totalorder %s15, 0
    %p63 = por %p61, %p62
    %s65 = sadd.s32 %s64, 1
    %p68 = scmp.eq.s32.totalorder %s9, 1
    %p69 = scmp.ne.s32.totalorder %s64, %s66
    %p70 = scmp.eq.s32.totalorder %s9, 0
    %p71 = por %p69, %p70
    %p72 = scmp.ne.s32.totalorder %s64, %s66
    %p73 = scmp.eq.s32.totalorder %s14, 1
    %p74 = por %p72, %p73
    %p75 = scmp.ne.s32.totalorder %s66, %s67
    %p76 = scmp.eq.s32.totalorder %s14, 0
    %p77 = por %p75, %p76
    %p78 = scmp.ne.s32.totalorder %s66, %s67
    %p79 = scmp.eq.s32.totalorder %s15, 1
    %p80 = por %p78, %p79
    %p82 = scmp.ne.s32.totalorder %s67, %s81
    %p83 = scmp.eq.s32.totalorder %s15, 0
    %p84 = por %p82, %p83
    %s85 = ssub.s32 %s9, %s16
    %p86 = scmp.eq.s32.totalorder %s85, 0
    %s88 = sadd.s32 %s87, 1
    %s89 = scalar_select %p86, %s87, %s88
    %p92 = pneg %p86
    %p93 = scmp.eq.s32.totalorder %s9, 1
    %p94 = por %p92, %p93
    %p95 = scmp.ne.s32.totalorder %s87, %s90
    %p96 = scmp.eq.s32.totalorder %s9, 0
    %p97 = por %p95, %p96
    %p98 = scmp.ne.s32.totalorder %s87, %s90
    %p99 = scmp.eq.s32.totalorder %s14, 1
    %p100 = por %p98, %p99
    %p101 = scmp.ne.s32.totalorder %s90, %s91
    %p102 = scmp.eq.s32.totalorder %s14, 0
    %p103 = por %p101, %p102
    %p104 = scmp.ne.s32.totalorder %s90, %s91
    %p105 = scmp.eq.s32.totalorder %s15, 1
    %p106 = por %p104, %p105
    %p108 = scmp.ne.s32.totalorder %s91, %s107
    %p109 = scmp.eq.s32.totalorder %s15, 0
    %p110 = por %p108, %p109
    %p111 = scmp.le.s32.totalorder 1, %s9
    %p112 = scmp.lt.s32.totalorder %s9, 3
    %p113 = pnand %p111, %p112
    %p114 = pneg %p113
    // Predicated region
    $region9: #{multi_head_atten_forward.4} parent=5 // pred_check
      _
    $region10: #{multi_head_atten_forward.4} parent=5 // pred_check_branch
      %116 = sbr.rel (%p113) target = $region12
    $region11: #{multi_head_atten_forward.4} parent=5 // pred_region
      %s117 = ssub.s32 %s9, 1
      // Predicated region
      $region13: #{multi_head_atten_forward.4} parent=11 // pred_check
        %p118 = pneg %p56
      $region14: #{multi_head_atten_forward.4} parent=11 // pred_check_branch
        %120 = sbr.rel (%p118) target = $region16
      $region15: #{multi_head_atten_forward.4} parent=11 // pred_region
        _
      $region16: #{multi_head_atten_forward.4} parent=11 // pred_fallthru
        _
      // Predicated region
      $region17: #{multi_head_atten_forward.4} parent=11 // pred_check
        %p121 = pneg %p77
      $region18: #{multi_head_atten_forward.4} parent=11 // pred_check_branch
        %123 = sbr.rel (%p121) target = $region20
      $region19: #{multi_head_atten_forward.4} parent=11 // pred_region
        _
      $region20: #{multi_head_atten_forward.4} parent=11 // pred_fallthru
        _
    $region12: #{multi_head_atten_forward.4} parent=5 // pred_fallthru
      _
    %p124 = scmp.lt.s32.totalorder %s9, 2
    // Predicated region
    $region21: #{multi_head_atten_forward.4} parent=5 // pred_check
      %p125 = pneg %p124
    $region22: #{multi_head_atten_forward.4} parent=5 // pred_check_branch
      %127 = sbr.rel (%p125) target = $region24
    $region23: #{multi_head_atten_forward.4} parent=5 // pred_region
      // Predicated region
      $region25: #{multi_head_atten_forward.4} parent=23 // pred_check
        %p128 = pneg %p29
      $region26: #{multi_head_atten_forward.4} parent=23 // pred_check_branch
        %130 = sbr.rel (%p128) target = $region28
      $region27: #{multi_head_atten_forward.4} parent=23 // pred_region
        %p131 = scmp.lt.s32.totalorder %s9, 1
        %s132 = scalar_select %p131, %s9, 1
        %s133 = smul.addr %s132, 8
        %s134 = scalar_lea.vmem %s0, %s133
      $region28: #{multi_head_atten_forward.4} parent=23 // pred_fallthru
        _
    $region24: #{multi_head_atten_forward.4} parent=5 // pred_fallthru
      _
    %p135 = scmp.le.s32.totalorder 1, %s9
    %p136 = scmp.lt.s32.totalorder %s9, 3
    %p137 = pnand %p135, %p136
    %p138 = pneg %p137
    // Predicated region
    $region29: #{multi_head_atten_forward.4} parent=5 // pred_check
      _
    $region30: #{multi_head_atten_forward.4} parent=5 // pred_check_branch
      %140 = sbr.rel (%p137) target = $region32
    $region31: #{multi_head_atten_forward.4} parent=5 // pred_region
      %s141 = ssub.s32 %s9, 1
      %p142 = scmp.lt.s32.totalorder %s14, 1
      %s143 = scalar_select %p142, %s14, 1
      %s144 = smul.addr %s143, 8
      %s145 = scalar_lea.vmem %s0, %s144
      %p146 = pneg %p35
      %p147 = pneg %p32
      %p148 = pneg %p56
      %p149 = pneg %p53
      %p150 = pneg %p77
      %p151 = pneg %p74
      %p152 = pneg %p103
      %p153 = pneg %p100
      %p154 = scmp.lt.s32.totalorder %s14, 1
      %s155 = scalar_select %p154, %s14, 1
      %s156 = smul.addr %s155, 8
      %s157 = scalar_lea.vmem %s3, %s156
      %p158 = scmp.lt.s32.totalorder %s14, 1
      %s159 = scalar_select %p158, %s14, 1
      %s160 = smul.addr %s159, 8
      %s161 = scalar_lea.vmem %s0, %s160
      %p162 = scmp.lt.s32.totalorder %s14, 1
      %s163 = scalar_select %p162, %s14, 1
      %s164 = smul.addr %s163, 8
      %s165 = scalar_lea.vmem %s3, %s164
      %v166 = vld [vmem:[%s161] sm:$0xff]
      %v167 = vld [vmem:[%s1] sm:$0xff]
      %v168 = vld [vmem:[%s1 + $0x8] sm:$0xff]
      %v169 = vld [vmem:[%s1 + $0x10] sm:$0xff]
      %v170 = vld [vmem:[%s1 + $0x18] sm:$0xff]
      %v171 = vld [vmem:[%s1 + $0x20] sm:$0xff]
      %v172 = vld [vmem:[%s1 + $0x28] sm:$0xff]
      %v173 = vld [vmem:[%s1 + $0x30] sm:$0x1]
      %v174 = vld [vmem:[%s2] sm:$0x1]
      %v176 = vlaneseq
      %v177 = vshrl.u32 %v176, 7
      %v178 = vsub.s32 0, %v177
      %v179 = vrot.slane %v174, %v178
      %vm181 = vcmask 400384
      %v183 = vsel %vm181, %v166, 0
      %vm185 = vcmask 1040384
      %v187 = vsel %vm185, %v173, 0
      %189 = vmatprep.subr.mxu0 0.0
      %190 = vmatpush1.msra.mxu0 0.0
      %191 = vmatprep.subr.mxu0 0.0
      %192 = vmatpush1.msra.mxu0 0.0
      %193 = vmatprep.subr.mxu0 0.0
      %194 = vmatpush1.msra.mxu0 0.0
      %195 = vmatprep.subr.mxu0 0.0
      %196 = vmatpush1.msra.mxu0 0.0
      %197 = vmatprep.subr.mxu0 0.0
      %198 = vmatpush1.msra.mxu0 0.0
      %199 = vmatprep.subr.mxu0 0.0
      %200 = vmatpush1.msra.mxu0 0.0
      %201 = vmatprep.subr.mxu0 0.0
      %202 = vmatpush1.msra.mxu0 0.0
      %203 = vmatprep.subr.mxu0 0.0
      %204 = vmatpush1.msra.mxu0 0.0
      %205 = vmatprep.subr.mxu0 0.0
      %206 = vmatpush1.msra.mxu0 0.0
      %207 = vmatprep.subr.mxu0 0.0
      %208 = vmatpush1.msra.mxu0 %v187
      %209 = vmatprep.subr.mxu0 0.0
      %210 = vmatpush1.msra.mxu0 %v172
      %211 = vmatprep.subr.mxu0 0.0
      %212 = vmatpush1.msra.mxu0 %v171
      %213 = vmatprep.subr.mxu0 0.0
      %214 = vmatpush1.msra.mxu0 %v170
      %215 = vmatprep.subr.mxu0 0.0
      %216 = vmatpush1.msra.mxu0 %v169
      %217 = vmatprep.subr.mxu0 0.0
      %218 = vmatpush1.msra.mxu0 %v168
      %219 = vmatprep.subr.mxu0 0.0
      %220 = vmatpush1.msra.mxu0 %v167
      %221 = vmatprep.subr.mxu0 0.0
      %222 = vmatpush2.msra.mxu0 0.0
      %223 = vmatprep.subr.mxu0 0.0
      %224 = vmatpush2.msra.mxu0 0.0
      %225 = vmatprep.subr.mxu0 0.0
      %226 = vmatpush2.msra.mxu0 0.0
      %227 = vmatprep.subr.mxu0 0.0
      %228 = vmatpush2.msra.mxu0 0.0
      %229 = vmatprep.subr.mxu0 0.0
      %230 = vmatpush2.msra.mxu0 0.0
      %231 = vmatprep.subr.mxu0 0.0
      %232 = vmatpush2.msra.mxu0 0.0
      %233 = vmatprep.subr.mxu0 0.0
      %234 = vmatpush2.msra.mxu0 0.0
      %235 = vmatprep.subr.mxu0 0.0
      %236 = vmatpush2.msra.mxu0 0.0
      %237 = vmatprep.subr.mxu0 0.0
      %238 = vmatpush2.msra.mxu0 0.0
      %239 = vmatprep.subr.mxu0 0.0
      %240 = vmatpush2.msra.mxu0 0.0
      %241 = vmatprep.subr.mxu0 0.0
      %242 = vmatpush2.msra.mxu0 0.0
      %243 = vmatprep.subr.mxu0 0.0
      %244 = vmatpush2.msra.mxu0 0.0
      %245 = vmatprep.subr.mxu0 0.0
      %246 = vmatpush2.msra.mxu0 0.0
      %247 = vmatprep.subr.mxu0 0.0
      %248 = vmatpush2.msra.mxu0 0.0
      %249 = vmatprep.subr.mxu0 0.0
      %250 = vmatpush2.msra.mxu0 0.0
      %251 = vmatprep.subr.mxu0 0.0
      %252 = vmatpush2.msra.mxu0 0.0
      %253 = vmatprep.mubr.f32.mxu0 0.0
      %254 = vmatmul.mubr.f32.gmra.mxu0 %v183
      %v255 = vpop.f32.mrf.mxu0
      %v256 = vadd.f32 %v179, %v255
      %v257 = vpop.f32.mrf.mxu0
      %258 = vdwg.mxu0
      %vm259 = vcmask 523264
      %260 = vst.msk [vmem:[%s165] sm:$0xff] %vm259, %v256
      %p261 = scmp.lt.s32.totalorder %s14, 1
      %s262 = scalar_select %p261, %s14, 1
      %s263 = smul.addr %s262, 8
      %s264 = scalar_lea.vmem %s3, %s263
      // Predicated region
      $region33: #{multi_head_atten_forward.4} parent=31 // pred_check
        %p265 = pneg %p100
      $region34: #{multi_head_atten_forward.4} parent=31 // pred_check_branch
        %267 = sbr.rel (%p265) target = $region36
      $region35: #{multi_head_atten_forward.4} parent=31 // pred_region
        _
      $region36: #{multi_head_atten_forward.4} parent=31 // pred_fallthru
        _
    $region32: #{multi_head_atten_forward.4} parent=5 // pred_fallthru
      _
    %p268 = scmp.le.s32.totalorder 2, %s9
    // Predicated region
    $region37: #{multi_head_atten_forward.4} parent=5 // pred_check
      %p269 = pneg %p268
    $region38: #{multi_head_atten_forward.4} parent=5 // pred_check_branch
      %271 = sbr.rel (%p269) target = $region40
    $region39: #{multi_head_atten_forward.4} parent=5 // pred_region
      %s272 = ssub.s32 %s9, 2
      // Predicated region
      $region41: #{multi_head_atten_forward.4} parent=39 // pred_check
        %p273 = pneg %p106
      $region42: #{multi_head_atten_forward.4} parent=39 // pred_check_branch
        %275 = sbr.rel (%p273) target = $region44
      $region43: #{multi_head_atten_forward.4} parent=39 // pred_region
        %p276 = scmp.lt.s32.totalorder %s15, 1
        %s277 = scalar_select %p276, %s15, 1
        %s278 = smul.addr %s277, 8
        %s279 = scalar_lea.vmem %s3, %s278
      $region44: #{multi_head_atten_forward.4} parent=39 // pred_fallthru
        _
    $region40: #{multi_head_atten_forward.4} parent=5 // pred_fallthru
      _
  $region6: #{multi_head_atten_forward.4} parent=0 // loop_footer
    %s13 = sadd.s32 1, %s9
  $region7: #{multi_head_atten_forward.4} parent=0 // loop_footer_branch
    %8 = sbr.rel target = $region3
  $region8: #{multi_head_atten_forward.4} parent=0 // loop_exit
    _

// kernel: multi_head_atten_forward.7
$region0: #{multi_head_atten_forward.7}
  #allocation0 [shape = 'u32[]', space=smem, size = 0x4, offset = 0x4, fixed_abs, tag = 'smem constant byte address 0x4 - core index']
  #allocation1 [shape = 'u32[144,128]{1,0:T(1,128)}', space=vmem, size = 0x12000, scoped, tag = 'internal scratch']
  #allocation2 [shape = 'f32[1,1]{1,0:T(1,128)S(1)}', space=vmem, size = 0x200, scoped, tag = 'scoped memory for multi_head_atten_forward.7']
  %s0 = inlined_call_operand.vmem [shape: f32[2,8,64], index: 0, kind: input, shape index: {}]
  %s1 = inlined_call_operand.vmem [shape: f32[1,64], index: 1, kind: input, shape index: {}]
  %s2 = inlined_call_operand.vmem [shape: f32[1,64], index: 2, kind: input, shape index: {}]
  %s3 = inlined_call_operand.vmem [shape: f32[64,32], index: 3, kind: input, shape index: {}]
  %s4 = inlined_call_operand.vmem [shape: f32[1,32], index: 4, kind: input, shape index: {}]
  %s5 = inlined_call_operand.vmem [shape: f32[32,1], index: 5, kind: input, shape index: {}]
  %s6 = inlined_call_operand.<no memory space> [shape: f32[1,1], index: 6, kind: input, shape index: {}]
  %s7 = inlined_call_operand.vmem [shape: f32[2,1], index: 7, kind: output, shape index: {}]
  %s8 = sld [smem:[#allocation0]]
  $region38: #{multi_head_atten_forward.7} parent=0
    _
  %s10 = ssub.s32 1, %s8
  %s11 = scalar_select 0, %s10, %s8
  %v12 = vstv %s6
  %13 = vst [vmem:[#allocation2] sm:$0x1] %v12
  // Predicated region
  $region2: #{multi_head_atten_forward.7} parent=0 // pred_check
    _
  $region3: #{multi_head_atten_forward.7} parent=0 // pred_check_branch
    %15 = sbr.rel (0) target = $region5
  $region4: #{multi_head_atten_forward.7} parent=0 // pred_region
    _
  $region5: #{multi_head_atten_forward.7} parent=0 // pred_fallthru
    _
  // Predicated region
  $region6: #{multi_head_atten_forward.7} parent=0 // pred_check
    _
  $region7: #{multi_head_atten_forward.7} parent=0 // pred_check_branch
    %17 = sbr.rel (0) target = $region9
  $region8: #{multi_head_atten_forward.7} parent=0 // pred_region
    _
  $region9: #{multi_head_atten_forward.7} parent=0 // pred_fallthru
    _
  // Predicated region
  $region10: #{multi_head_atten_forward.7} parent=0 // pred_check
    _
  $region11: #{multi_head_atten_forward.7} parent=0 // pred_check_branch
    %19 = sbr.rel (0) target = $region13
  $region12: #{multi_head_atten_forward.7} parent=0 // pred_region
    _
  $region13: #{multi_head_atten_forward.7} parent=0 // pred_fallthru
    _
  // Predicated region
  $region14: #{multi_head_atten_forward.7} parent=0 // pred_check
    _
  $region15: #{multi_head_atten_forward.7} parent=0 // pred_check_branch
    %21 = sbr.rel (0) target = $region17
  $region16: #{multi_head_atten_forward.7} parent=0 // pred_region
    _
  $region17: #{multi_head_atten_forward.7} parent=0 // pred_fallthru
    _
  // Predicated region
  $region18: #{multi_head_atten_forward.7} parent=0 // pred_check
    _
  $region19: #{multi_head_atten_forward.7} parent=0 // pred_check_branch
    %23 = sbr.rel (0) target = $region21
  $region20: #{multi_head_atten_forward.7} parent=0 // pred_region
    _
  $region21: #{multi_head_atten_forward.7} parent=0 // pred_fallthru
    _
  // Predicated region
  $region22: #{multi_head_atten_forward.7} parent=0 // pred_check
    _
  $region23: #{multi_head_atten_forward.7} parent=0 // pred_check_branch
    %25 = sbr.rel (0) target = $region25
  $region24: #{multi_head_atten_forward.7} parent=0 // pred_region
    _
  $region25: #{multi_head_atten_forward.7} parent=0 // pred_fallthru
    _
  // Predicated region
  $region26: #{multi_head_atten_forward.7} parent=0 // pred_check
    _
  $region27: #{multi_head_atten_forward.7} parent=0 // pred_check_branch
    %27 = sbr.rel (0) target = $region29
  $region28: #{multi_head_atten_forward.7} parent=0 // pred_region
    _
  $region29: #{multi_head_atten_forward.7} parent=0 // pred_fallthru
    _
  %v28 = vld [vmem:[%s0] sm:$0xff]
  %v29 = vld [vmem:[%s0 + $0x8] sm:$0xff]
  %v30 = vld [vmem:[%s1] sm:$0x1]
  %v31 = vld [vmem:[%s2] sm:$0x1]
  %vm32 = vcmask 523264
  %v33 = vsel %vm32, %v28, 0.0
  %34 = vadd.xlane.f32.xlu0 %v33
  %v35 = vpop.xlane.xlu0 %34
  %v36 = vsel %vm32, %v29, 0.0
  %37 = vadd.xlane.f32.xlu0 %v36
  %v38 = vpop.xlane.xlu0 %37
  %v39 = vrcp.pop 64.0
  %v40 = vmul.f32 %v35, %v39
  %v41 = vmul.f32 %v38, %v39
  %v42 = vsub.f32 %v28, %v40
  %v43 = vsub.f32 %v29, %v41
  %v44 = vmul.f32 %v42, %v42
  %v45 = vmul.f32 %v43, %v43
  %v46 = vsel %vm32, %v44, 0.0
  %47 = vadd.xlane.f32.xlu0 %v46
  %v48 = vpop.xlane.xlu0 %47
  %v49 = vsel %vm32, %v45, 0.0
  %50 = vadd.xlane.f32.xlu0 %v49
  %v51 = vpop.xlane.xlu0 %50
  %v52 = vmul.f32 %v48, %v39
  %v53 = vmul.f32 %v51, %v39
  %v54 = vadd.f32 %v52, 1e-05
  %v55 = vadd.f32 %v53, 1e-05
  %v56 = vrsqrt.pop %v54
  %v57 = vrsqrt.pop %v55
  %v58 = vmul.f32 %v42, %v56
  %v59 = vmul.f32 %v43, %v57
  %v61 = vlaneseq
  %v62 = vshrl.u32 %v61, 7
  %v63 = vsub.s32 0, %v62
  %v64 = vrot.slane %v30, %v63
  %v66 = vmul.f32 %v58, %v64
  %v67 = vmul.f32 %v59, %v64
  %v69 = vlaneseq
  %v70 = vshrl.u32 %v69, 7
  %v71 = vsub.s32 0, %v70
  %v72 = vrot.slane %v31, %v71
  %v74 = vadd.f32 %v66, %v72
  %v75 = vadd.f32 %v67, %v72
  %v76 = vsel %vm32, %v74, -inf
  %v77 = vrot.slane %v76, 4
  %v78 = vmax.f32 %v76, %v77
  %v79 = vrot.slane %v78, 2
  %v80 = vmax.f32 %v78, %v79
  %v81 = vrot.slane %v80, 1
  %v82 = vmax.f32 %v80, %v81
  %v83 = vsel %vm32, %v75, -inf
  %v84 = vrot.slane %v83, 4
  %v85 = vmax.f32 %v83, %v84
  %v86 = vrot.slane %v85, 2
  %v87 = vmax.f32 %v85, %v86
  %v88 = vrot.slane %v87, 1
  %v89 = vmax.f32 %v87, %v88
  %v90 = vld [vmem:[%s3] sm:$0xff]
  %v91 = vld [vmem:[%s3 + $0x8] sm:$0xff]
  %v92 = vld [vmem:[%s3 + $0x10] sm:$0xff]
  %v93 = vld [vmem:[%s3 + $0x18] sm:$0xff]
  %v94 = vld [vmem:[%s3 + $0x20] sm:$0xff]
  %v95 = vld [vmem:[%s3 + $0x28] sm:$0xff]
  %v96 = vld [vmem:[%s3 + $0x30] sm:$0xff]
  %v97 = vld [vmem:[%s3 + $0x38] sm:$0xff]
  %v98 = vld [vmem:[%s4] sm:$0x1]
  %v100 = vlaneseq
  %v101 = vshrl.u32 %v100, 7
  %v102 = vsub.s32 0, %v101
  %v103 = vrot.slane %v98, %v102
  %vm107 = vcmask 1041409
  %v108 = vsel %vm107, %v89, %v82
  %v109 = vsel %vm32, %v108, 0
  %111 = vmatprep.subr.mxu0 0.0
  %112 = vmatpush1.msra.mxu0 0.0
  %113 = vmatprep.subr.mxu0 0.0
  %114 = vmatpush1.msra.mxu0 0.0
  %115 = vmatprep.subr.mxu0 0.0
  %116 = vmatpush1.msra.mxu0 0.0
  %117 = vmatprep.subr.mxu0 0.0
  %118 = vmatpush1.msra.mxu0 0.0
  %119 = vmatprep.subr.mxu0 0.0
  %120 = vmatpush1.msra.mxu0 0.0
  %121 = vmatprep.subr.mxu0 0.0
  %122 = vmatpush1.msra.mxu0 0.0
  %123 = vmatprep.subr.mxu0 0.0
  %124 = vmatpush1.msra.mxu0 0.0
  %125 = vmatprep.subr.mxu0 0.0
  %126 = vmatpush1.msra.mxu0 0.0
  %127 = vmatprep.subr.mxu0 0.0
  %128 = vmatpush1.msra.mxu0 %v97
  %129 = vmatprep.subr.mxu0 0.0
  %130 = vmatpush1.msra.mxu0 %v96
  %131 = vmatprep.subr.mxu0 0.0
  %132 = vmatpush1.msra.mxu0 %v95
  %133 = vmatprep.subr.mxu0 0.0
  %134 = vmatpush1.msra.mxu0 %v94
  %135 = vmatprep.subr.mxu0 0.0
  %136 = vmatpush1.msra.mxu0 %v93
  %137 = vmatprep.subr.mxu0 0.0
  %138 = vmatpush1.msra.mxu0 %v92
  %139 = vmatprep.subr.mxu0 0.0
  %140 = vmatpush1.msra.mxu0 %v91
  %141 = vmatprep.subr.mxu0 0.0
  %142 = vmatpush1.msra.mxu0 %v90
  %143 = vmatprep.subr.mxu0 0.0
  %144 = vmatpush2.msra.mxu0 0.0
  %145 = vmatprep.subr.mxu0 0.0
  %146 = vmatpush2.msra.mxu0 0.0
  %147 = vmatprep.subr.mxu0 0.0
  %148 = vmatpush2.msra.mxu0 0.0
  %149 = vmatprep.subr.mxu0 0.0
  %150 = vmatpush2.msra.mxu0 0.0
  %151 = vmatprep.subr.mxu0 0.0
  %152 = vmatpush2.msra.mxu0 0.0
  %153 = vmatprep.subr.mxu0 0.0
  %154 = vmatpush2.msra.mxu0 0.0
  %155 = vmatprep.subr.mxu0 0.0
  %156 = vmatpush2.msra.mxu0 0.0
  %157 = vmatprep.subr.mxu0 0.0
  %158 = vmatpush2.msra.mxu0 0.0
  %159 = vmatprep.subr.mxu0 0.0
  %160 = vmatpush2.msra.mxu0 0.0
  %161 = vmatprep.subr.mxu0 0.0
  %162 = vmatpush2.msra.mxu0 0.0
  %163 = vmatprep.subr.mxu0 0.0
  %164 = vmatpush2.msra.mxu0 0.0
  %165 = vmatprep.subr.mxu0 0.0
  %166 = vmatpush2.msra.mxu0 0.0
  %167 = vmatprep.subr.mxu0 0.0
  %168 = vmatpush2.msra.mxu0 0.0
  %169 = vmatprep.subr.mxu0 0.0
  %170 = vmatpush2.msra.mxu0 0.0
  %171 = vmatprep.subr.mxu0 0.0
  %172 = vmatpush2.msra.mxu0 0.0
  %173 = vmatprep.subr.mxu0 0.0
  %174 = vmatpush2.msra.mxu0 0.0
  %175 = vmatprep.mubr.f32.mxu0 0.0
  %176 = vmatmul.mubr.f32.gmra.mxu0 %v109
  %v177 = vpop.f32.mrf.mxu0
  %v178 = vadd.f32 %v103, %v177
  %v179 = vpop.f32.mrf.mxu0
  %180 = vdwg.mxu0
  %v181 = vmul.f32 %v178, 0.15915494
  %v182 = vadd.f32 %v181, 0.5
  %v183 = vfloor.f32 %v182
  %v184 = vmul.f32 %v183, 6.2831855
  %v185 = vsub.f32 %v178, %v184
  %vm186 = vcmp.gt.f32.partialorder %v185, 1.5707964
  %v187 = vsub.f32 3.1415927, %v185
  %v188 = vsel %vm186, %v187, %v185
  %vm189 = vcmp.lt.f32.partialorder %v188, -1.5707964
  %v190 = vsub.f32 -3.1415927, %v188
  %v191 = vsel %vm189, %v190, %v188
  %v192 = vmul.f32 %v191, %v191
  %v193 = vmul.f32 %v192, 1.6059044e-10
  %v194 = vsub.f32 %v193, 2.5052108e-08
  %v195 = vmul.f32 %v194, %v192
  %v196 = vadd.f32 %v195, 2.7557319e-06
  %v197 = vmul.f32 %v196, %v192
  %v198 = vsub.f32 %v197, 0.0001984127
  %v199 = vmul.f32 %v198, %v192
  %v200 = vadd.f32 %v199, 0.008333334
  %v201 = vmul.f32 %v200, %v192
  %v202 = vsub.f32 %v201, 0.16666667
  %v203 = vmul.f32 %v191, %v192
  %v204 = vmul.f32 %v203, %v202
  %v205 = vadd.f32 %v191, %v204
  %v206 = vld [vmem:[%s5] sm:$0xff]
  %v207 = vld [vmem:[%s5 + $0x8] sm:$0xff]
  %v208 = vld [vmem:[%s5 + $0x10] sm:$0xff]
  %v209 = vld [vmem:[%s5 + $0x18] sm:$0xff]
  %v210 = vld [vmem:[#allocation2] sm:$0x1]
  %v212 = vlaneseq
  %v213 = vshrl.u32 %v212, 7
  %v214 = vsub.s32 0, %v213
  %v215 = vrot.slane %v210, %v214
  %vm217 = vcmask 261120
  %v219 = vsel %vm217, %v205, 0
  %221 = vmatprep.subr.mxu0 0.0
  %222 = vmatpush1.msra.mxu0 0.0
  %223 = vmatprep.subr.mxu0 0.0
  %224 = vmatpush1.msra.mxu0 0.0
  %225 = vmatprep.subr.mxu0 0.0
  %226 = vmatpush1.msra.mxu0 0.0
  %227 = vmatprep.subr.mxu0 0.0
  %228 = vmatpush1.msra.mxu0 0.0
  %229 = vmatprep.subr.mxu0 0.0
  %230 = vmatpush1.msra.mxu0 0.0
  %231 = vmatprep.subr.mxu0 0.0
  %232 = vmatpush1.msra.mxu0 0.0
  %233 = vmatprep.subr.mxu0 0.0
  %234 = vmatpush1.msra.mxu0 0.0
  %235 = vmatprep.subr.mxu0 0.0
  %236 = vmatpush1.msra.mxu0 0.0
  %237 = vmatprep.subr.mxu0 0.0
  %238 = vmatpush1.msra.mxu0 0.0
  %239 = vmatprep.subr.mxu0 0.0
  %240 = vmatpush1.msra.mxu0 0.0
  %241 = vmatprep.subr.mxu0 0.0
  %242 = vmatpush1.msra.mxu0 0.0
  %243 = vmatprep.subr.mxu0 0.0
  %244 = vmatpush1.msra.mxu0 0.0
  %245 = vmatprep.subr.mxu0 0.0
  %246 = vmatpush1.msra.mxu0 %v209
  %247 = vmatprep.subr.mxu0 0.0
  %248 = vmatpush1.msra.mxu0 %v208
  %249 = vmatprep.subr.mxu0 0.0
  %250 = vmatpush1.msra.mxu0 %v207
  %251 = vmatprep.subr.mxu0 0.0
  %252 = vmatpush1.msra.mxu0 %v206
  %253 = vmatprep.subr.mxu0 0.0
  %254 = vmatpush2.msra.mxu0 0.0
  %255 = vmatprep.subr.mxu0 0.0
  %256 = vmatpush2.msra.mxu0 0.0
  %257 = vmatprep.subr.mxu0 0.0
  %258 = vmatpush2.msra.mxu0 0.0
  %259 = vmatprep.subr.mxu0 0.0
  %260 = vmatpush2.msra.mxu0 0.0
  %261 = vmatprep.subr.mxu0 0.0
  %262 = vmatpush2.msra.mxu0 0.0
  %263 = vmatprep.subr.mxu0 0.0
  %264 = vmatpush2.msra.mxu0 0.0
  %265 = vmatprep.subr.mxu0 0.0
  %266 = vmatpush2.msra.mxu0 0.0
  %267 = vmatprep.subr.mxu0 0.0
  %268 = vmatpush2.msra.mxu0 0.0
  %269 = vmatprep.subr.mxu0 0.0
  %270 = vmatpush2.msra.mxu0 0.0
  %271 = vmatprep.subr.mxu0 0.0
  %272 = vmatpush2.msra.mxu0 0.0
  %273 = vmatprep.subr.mxu0 0.0
  %274 = vmatpush2.msra.mxu0 0.0
  %275 = vmatprep.subr.mxu0 0.0
  %276 = vmatpush2.msra.mxu0 0.0
  %277 = vmatprep.subr.mxu0 0.0
  %278 = vmatpush2.msra.mxu0 0.0
  %279 = vmatprep.subr.mxu0 0.0
  %280 = vmatpush2.msra.mxu0 0.0
  %281 = vmatprep.subr.mxu0 0.0
  %282 = vmatpush2.msra.mxu0 0.0
  %283 = vmatprep.subr.mxu0 0.0
  %284 = vmatpush2.msra.mxu0 0.0
  %285 = vmatprep.mubr.f32.mxu0 0.0
  %286 = vmatmul.mubr.f32.gmra.mxu0 %v219
  %v287 = vpop.f32.mrf.mxu0
  %v288 = vadd.f32 %v215, %v287
  %v289 = vpop.f32.mrf.mxu0
  %290 = vdwg.mxu0
  %vm291 = vcmask 1024
  %292 = vst.msk [vmem:[%s7] sm:$0x3] %vm291, %v288
  // Predicated region
  $region30: #{multi_head_atten_forward.7} parent=0 // pred_check
    _
  $region31: #{multi_head_atten_forward.7} parent=0 // pred_check_branch
    %294 = sbr.rel (0) target = $region33
  $region32: #{multi_head_atten_forward.7} parent=0 // pred_region
    _
  $region33: #{multi_head_atten_forward.7} parent=0 // pred_fallthru
    _
  // Predicated region
  $region34: #{multi_head_atten_forward.7} parent=0 // pred_check
    _
  $region35: #{multi_head_atten_forward.7} parent=0 // pred_check_branch
    %296 = sbr.rel (0) target = $region37
  $region36: #{multi_head_atten_forward.7} parent=0 // pred_region
    _
  $region37: #{multi_head_atten_forward.7} parent=0 // pred_fallthru
    _

// kernel: multi_head_atten_forward.5
$region0: #{multi_head_atten_forward.5}
  #allocation0 [shape = 'u32[]', space=smem, size = 0x4, offset = 0x4, fixed_abs, tag = 'smem constant byte address 0x4 - core index']
  #allocation1 [shape = 'u32[144,128]{1,0:T(1,128)}', space=vmem, size = 0x12000, scoped, tag = 'internal scratch']
  #allocation2 [shape = 'f32[8,8,8]{2,1,0:T(8,128)}', space=vmem, size = 0x8000, scoped, tag = 'scratch operand']
  #allocation3 [shape = 'f32[8,8,8]{2,1,0:T(8,128)}', space=vmem, size = 0x8000, scoped, tag = 'scratch operand']
  #allocation4 [shape = 'f32[8,8,8]{2,1,0:T(8,128)}', space=vmem, size = 0x8000, scoped, tag = 'scratch operand']
  %s0 = inlined_call_operand.vmem [shape: f32[2,8,64], index: 0, kind: input, shape index: {}]
  %s1 = inlined_call_operand.vmem [shape: bf16[64,64], index: 1, kind: input, shape index: {}]
  %s2 = inlined_call_operand.vmem [shape: bf16[64,64], index: 2, kind: input, shape index: {}]
  %s3 = inlined_call_operand.vmem [shape: bf16[64,64], index: 3, kind: input, shape index: {}]
  %s4 = inlined_call_operand.vmem [shape: bf16[8,8,64], index: 4, kind: input, shape index: {}]
  %s5 = inlined_call_operand.vmem [shape: f32[1,64], index: 5, kind: input, shape index: {}]
  %s6 = inlined_call_operand.vmem [shape: f32[1,64], index: 6, kind: input, shape index: {}]
  %s7 = inlined_call_operand.vmem [shape: f32[1,64], index: 7, kind: input, shape index: {}]
  %s8 = inlined_call_operand.vmem [shape: f32[1,64], index: 8, kind: input, shape index: {}]
  %s9 = inlined_call_operand.vmem [shape: bf16[64,256], index: 9, kind: input, shape index: {}]
  %s10 = inlined_call_operand.vmem [shape: f32[1,256], index: 10, kind: input, shape index: {}]
  %s11 = inlined_call_operand.vmem [shape: bf16[256,64], index: 11, kind: input, shape index: {}]
  %s12 = inlined_call_operand.vmem [shape: f32[1,64], index: 12, kind: input, shape index: {}]
  %s13 = inlined_call_operand.vmem [shape: f32[1,64], index: 13, kind: input, shape index: {}]
  %s14 = inlined_call_operand.vmem [shape: f32[1,64], index: 14, kind: input, shape index: {}]
  %s15 = inlined_call_operand.vmem [shape: f32[2,8,64], index: 15, kind: output, shape index: {}]
  %s16 = sld [smem:[#allocation0]]
  $region93: #{multi_head_atten_forward.5} parent=0
    _
  %s18 = ssub.s32 1, %s16
  %s19 = scalar_select 0, %s18, %s16
  loop: start=0, step=1, limit=4
  $region2: #{multi_head_atten_forward.5} parent=0 // loop_pre_header
    _
  $region3: #{multi_head_atten_forward.5} parent=0 // loop_header
    %s21 = sphi 0, %s25
    %p22 = scmp.ge.s32.totalorder %s21, 4
    %s28 = sphi 0, %s40
    %s29 = sphi 0, %s36
    %s30 = sphi 0, %s28
    %s31 = sphi 0, %s29
    %s32 = sphi 0, %s30
    %s33 = sphi 0, %s31
    %s43 = sphi 0, %s45
    %s46 = sphi 0, %s43
    %s47 = sphi 0, %s46
    %s63 = sphi 0, %s47
    %s67 = sphi 0, %s67
    %s69 = sphi 0, %s67
    %s70 = sphi 0, %s69
    %s84 = sphi 0, %s70
    %s88 = sphi 0, %s88
    %s90 = sphi 0, %s88
    %s91 = sphi 0, %s90
    %s105 = sphi 0, %s91
    %s109 = sphi 0, %s109
    %s111 = sphi 0, %s109
    %s112 = sphi 0, %s111
    %s126 = sphi 0, %s112
    %s130 = sphi 0, %s130
    %s132 = sphi 0, %s130
    %s133 = sphi 0, %s132
    %s147 = sphi 0, %s133
    %s151 = sphi 0, %s151
    %s153 = sphi 0, %s151
    %s154 = sphi 0, %s153
    %s168 = sphi 0, %s154
    %s172 = sphi 0, %s172
    %s174 = sphi 0, %s172
    %s175 = sphi 0, %s174
    %s189 = sphi 0, %s175
    %s193 = sphi 0, %s193
    %s195 = sphi 0, %s193
    %s196 = sphi 0, %s195
    %s210 = sphi 0, %s196
    %s214 = sphi 0, %s214
    %s216 = sphi 0, %s214
    %s217 = sphi 0, %s216
    %s231 = sphi 0, %s217
    %s235 = sphi 0, %s235
    %s237 = sphi 0, %s235
    %s238 = sphi 0, %s237
    %s252 = sphi 0, %s238
    %s256 = sphi 0, %s256
    %s258 = sphi 0, %s256
    %s259 = sphi 0, %s258
    %s273 = sphi 0, %s259
    %s277 = sphi 0, %s277
    %s279 = sphi 0, %s277
    %s280 = sphi 0, %s279
    %s294 = sphi 0, %s280
    %s298 = sphi 0, %s298
    %s300 = sphi 0, %s298
    %s301 = sphi 0, %s300
    %s315 = sphi 0, %s301
    %s319 = sphi 0, %s319
    %s321 = sphi 0, %s319
    %s322 = sphi 0, %s321
    %s336 = sphi 0, %s322
    %s340 = sphi 0, %s340
    %s342 = sphi 0, %s340
    %s343 = sphi 0, %s342
    %s357 = sphi 0, %s343
    %s365 = sphi 0, %s367
    %s368 = sphi 0, %s365
    %s369 = sphi 0, %s368
    %s385 = sphi 0, %s369
  $region4: #{multi_head_atten_forward.5} parent=0 // loop_header_branch
    %24 = sbr.rel (%p22) target = $region8
  $region5: #{multi_head_atten_forward.5} parent=0 // loop_body
    %s26 = ssub.s32 %s21, 1
    %s27 = ssub.s32 %s21, 2
    %s34 = sadd.s32 1, %s29
    %p35 = scmp.ge.s32.totalorder %s34, 1
    %s36 = scalar_select %p35, 0, %s34
    %s37 = sadd.s32 1, %s28
    %s38 = scalar_select %p35, %s37, %s28
    %p39 = scmp.ge.s32.totalorder %s38, 2
    %s40 = scalar_select %p39, 0, %s38
    %s41 = ssub.s32 %s28, %s40
    %p42 = scmp.eq.s32.totalorder %s41, 0
    %s44 = sadd.s32 %s43, 1
    %s45 = scalar_select %p42, %s43, %s44
    %p48 = pneg %p42
    %p49 = scmp.eq.s32.totalorder %s21, 1
    %p50 = por %p48, %p49
    %p51 = scmp.ne.s32.totalorder %s43, %s46
    %p52 = scmp.eq.s32.totalorder %s21, 0
    %p53 = por %p51, %p52
    %p54 = scmp.ne.s32.totalorder %s43, %s46
    %p55 = scmp.eq.s32.totalorder %s26, 1
    %p56 = por %p54, %p55
    %p57 = scmp.ne.s32.totalorder %s46, %s47
    %p58 = scmp.eq.s32.totalorder %s26, 0
    %p59 = por %p57, %p58
    %p60 = scmp.ne.s32.totalorder %s46, %s47
    %p61 = scmp.eq.s32.totalorder %s27, 1
    %p62 = por %p60, %p61
    %p64 = scmp.ne.s32.totalorder %s47, %s63
    %p65 = scmp.eq.s32.totalorder %s27, 0
    %p66 = por %p64, %p65
    %s68 = sadd.s32 %s67, 1
    %p71 = scmp.eq.s32.totalorder %s21, 1
    %p72 = scmp.ne.s32.totalorder %s67, %s69
    %p73 = scmp.eq.s32.totalorder %s21, 0
    %p74 = por %p72, %p73
    %p75 = scmp.ne.s32.totalorder %s67, %s69
    %p76 = scmp.eq.s32.totalorder %s26, 1
    %p77 = por %p75, %p76
    %p78 = scmp.ne.s32.totalorder %s69, %s70
    %p79 = scmp.eq.s32.totalorder %s26, 0
    %p80 = por %p78, %p79
    %p81 = scmp.ne.s32.totalorder %s69, %s70
    %p82 = scmp.eq.s32.totalorder %s27, 1
    %p83 = por %p81, %p82
    %p85 = scmp.ne.s32.totalorder %s70, %s84
    %p86 = scmp.eq.s32.totalorder %s27, 0
    %p87 = por %p85, %p86
    %s89 = sadd.s32 %s88, 1
    %p92 = scmp.eq.s32.totalorder %s21, 1
    %p93 = scmp.ne.s32.totalorder %s88, %s90
    %p94 = scmp.eq.s32.totalorder %s21, 0
    %p95 = por %p93, %p94
    %p96 = scmp.ne.s32.totalorder %s88, %s90
    %p97 = scmp.eq.s32.totalorder %s26, 1
    %p98 = por %p96, %p97
    %p99 = scmp.ne.s32.totalorder %s90, %s91
    %p100 = scmp.eq.s32.totalorder %s26, 0
    %p101 = por %p99, %p100
    %p102 = scmp.ne.s32.totalorder %s90, %s91
    %p103 = scmp.eq.s32.totalorder %s27, 1
    %p104 = por %p102, %p103
    %p106 = scmp.ne.s32.totalorder %s91, %s105
    %p107 = scmp.eq.s32.totalorder %s27, 0
    %p108 = por %p106, %p107
    %s110 = sadd.s32 %s109, 1
    %p113 = scmp.eq.s32.totalorder %s21, 1
    %p114 = scmp.ne.s32.totalorder %s109, %s111
    %p115 = scmp.eq.s32.totalorder %s21, 0
    %p116 = por %p114, %p115
    %p117 = scmp.ne.s32.totalorder %s109, %s111
    %p118 = scmp.eq.s32.totalorder %s26, 1
    %p119 = por %p117, %p118
    %p120 = scmp.ne.s32.totalorder %s111, %s112
    %p121 = scmp.eq.s32.totalorder %s26, 0
    %p122 = por %p120, %p121
    %p123 = scmp.ne.s32.totalorder %s111, %s112
    %p124 = scmp.eq.s32.totalorder %s27, 1
    %p125 = por %p123, %p124
    %p127 = scmp.ne.s32.totalorder %s112, %s126
    %p128 = scmp.eq.s32.totalorder %s27, 0
    %p129 = por %p127, %p128
    %s131 = sadd.s32 %s130, 1
    %p134 = scmp.eq.s32.totalorder %s21, 1
    %p135 = scmp.ne.s32.totalorder %s130, %s132
    %p136 = scmp.eq.s32.totalorder %s21, 0
    %p137 = por %p135, %p136
    %p138 = scmp.ne.s32.totalorder %s130, %s132
    %p139 = scmp.eq.s32.totalorder %s26, 1
    %p140 = por %p138, %p139
    %p141 = scmp.ne.s32.totalorder %s132, %s133
    %p142 = scmp.eq.s32.totalorder %s26, 0
    %p143 = por %p141, %p142
    %p144 = scmp.ne.s32.totalorder %s132, %s133
    %p145 = scmp.eq.s32.totalorder %s27, 1
    %p146 = por %p144, %p145
    %p148 = scmp.ne.s32.totalorder %s133, %s147
    %p149 = scmp.eq.s32.totalorder %s27, 0
    %p150 = por %p148, %p149
    %s152 = sadd.s32 %s151, 1
    %p155 = scmp.eq.s32.totalorder %s21, 1
    %p156 = scmp.ne.s32.totalorder %s151, %s153
    %p157 = scmp.eq.s32.totalorder %s21, 0
    %p158 = por %p156, %p157
    %p159 = scmp.ne.s32.totalorder %s151, %s153
    %p160 = scmp.eq.s32.totalorder %s26, 1
    %p161 = por %p159, %p160
    %p162 = scmp.ne.s32.totalorder %s153, %s154
    %p163 = scmp.eq.s32.totalorder %s26, 0
    %p164 = por %p162, %p163
    %p165 = scmp.ne.s32.totalorder %s153, %s154
    %p166 = scmp.eq.s32.totalorder %s27, 1
    %p167 = por %p165, %p166
    %p169 = scmp.ne.s32.totalorder %s154, %s168
    %p170 = scmp.eq.s32.totalorder %s27, 0
    %p171 = por %p169, %p170
    %s173 = sadd.s32 %s172, 1
    %p176 = scmp.eq.s32.totalorder %s21, 1
    %p177 = scmp.ne.s32.totalorder %s172, %s174
    %p178 = scmp.eq.s32.totalorder %s21, 0
    %p179 = por %p177, %p178
    %p180 = scmp.ne.s32.totalorder %s172, %s174
    %p181 = scmp.eq.s32.totalorder %s26, 1
    %p182 = por %p180, %p181
    %p183 = scmp.ne.s32.totalorder %s174, %s175
    %p184 = scmp.eq.s32.totalorder %s26, 0
    %p185 = por %p183, %p184
    %p186 = scmp.ne.s32.totalorder %s174, %s175
    %p187 = scmp.eq.s32.totalorder %s27, 1
    %p188 = por %p186, %p187
    %p190 = scmp.ne.s32.totalorder %s175, %s189
    %p191 = scmp.eq.s32.totalorder %s27, 0
    %p192 = por %p190, %p191
    %s194 = sadd.s32 %s193, 1
    %p197 = scmp.eq.s32.totalorder %s21, 1
    %p198 = scmp.ne.s32.totalorder %s193, %s195
    %p199 = scmp.eq.s32.totalorder %s21, 0
    %p200 = por %p198, %p199
    %p201 = scmp.ne.s32.totalorder %s193, %s195
    %p202 = scmp.eq.s32.totalorder %s26, 1
    %p203 = por %p201, %p202
    %p204 = scmp.ne.s32.totalorder %s195, %s196
    %p205 = scmp.eq.s32.totalorder %s26, 0
    %p206 = por %p204, %p205
    %p207 = scmp.ne.s32.totalorder %s195, %s196
    %p208 = scmp.eq.s32.totalorder %s27, 1
    %p209 = por %p207, %p208
    %p211 = scmp.ne.s32.totalorder %s196, %s210
    %p212 = scmp.eq.s32.totalorder %s27, 0
    %p213 = por %p211, %p212
    %s215 = sadd.s32 %s214, 1
    %p218 = scmp.eq.s32.totalorder %s21, 1
    %p219 = scmp.ne.s32.totalorder %s214, %s216
    %p220 = scmp.eq.s32.totalorder %s21, 0
    %p221 = por %p219, %p220
    %p222 = scmp.ne.s32.totalorder %s214, %s216
    %p223 = scmp.eq.s32.totalorder %s26, 1
    %p224 = por %p222, %p223
    %p225 = scmp.ne.s32.totalorder %s216, %s217
    %p226 = scmp.eq.s32.totalorder %s26, 0
    %p227 = por %p225, %p226
    %p228 = scmp.ne.s32.totalorder %s216, %s217
    %p229 = scmp.eq.s32.totalorder %s27, 1
    %p230 = por %p228, %p229
    %p232 = scmp.ne.s32.totalorder %s217, %s231
    %p233 = scmp.eq.s32.totalorder %s27, 0
    %p234 = por %p232, %p233
    %s236 = sadd.s32 %s235, 1
    %p239 = scmp.eq.s32.totalorder %s21, 1
    %p240 = scmp.ne.s32.totalorder %s235, %s237
    %p241 = scmp.eq.s32.totalorder %s21, 0
    %p242 = por %p240, %p241
    %p243 = scmp.ne.s32.totalorder %s235, %s237
    %p244 = scmp.eq.s32.totalorder %s26, 1
    %p245 = por %p243, %p244
    %p246 = scmp.ne.s32.totalorder %s237, %s238
    %p247 = scmp.eq.s32.totalorder %s26, 0
    %p248 = por %p246, %p247
    %p249 = scmp.ne.s32.totalorder %s237, %s238
    %p250 = scmp.eq.s32.totalorder %s27, 1
    %p251 = por %p249, %p250
    %p253 = scmp.ne.s32.totalorder %s238, %s252
    %p254 = scmp.eq.s32.totalorder %s27, 0
    %p255 = por %p253, %p254
    %s257 = sadd.s32 %s256, 1
    %p260 = scmp.eq.s32.totalorder %s21, 1
    %p261 = scmp.ne.s32.totalorder %s256, %s258
    %p262 = scmp.eq.s32.totalorder %s21, 0
    %p263 = por %p261, %p262
    %p264 = scmp.ne.s32.totalorder %s256, %s258
    %p265 = scmp.eq.s32.totalorder %s26, 1
    %p266 = por %p264, %p265
    %p267 = scmp.ne.s32.totalorder %s258, %s259
    %p268 = scmp.eq.s32.totalorder %s26, 0
    %p269 = por %p267, %p268
    %p270 = scmp.ne.s32.totalorder %s258, %s259
    %p271 = scmp.eq.s32.totalorder %s27, 1
    %p272 = por %p270, %p271
    %p274 = scmp.ne.s32.totalorder %s259, %s273
    %p275 = scmp.eq.s32.totalorder %s27, 0
    %p276 = por %p274, %p275
    %s278 = sadd.s32 %s277, 1
    %p281 = scmp.eq.s32.totalorder %s21, 1
    %p282 = scmp.ne.s32.totalorder %s277, %s279
    %p283 = scmp.eq.s32.totalorder %s21, 0
    %p284 = por %p282, %p283
    %p285 = scmp.ne.s32.totalorder %s277, %s279
    %p286 = scmp.eq.s32.totalorder %s26, 1
    %p287 = por %p285, %p286
    %p288 = scmp.ne.s32.totalorder %s279, %s280
    %p289 = scmp.eq.s32.totalorder %s26, 0
    %p290 = por %p288, %p289
    %p291 = scmp.ne.s32.totalorder %s279, %s280
    %p292 = scmp.eq.s32.totalorder %s27, 1
    %p293 = por %p291, %p292
    %p295 = scmp.ne.s32.totalorder %s280, %s294
    %p296 = scmp.eq.s32.totalorder %s27, 0
    %p297 = por %p295, %p296
    %s299 = sadd.s32 %s298, 1
    %p302 = scmp.eq.s32.totalorder %s21, 1
    %p303 = scmp.ne.s32.totalorder %s298, %s300
    %p304 = scmp.eq.s32.totalorder %s21, 0
    %p305 = por %p303, %p304
    %p306 = scmp.ne.s32.totalorder %s298, %s300
    %p307 = scmp.eq.s32.totalorder %s26, 1
    %p308 = por %p306, %p307
    %p309 = scmp.ne.s32.totalorder %s300, %s301
    %p310 = scmp.eq.s32.totalorder %s26, 0
    %p311 = por %p309, %p310
    %p312 = scmp.ne.s32.totalorder %s300, %s301
    %p313 = scmp.eq.s32.totalorder %s27, 1
    %p314 = por %p312, %p313
    %p316 = scmp.ne.s32.totalorder %s301, %s315
    %p317 = scmp.eq.s32.totalorder %s27, 0
    %p318 = por %p316, %p317
    %s320 = sadd.s32 %s319, 1
    %p323 = scmp.eq.s32.totalorder %s21, 1
    %p324 = scmp.ne.s32.totalorder %s319, %s321
    %p325 = scmp.eq.s32.totalorder %s21, 0
    %p326 = por %p324, %p325
    %p327 = scmp.ne.s32.totalorder %s319, %s321
    %p328 = scmp.eq.s32.totalorder %s26, 1
    %p329 = por %p327, %p328
    %p330 = scmp.ne.s32.totalorder %s321, %s322
    %p331 = scmp.eq.s32.totalorder %s26, 0
    %p332 = por %p330, %p331
    %p333 = scmp.ne.s32.totalorder %s321, %s322
    %p334 = scmp.eq.s32.totalorder %s27, 1
    %p335 = por %p333, %p334
    %p337 = scmp.ne.s32.totalorder %s322, %s336
    %p338 = scmp.eq.s32.totalorder %s27, 0
    %p339 = por %p337, %p338
    %s341 = sadd.s32 %s340, 1
    %p344 = scmp.eq.s32.totalorder %s21, 1
    %p345 = scmp.ne.s32.totalorder %s340, %s342
    %p346 = scmp.eq.s32.totalorder %s21, 0
    %p347 = por %p345, %p346
    %p348 = scmp.ne.s32.totalorder %s340, %s342
    %p349 = scmp.eq.s32.totalorder %s26, 1
    %p350 = por %p348, %p349
    %p351 = scmp.ne.s32.totalorder %s342, %s343
    %p352 = scmp.eq.s32.totalorder %s26, 0
    %p353 = por %p351, %p352
    %p354 = scmp.ne.s32.totalorder %s342, %s343
    %p355 = scmp.eq.s32.totalorder %s27, 1
    %p356 = por %p354, %p355
    %p358 = scmp.ne.s32.totalorder %s343, %s357
    %p359 = scmp.eq.s32.totalorder %s27, 0
    %p360 = por %p358, %p359
    %s361 = ssub.s32 %s28, %s40
    %s362 = ssub.s32 %s29, %s36
    %s363 = sor.u32 %s361, %s362
    %p364 = scmp.eq.s32.totalorder %s363, 0
    %s366 = sadd.s32 %s365, 1
    %s367 = scalar_select %p364, %s365, %s366
    %p370 = pneg %p364
    %p371 = scmp.eq.s32.totalorder %s21, 1
    %p372 = por %p370, %p371
    %p373 = scmp.ne.s32.totalorder %s365, %s368
    %p374 = scmp.eq.s32.totalorder %s21, 0
    %p375 = por %p373, %p374
    %p376 = scmp.ne.s32.totalorder %s365, %s368
    %p377 = scmp.eq.s32.totalorder %s26, 1
    %p378 = por %p376, %p377
    %p379 = scmp.ne.s32.totalorder %s368, %s369
    %p380 = scmp.eq.s32.totalorder %s26, 0
    %p381 = por %p379, %p380
    %p382 = scmp.ne.s32.totalorder %s368, %s369
    %p383 = scmp.eq.s32.totalorder %s27, 1
    %p384 = por %p382, %p383
    %p386 = scmp.ne.s32.totalorder %s369, %s385
    %p387 = scmp.eq.s32.totalorder %s27, 0
    %p388 = por %p386, %p387
    %p389 = scmp.le.s32.totalorder 1, %s21
    %p390 = scmp.lt.s32.totalorder %s21, 3
    %p391 = pnand %p389, %p390
    %p392 = pneg %p391
    // Predicated region
    $region9: #{multi_head_atten_forward.5} parent=5 // pred_check
      _
    $region10: #{multi_head_atten_forward.5} parent=5 // pred_check_branch
      %394 = sbr.rel (%p391) target = $region12
    $region11: #{multi_head_atten_forward.5} parent=5 // pred_region
      %s395 = ssub.s32 %s21, 1
      // Predicated region
      $region13: #{multi_head_atten_forward.5} parent=11 // pred_check
        %p396 = pneg %p80
      $region14: #{multi_head_atten_forward.5} parent=11 // pred_check_branch
        %398 = sbr.rel (%p396) target = $region16
      $region15: #{multi_head_atten_forward.5} parent=11 // pred_region
        _
      $region16: #{multi_head_atten_forward.5} parent=11 // pred_fallthru
        _
      // Predicated region
      $region17: #{multi_head_atten_forward.5} parent=11 // pred_check
        %p399 = pneg %p101
      $region18: #{multi_head_atten_forward.5} parent=11 // pred_check_branch
        %401 = sbr.rel (%p399) target = $region20
      $region19: #{multi_head_atten_forward.5} parent=11 // pred_region
        _
      $region20: #{multi_head_atten_forward.5} parent=11 // pred_fallthru
        _
      // Predicated region
      $region21: #{multi_head_atten_forward.5} parent=11 // pred_check
        %p402 = pneg %p122
      $region22: #{multi_head_atten_forward.5} parent=11 // pred_check_branch
        %404 = sbr.rel (%p402) target = $region24
      $region23: #{multi_head_atten_forward.5} parent=11 // pred_region
        _
      $region24: #{multi_head_atten_forward.5} parent=11 // pred_fallthru
        _
      // Predicated region
      $region25: #{multi_head_atten_forward.5} parent=11 // pred_check
        %p405 = pneg %p143
      $region26: #{multi_head_atten_forward.5} parent=11 // pred_check_branch
        %407 = sbr.rel (%p405) target = $region28
      $region27: #{multi_head_atten_forward.5} parent=11 // pred_region
        _
      $region28: #{multi_head_atten_forward.5} parent=11 // pred_fallthru
        _
      // Predicated region
      $region29: #{multi_head_atten_forward.5} parent=11 // pred_check
        %p408 = pneg %p164
      $region30: #{multi_head_atten_forward.5} parent=11 // pred_check_branch
        %410 = sbr.rel (%p408) target = $region32
      $region31: #{multi_head_atten_forward.5} parent=11 // pred_region
        _
      $region32: #{multi_head_atten_forward.5} parent=11 // pred_fallthru
        _
      // Predicated region
      $region33: #{multi_head_atten_forward.5} parent=11 // pred_check
        %p411 = pneg %p185
      $region34: #{multi_head_atten_forward.5} parent=11 // pred_check_branch
        %413 = sbr.rel (%p411) target = $region36
      $region35: #{multi_head_atten_forward.5} parent=11 // pred_region
        _
      $region36: #{multi_head_atten_forward.5} parent=11 // pred_fallthru
        _
      // Predicated region
      $region37: #{multi_head_atten_forward.5} parent=11 // pred_check
        %p414 = pneg %p206
      $region38: #{multi_head_atten_forward.5} parent=11 // pred_check_branch
        %416 = sbr.rel (%p414) target = $region40
      $region39: #{multi_head_atten_forward.5} parent=11 // pred_region
        _
      $region40: #{multi_head_atten_forward.5} parent=11 // pred_fallthru
        _
      // Predicated region
      $region41: #{multi_head_atten_forward.5} parent=11 // pred_check
        %p417 = pneg %p227
      $region42: #{multi_head_atten_forward.5} parent=11 // pred_check_branch
        %419 = sbr.rel (%p417) target = $region44
      $region43: #{multi_head_atten_forward.5} parent=11 // pred_region
        _
      $region44: #{multi_head_atten_forward.5} parent=11 // pred_fallthru
        _
      // Predicated region
      $region45: #{multi_head_atten_forward.5} parent=11 // pred_check
        %p420 = pneg %p248
      $region46: #{multi_head_atten_forward.5} parent=11 // pred_check_branch
        %422 = sbr.rel (%p420) target = $region48
      $region47: #{multi_head_atten_forward.5} parent=11 // pred_region
        _
      $region48: #{multi_head_atten_forward.5} parent=11 // pred_fallthru
        _
      // Predicated region
      $region49: #{multi_head_atten_forward.5} parent=11 // pred_check
        %p423 = pneg %p269
      $region50: #{multi_head_atten_forward.5} parent=11 // pred_check_branch
        %425 = sbr.rel (%p423) target = $region52
      $region51: #{multi_head_atten_forward.5} parent=11 // pred_region
        _
      $region52: #{multi_head_atten_forward.5} parent=11 // pred_fallthru
        _
      // Predicated region
      $region53: #{multi_head_atten_forward.5} parent=11 // pred_check
        %p426 = pneg %p290
      $region54: #{multi_head_atten_forward.5} parent=11 // pred_check_branch
        %428 = sbr.rel (%p426) target = $region56
      $region55: #{multi_head_atten_forward.5} parent=11 // pred_region
        _
      $region56: #{multi_head_atten_forward.5} parent=11 // pred_fallthru
        _
      // Predicated region
      $region57: #{multi_head_atten_forward.5} parent=11 // pred_check
        %p429 = pneg %p311
      $region58: #{multi_head_atten_forward.5} parent=11 // pred_check_branch
        %431 = sbr.rel (%p429) target = $region60
      $region59: #{multi_head_atten_forward.5} parent=11 // pred_region
        _
      $region60: #{multi_head_atten_forward.5} parent=11 // pred_fallthru
        _
      // Predicated region
      $region61: #{multi_head_atten_forward.5} parent=11 // pred_check
        %p432 = pneg %p332
      $region62: #{multi_head_atten_forward.5} parent=11 // pred_check_branch
        %434 = sbr.rel (%p432) target = $region64
      $region63: #{multi_head_atten_forward.5} parent=11 // pred_region
        _
      $region64: #{multi_head_atten_forward.5} parent=11 // pred_fallthru
        _
      // Predicated region
      $region65: #{multi_head_atten_forward.5} parent=11 // pred_check
        %p435 = pneg %p353
      $region66: #{multi_head_atten_forward.5} parent=11 // pred_check_branch
        %437 = sbr.rel (%p435) target = $region68
      $region67: #{multi_head_atten_forward.5} parent=11 // pred_region
        _
      $region68: #{multi_head_atten_forward.5} parent=11 // pred_fallthru
        _
    $region12: #{multi_head_atten_forward.5} parent=5 // pred_fallthru
      _
    %p438 = scmp.lt.s32.totalorder %s21, 2
    // Predicated region
    $region69: #{multi_head_atten_forward.5} parent=5 // pred_check
      %p439 = pneg %p438
    $region70: #{multi_head_atten_forward.5} parent=5 // pred_check_branch
      %441 = sbr.rel (%p439) target = $region72
    $region71: #{multi_head_atten_forward.5} parent=5 // pred_region
      // Predicated region
      $region73: #{multi_head_atten_forward.5} parent=71 // pred_check
        %p442 = pneg %p53
      $region74: #{multi_head_atten_forward.5} parent=71 // pred_check_branch
        %444 = sbr.rel (%p442) target = $region76
      $region75: #{multi_head_atten_forward.5} parent=71 // pred_region
        %p445 = scmp.lt.s32.totalorder %s28, 1
        %s446 = scalar_select %p445, %s28, 1
        %s447 = smul.addr %s446, 8
        %s448 = scalar_lea.vmem %s0, %s447
      $region76: #{multi_head_atten_forward.5} parent=71 // pred_fallthru
        _
    $region72: #{multi_head_atten_forward.5} parent=5 // pred_fallthru
      _
    %p449 = scmp.le.s32.totalorder 1, %s21
    %p450 = scmp.lt.s32.totalorder %s21, 3
    %p451 = pnand %p449, %p450
    %p452 = pneg %p451
    // Predicated region
    $region77: #{multi_head_atten_forward.5} parent=5 // pred_check
      _
    $region78: #{multi_head_atten_forward.5} parent=5 // pred_check_branch
      %454 = sbr.rel (%p451) target = $region80
    $region79: #{multi_head_atten_forward.5} parent=5 // pred_region
      %s455 = ssub.s32 %s21, 1
      %p456 = scmp.lt.s32.totalorder %s30, 1
      %s457 = scalar_select %p456, %s30, 1
      %s458 = smul.addr %s457, 8
      %s459 = scalar_lea.vmem %s0, %s458
      %p460 = pneg %p59
      %p461 = pneg %p56
      %p462 = pneg %p80
      %p463 = pneg %p77
      %p464 = pneg %p101
      %p465 = pneg %p98
      %p466 = pneg %p122
      %p467 = pneg %p119
      %p468 = pneg %p143
      %p469 = pneg %p140
      %p470 = pneg %p164
      %p471 = pneg %p161
      %p472 = pneg %p185
      %p473 = pneg %p182
      %p474 = pneg %p206
      %p475 = pneg %p203
      %p476 = pneg %p227
      %p477 = pneg %p224
      %p478 = pneg %p248
      %p479 = pneg %p245
      %p480 = pneg %p269
      %p481 = pneg %p266
      %p482 = pneg %p290
      %p483 = pneg %p287
      %p484 = pneg %p311
      %p485 = pneg %p308
      %p486 = pneg %p332
      %p487 = pneg %p329
      %p488 = pneg %p353
      %p489 = pneg %p350
      %p490 = pneg %p381
      %p491 = pneg %p378
      %p492 = scmp.lt.s32.totalorder %s30, 1
      %s493 = scalar_select %p492, %s30, 1
      %p494 = scmp.lt.s32.totalorder %s31, 0
      %s495 = scalar_select %p494, %s31, 0
      %s496 = sadd.s32 %s495, %s493
      %s497 = smul.addr %s496, 8
      %s498 = scalar_lea.vmem %s15, %s497
      %p499 = scmp.lt.s32.totalorder %s30, 1
      %s500 = scalar_select %p499, %s30, 1
      %s501 = smul.addr %s500, 8
      %s502 = scalar_lea.vmem %s0, %s501
      %p503 = scmp.lt.s32.totalorder %s30, 1
      %s504 = scalar_select %p503, %s30, 1
      %p505 = scmp.lt.s32.totalorder %s31, 0
      %s506 = scalar_select %p505, %s31, 0
      %s507 = sadd.s32 %s506, %s504
      %s508 = smul.addr %s507, 8
      %s509 = scalar_lea.vmem %s15, %s508
      %s511 = smul.u32 %s31, 8
      %v512 = vld [vmem:[%s502] sm:$0xff]
      %s513 = scalar_lea.vmem %s502, %s511
      %v514 = vld [vmem:[%s513] sm:$0xff]
      %v515 = vpack.c.bf16 %v512, %v512
      %v516 = vpack.c.bf16 %v514, %v514
      %v517 = vld [vmem:[%s1] sm:$0xf]
      %v518 = vld [vmem:[%s1 + $0x4] sm:$0xf]
      %v519 = vld [vmem:[%s1 + $0x8] sm:$0xf]
      %v520 = vld [vmem:[%s1 + $0xc] sm:$0xf]
      %v521 = vld [vmem:[%s1 + $0x10] sm:$0xf]
      %v522 = vld [vmem:[%s1 + $0x14] sm:$0xf]
      %v523 = vld [vmem:[%s1 + $0x18] sm:$0xf]
      %v524 = vld [vmem:[%s1 + $0x1c] sm:$0xf]
      %v533 = vunpack.c.l.b16 %v517
      %v534 = vunpack.c.l.b16 %v518
      %v535 = vunpack.c.l.b16 %v519
      %v536 = vunpack.c.l.b16 %v520
      %v537 = vunpack.c.l.b16 %v521
      %v538 = vunpack.c.l.b16 %v522
      %v539 = vunpack.c.l.b16 %v523
      %v540 = vunpack.c.l.b16 %v524
      %v541 = vpack.c.b16 %v534, %v533
      %v542 = vpack.c.b16 %v536, %v535
      %v543 = vpack.c.b16 %v538, %v537
      %v544 = vpack.c.b16 %v540, %v539
      %vm549 = vcmask 523264
      %v551 = vsel %vm549, %v516, 0
      %553 = vmatprep.subr.bf16.mxu0 0
      %554 = vmatpush1.bf16.msra.mxu0 0
      %555 = vmatprep.subr.bf16.mxu0 0
      %556 = vmatpush1.bf16.msra.mxu0 0
      %557 = vmatprep.subr.bf16.mxu0 0
      %558 = vmatpush1.bf16.msra.mxu0 0
      %559 = vmatprep.subr.bf16.mxu0 0
      %560 = vmatpush1.bf16.msra.mxu0 0
      %561 = vmatprep.subr.bf16.mxu0 0
      %562 = vmatpush1.bf16.msra.mxu0 %v544
      %563 = vmatprep.subr.bf16.mxu0 0
      %564 = vmatpush1.bf16.msra.mxu0 %v543
      %565 = vmatprep.subr.bf16.mxu0 0
      %566 = vmatpush1.bf16.msra.mxu0 %v542
      %567 = vmatprep.subr.bf16.mxu0 0
      %568 = vmatpush1.bf16.msra.mxu0 %v541
      %569 = vmatprep.subr.bf16.mxu0 0
      %570 = vmatpush2.bf16.msra.mxu0 0
      %571 = vmatprep.subr.bf16.mxu0 0
      %572 = vmatpush2.bf16.msra.mxu0 0
      %573 = vmatprep.subr.bf16.mxu0 0
      %574 = vmatpush2.bf16.msra.mxu0 0
      %575 = vmatprep.subr.bf16.mxu0 0
      %576 = vmatpush2.bf16.msra.mxu0 0
      %577 = vmatprep.subr.bf16.mxu0 0
      %578 = vmatpush2.bf16.msra.mxu0 0
      %579 = vmatprep.subr.bf16.mxu0 0
      %580 = vmatpush2.bf16.msra.mxu0 0
      %581 = vmatprep.subr.bf16.mxu0 0
      %582 = vmatpush2.bf16.msra.mxu0 0
      %583 = vmatprep.subr.bf16.mxu0 0
      %584 = vmatpush2.bf16.msra.mxu0 0
      %585 = vmatprep.mubr.bf16.mxu0 0
      %586 = vmatmul.mubr.bf16.gmra.mxu0 %v551
      %v587 = vpop.f32.mrf.mxu0
      %v588 = vadd.f32 0.0, %v587
      %v589 = vpop.f32.mrf.mxu0
      %v590 = vpop.f32.mrf.mxu0
      %v591 = vpop.f32.mrf.mxu0
      %592 = vdwg.mxu0
      %v593 = vld [vmem:[%s2] sm:$0xf]
      %v594 = vld [vmem:[%s2 + $0x4] sm:$0xf]
      %v595 = vld [vmem:[%s2 + $0x8] sm:$0xf]
      %v596 = vld [vmem:[%s2 + $0xc] sm:$0xf]
      %v597 = vld [vmem:[%s2 + $0x10] sm:$0xf]
      %v598 = vld [vmem:[%s2 + $0x14] sm:$0xf]
      %v599 = vld [vmem:[%s2 + $0x18] sm:$0xf]
      %v600 = vld [vmem:[%s2 + $0x1c] sm:$0xf]
      %v609 = vunpack.c.l.b16 %v593
      %v610 = vunpack.c.l.b16 %v594
      %v611 = vunpack.c.l.b16 %v595
      %v612 = vunpack.c.l.b16 %v596
      %v613 = vunpack.c.l.b16 %v597
      %v614 = vunpack.c.l.b16 %v598
      %v615 = vunpack.c.l.b16 %v599
      %v616 = vunpack.c.l.b16 %v600
      %v617 = vpack.c.b16 %v610, %v609
      %v618 = vpack.c.b16 %v612, %v611
      %v619 = vpack.c.b16 %v614, %v613
      %v620 = vpack.c.b16 %v616, %v615
      %v626 = vsel %vm549, %v515, 0
      %628 = vmatprep.subr.bf16.mxu0 0
      %629 = vmatpush1.bf16.msra.mxu0 0
      %630 = vmatprep.subr.bf16.mxu0 0
      %631 = vmatpush1.bf16.msra.mxu0 0
      %632 = vmatprep.subr.bf16.mxu0 0
      %633 = vmatpush1.bf16.msra.mxu0 0
      %634 = vmatprep.subr.bf16.mxu0 0
      %635 = vmatpush1.bf16.msra.mxu0 0
      %636 = vmatprep.subr.bf16.mxu0 0
      %637 = vmatpush1.bf16.msra.mxu0 %v620
      %638 = vmatprep.subr.bf16.mxu0 0
      %639 = vmatpush1.bf16.msra.mxu0 %v619
      %640 = vmatprep.subr.bf16.mxu0 0
      %641 = vmatpush1.bf16.msra.mxu0 %v618
      %642 = vmatprep.subr.bf16.mxu0 0
      %643 = vmatpush1.bf16.msra.mxu0 %v617
      %644 = vmatprep.subr.bf16.mxu0 0
      %645 = vmatpush2.bf16.msra.mxu0 0
      %646 = vmatprep.subr.bf16.mxu0 0
      %647 = vmatpush2.bf16.msra.mxu0 0
      %648 = vmatprep.subr.bf16.mxu0 0
      %649 = vmatpush2.bf16.msra.mxu0 0
      %650 = vmatprep.subr.bf16.mxu0 0
      %651 = vmatpush2.bf16.msra.mxu0 0
      %652 = vmatprep.subr.bf16.mxu0 0
      %653 = vmatpush2.bf16.msra.mxu0 0
      %654 = vmatprep.subr.bf16.mxu0 0
      %655 = vmatpush2.bf16.msra.mxu0 0
      %656 = vmatprep.subr.bf16.mxu0 0
      %657 = vmatpush2.bf16.msra.mxu0 0
      %658 = vmatprep.subr.bf16.mxu0 0
      %659 = vmatpush2.bf16.msra.mxu0 0
      %660 = vmatprep.mubr.bf16.mxu0 0
      %661 = vmatmul.mubr.bf16.gmra.mxu0 %v626
      %v662 = vpop.f32.mrf.mxu0
      %v663 = vadd.f32 0.0, %v662
      %v664 = vpop.f32.mrf.mxu0
      %v665 = vpop.f32.mrf.mxu0
      %v666 = vpop.f32.mrf.mxu0
      %667 = vdwg.mxu0
      %v668 = vld [vmem:[%s3] sm:$0xf]
      %v669 = vld [vmem:[%s3 + $0x4] sm:$0xf]
      %v670 = vld [vmem:[%s3 + $0x8] sm:$0xf]
      %v671 = vld [vmem:[%s3 + $0xc] sm:$0xf]
      %v672 = vld [vmem:[%s3 + $0x10] sm:$0xf]
      %v673 = vld [vmem:[%s3 + $0x14] sm:$0xf]
      %v674 = vld [vmem:[%s3 + $0x18] sm:$0xf]
      %v675 = vld [vmem:[%s3 + $0x1c] sm:$0xf]
      %v684 = vunpack.c.l.b16 %v668
      %v685 = vunpack.c.l.b16 %v669
      %v686 = vunpack.c.l.b16 %v670
      %v687 = vunpack.c.l.b16 %v671
      %v688 = vunpack.c.l.b16 %v672
      %v689 = vunpack.c.l.b16 %v673
      %v690 = vunpack.c.l.b16 %v674
      %v691 = vunpack.c.l.b16 %v675
      %v692 = vpack.c.b16 %v685, %v684
      %v693 = vpack.c.b16 %v687, %v686
      %v694 = vpack.c.b16 %v689, %v688
      %v695 = vpack.c.b16 %v691, %v690
      %700 = vmatprep.subr.bf16.mxu0 0
      %701 = vmatpush1.bf16.msra.mxu0 0
      %702 = vmatprep.subr.bf16.mxu0 0
      %703 = vmatpush1.bf16.msra.mxu0 0
      %704 = vmatprep.subr.bf16.mxu0 0
      %705 = vmatpush1.bf16.msra.mxu0 0
      %706 = vmatprep.subr.bf16.mxu0 0
      %707 = vmatpush1.bf16.msra.mxu0 0
      %708 = vmatprep.subr.bf16.mxu0 0
      %709 = vmatpush1.bf16.msra.mxu0 %v695
      %710 = vmatprep.subr.bf16.mxu0 0
      %711 = vmatpush1.bf16.msra.mxu0 %v694
      %712 = vmatprep.subr.bf16.mxu0 0
      %713 = vmatpush1.bf16.msra.mxu0 %v693
      %714 = vmatprep.subr.bf16.mxu0 0
      %715 = vmatpush1.bf16.msra.mxu0 %v692
      %716 = vmatprep.subr.bf16.mxu0 0
      %717 = vmatpush2.bf16.msra.mxu0 0
      %718 = vmatprep.subr.bf16.mxu0 0
      %719 = vmatpush2.bf16.msra.mxu0 0
      %720 = vmatprep.subr.bf16.mxu0 0
      %721 = vmatpush2.bf16.msra.mxu0 0
      %722 = vmatprep.subr.bf16.mxu0 0
      %723 = vmatpush2.bf16.msra.mxu0 0
      %724 = vmatprep.subr.bf16.mxu0 0
      %725 = vmatpush2.bf16.msra.mxu0 0
      %726 = vmatprep.subr.bf16.mxu0 0
      %727 = vmatpush2.bf16.msra.mxu0 0
      %728 = vmatprep.subr.bf16.mxu0 0
      %729 = vmatpush2.bf16.msra.mxu0 0
      %730 = vmatprep.subr.bf16.mxu0 0
      %731 = vmatpush2.bf16.msra.mxu0 0
      %732 = vmatprep.mubr.bf16.mxu0 0
      %733 = vmatmul.mubr.bf16.gmra.mxu0 %v626
      %v734 = vpop.f32.mrf.mxu0
      %v735 = vadd.f32 0.0, %v734
      %v736 = vpop.f32.mrf.mxu0
      %v737 = vpop.f32.mrf.mxu0
      %v738 = vpop.f32.mrf.mxu0
      %739 = vdwg.mxu0
      %vm740 = vcmask 64512
      %741 = vst.msk [vmem:[#allocation2] sm:$0xff] %vm740, %v588
      %742 = vst.msk [vmem:[#allocation3] sm:$0xff] %vm740, %v663
      %743 = vst.msk [vmem:[#allocation4] sm:$0xff] %vm740, %v735
      %745 = vrot.lane.b32.xlu0 %v588, 120
      %v746 = vpop.permute.xlu0 %745
      %s748 = scalar_lea.vmem [#allocation2], 8
      %749 = vst.msk [vmem:[%s748] sm:$0xff] %vm740, %v746
      %751 = vrot.lane.b32.xlu0 %v663, 120
      %v752 = vpop.permute.xlu0 %751
      %s754 = scalar_lea.vmem [#allocation3], 8
      %755 = vst.msk [vmem:[%s754] sm:$0xff] %vm740, %v752
      %757 = vrot.lane.b32.xlu0 %v735, 120
      %v758 = vpop.permute.xlu0 %757
      %s760 = scalar_lea.vmem [#allocation4], 8
      %761 = vst.msk [vmem:[%s760] sm:$0xff] %vm740, %v758
      %762 = vrot.lane.b32.xlu0 %v588, 112
      %v763 = vpop.permute.xlu0 %762
      %s765 = scalar_lea.vmem [#allocation2], 16
      %766 = vst.msk [vmem:[%s765] sm:$0xff] %vm740, %v763
      %767 = vrot.lane.b32.xlu0 %v663, 112
      %v768 = vpop.permute.xlu0 %767
      %s770 = scalar_lea.vmem [#allocation3], 16
      %771 = vst.msk [vmem:[%s770] sm:$0xff] %vm740, %v768
      %772 = vrot.lane.b32.xlu0 %v735, 112
      %v773 = vpop.permute.xlu0 %772
      %s775 = scalar_lea.vmem [#allocation4], 16
      %776 = vst.msk [vmem:[%s775] sm:$0xff] %vm740, %v773
      %777 = vrot.lane.b32.xlu0 %v588, 104
      %v778 = vpop.permute.xlu0 %777
      %s780 = scalar_lea.vmem [#allocation2], 24
      %781 = vst.msk [vmem:[%s780] sm:$0xff] %vm740, %v778
      %782 = vrot.lane.b32.xlu0 %v663, 104
      %v783 = vpop.permute.xlu0 %782
      %s785 = scalar_lea.vmem [#allocation3], 24
      %786 = vst.msk [vmem:[%s785] sm:$0xff] %vm740, %v783
      %787 = vrot.lane.b32.xlu0 %v735, 104
      %v788 = vpop.permute.xlu0 %787
      %s790 = scalar_lea.vmem [#allocation4], 24
      %791 = vst.msk [vmem:[%s790] sm:$0xff] %vm740, %v788
      %792 = vrot.lane.b32.xlu0 %v588, 96
      %v793 = vpop.permute.xlu0 %792
      %s795 = scalar_lea.vmem [#allocation2], 32
      %796 = vst.msk [vmem:[%s795] sm:$0xff] %vm740, %v793
      %797 = vrot.lane.b32.xlu0 %v663, 96
      %v798 = vpop.permute.xlu0 %797
      %s800 = scalar_lea.vmem [#allocation3], 32
      %801 = vst.msk [vmem:[%s800] sm:$0xff] %vm740, %v798
      %802 = vrot.lane.b32.xlu0 %v735, 96
      %v803 = vpop.permute.xlu0 %802
      %s805 = scalar_lea.vmem [#allocation4], 32
      %806 = vst.msk [vmem:[%s805] sm:$0xff] %vm740, %v803
      %807 = vrot.lane.b32.xlu0 %v588, 88
      %v808 = vpop.permute.xlu0 %807
      %s810 = scalar_lea.vmem [#allocation2], 40
      %811 = vst.msk [vmem:[%s810] sm:$0xff] %vm740, %v808
      %812 = vrot.lane.b32.xlu0 %v663, 88
      %v813 = vpop.permute.xlu0 %812
      %s815 = scalar_lea.vmem [#allocation3], 40
      %816 = vst.msk [vmem:[%s815] sm:$0xff] %vm740, %v813
      %817 = vrot.lane.b32.xlu0 %v735, 88
      %v818 = vpop.permute.xlu0 %817
      %s820 = scalar_lea.vmem [#allocation4], 40
      %821 = vst.msk [vmem:[%s820] sm:$0xff] %vm740, %v818
      %822 = vrot.lane.b32.xlu0 %v588, 80
      %v823 = vpop.permute.xlu0 %822
      %s825 = scalar_lea.vmem [#allocation2], 48
      %826 = vst.msk [vmem:[%s825] sm:$0xff] %vm740, %v823
      %827 = vrot.lane.b32.xlu0 %v663, 80
      %v828 = vpop.permute.xlu0 %827
      %s830 = scalar_lea.vmem [#allocation3], 48
      %831 = vst.msk [vmem:[%s830] sm:$0xff] %vm740, %v828
      %832 = vrot.lane.b32.xlu0 %v735, 80
      %v833 = vpop.permute.xlu0 %832
      %s835 = scalar_lea.vmem [#allocation4], 48
      %836 = vst.msk [vmem:[%s835] sm:$0xff] %vm740, %v833
      %837 = vrot.lane.b32.xlu0 %v588, 72
      %v838 = vpop.permute.xlu0 %837
      %s840 = scalar_lea.vmem [#allocation2], 56
      %841 = vst.msk [vmem:[%s840] sm:$0xff] %vm740, %v838
      %842 = vrot.lane.b32.xlu0 %v663, 72
      %v843 = vpop.permute.xlu0 %842
      %s845 = scalar_lea.vmem [#allocation3], 56
      %846 = vst.msk [vmem:[%s845] sm:$0xff] %vm740, %v843
      %847 = vrot.lane.b32.xlu0 %v735, 72
      %v848 = vpop.permute.xlu0 %847
      %s850 = scalar_lea.vmem [#allocation4], 56
      %851 = vst.msk [vmem:[%s850] sm:$0xff] %vm740, %v848
      %v852 = vld [vmem:[#allocation2] sm:$0xff]
      %v853 = vld [vmem:[#allocation2 + $0x8] sm:$0xff]
      %v854 = vld [vmem:[#allocation2 + $0x10] sm:$0xff]
      %v855 = vld [vmem:[#allocation2 + $0x18] sm:$0xff]
      %v856 = vld [vmem:[#allocation2 + $0x20] sm:$0xff]
      %v857 = vld [vmem:[#allocation2 + $0x28] sm:$0xff]
      %v858 = vld [vmem:[#allocation2 + $0x30] sm:$0xff]
      %v859 = vld [vmem:[#allocation2 + $0x38] sm:$0xff]
      %v860 = vpack.c.bf16 %v852, %v852
      %v861 = vpack.c.bf16 %v853, %v853
      %v862 = vpack.c.bf16 %v854, %v854
      %v863 = vpack.c.bf16 %v855, %v855
      %v864 = vpack.c.bf16 %v856, %v856
      %v865 = vpack.c.bf16 %v857, %v857
      %v866 = vpack.c.bf16 %v858, %v858
      %v867 = vpack.c.bf16 %v859, %v859
      %v868 = vld [vmem:[#allocation3] sm:$0xff]
      %v869 = vld [vmem:[#allocation3 + $0x8] sm:$0xff]
      %v870 = vld [vmem:[#allocation3 + $0x10] sm:$0xff]
      %v871 = vld [vmem:[#allocation3 + $0x18] sm:$0xff]
      %v872 = vld [vmem:[#allocation3 + $0x20] sm:$0xff]
      %v873 = vld [vmem:[#allocation3 + $0x28] sm:$0xff]
      %v874 = vld [vmem:[#allocation3 + $0x30] sm:$0xff]
      %v875 = vld [vmem:[#allocation3 + $0x38] sm:$0xff]
      %v876 = vpack.c.bf16 %v868, %v868
      %v877 = vpack.c.bf16 %v869, %v869
      %v878 = vpack.c.bf16 %v870, %v870
      %v879 = vpack.c.bf16 %v871, %v871
      %v880 = vpack.c.bf16 %v872, %v872
      %v881 = vpack.c.bf16 %v873, %v873
      %v882 = vpack.c.bf16 %v874, %v874
      %v883 = vpack.c.bf16 %v875, %v875
      %v884 = vld [vmem:[#allocation4] sm:$0xff]
      %v885 = vld [vmem:[#allocation4 + $0x8] sm:$0xff]
      %v886 = vld [vmem:[#allocation4 + $0x10] sm:$0xff]
      %v887 = vld [vmem:[#allocation4 + $0x18] sm:$0xff]
      %v888 = vld [vmem:[#allocation4 + $0x20] sm:$0xff]
      %v889 = vld [vmem:[#allocation4 + $0x28] sm:$0xff]
      %v890 = vld [vmem:[#allocation4 + $0x30] sm:$0xff]
      %v891 = vld [vmem:[#allocation4 + $0x38] sm:$0xff]
      %v892 = vpack.c.bf16 %v884, %v884
      %v893 = vpack.c.bf16 %v885, %v885
      %v894 = vpack.c.bf16 %v886, %v886
      %v895 = vpack.c.bf16 %v887, %v887
      %v896 = vpack.c.bf16 %v888, %v888
      %v897 = vpack.c.bf16 %v889, %v889
      %v898 = vpack.c.bf16 %v890, %v890
      %v899 = vpack.c.bf16 %v891, %v891
      %v901 = vsel %vm740, %v860, 0
      %v904 = vsel %vm740, %v876, 0
      %906 = vmatprep.subr.bf16.mxu0 0
      %907 = vmatpush1.bf16.xpose.msra.mxu0 0
      %908 = vmatprep.subr.bf16.mxu0 0
      %909 = vmatpush1.bf16.xpose.msra.mxu0 0
      %910 = vmatprep.subr.bf16.mxu0 0
      %911 = vmatpush1.bf16.xpose.msra.mxu0 0
      %912 = vmatprep.subr.bf16.mxu0 0
      %913 = vmatpush1.bf16.xpose.msra.mxu0 0
      %914 = vmatprep.subr.bf16.mxu0 0
      %915 = vmatpush1.bf16.xpose.msra.mxu0 0
      %916 = vmatprep.subr.bf16.mxu0 0
      %917 = vmatpush1.bf16.xpose.msra.mxu0 0
      %918 = vmatprep.subr.bf16.mxu0 0
      %919 = vmatpush1.bf16.xpose.msra.mxu0 0
      %920 = vmatprep.subr.bf16.mxu0 0
      %921 = vmatpush1.bf16.xpose.msra.mxu0 %v904
      %922 = vmatprep.subr.bf16.mxu0 0
      %923 = vmatpush2.bf16.xpose.msra.mxu0 0
      %924 = vmatprep.subr.bf16.mxu0 0
      %925 = vmatpush2.bf16.xpose.msra.mxu0 0
      %926 = vmatprep.subr.bf16.mxu0 0
      %927 = vmatpush2.bf16.xpose.msra.mxu0 0
      %928 = vmatprep.subr.bf16.mxu0 0
      %929 = vmatpush2.bf16.xpose.msra.mxu0 0
      %930 = vmatprep.subr.bf16.mxu0 0
      %931 = vmatpush2.bf16.xpose.msra.mxu0 0
      %932 = vmatprep.subr.bf16.mxu0 0
      %933 = vmatpush2.bf16.xpose.msra.mxu0 0
      %934 = vmatprep.subr.bf16.mxu0 0
      %935 = vmatpush2.bf16.xpose.msra.mxu0 0
      %936 = vmatprep.subr.bf16.mxu0 0
      %937 = vmatpush2.bf16.xpose.msra.mxu0 0
      %938 = vmatprep.mubr.bf16.mxu0 0
      %939 = vmatmul.mubr.bf16.gmra.mxu0 %v901
      %v940 = vpop.f32.mrf.mxu0
      %v941 = vadd.f32 0.0, %v940
      %v942 = vpop.f32.mrf.mxu0
      %v943 = vpop.f32.mrf.mxu0
      %v944 = vpop.f32.mrf.mxu0
      %945 = vdwg.mxu0
      %v947 = vsel %vm740, %v861, 0
      %v950 = vsel %vm740, %v877, 0
      %952 = vmatprep.subr.bf16.mxu0 0
      %953 = vmatpush1.bf16.xpose.msra.mxu0 0
      %954 = vmatprep.subr.bf16.mxu0 0
      %955 = vmatpush1.bf16.xpose.msra.mxu0 0
      %956 = vmatprep.subr.bf16.mxu0 0
      %957 = vmatpush1.bf16.xpose.msra.mxu0 0
      %958 = vmatprep.subr.bf16.mxu0 0
      %959 = vmatpush1.bf16.xpose.msra.mxu0 0
      %960 = vmatprep.subr.bf16.mxu0 0
      %961 = vmatpush1.bf16.xpose.msra.mxu0 0
      %962 = vmatprep.subr.bf16.mxu0 0
      %963 = vmatpush1.bf16.xpose.msra.mxu0 0
      %964 = vmatprep.subr.bf16.mxu0 0
      %965 = vmatpush1.bf16.xpose.msra.mxu0 0
      %966 = vmatprep.subr.bf16.mxu0 0
      %967 = vmatpush1.bf16.xpose.msra.mxu0 %v950
      %968 = vmatprep.subr.bf16.mxu0 0
      %969 = vmatpush2.bf16.xpose.msra.mxu0 0
      %970 = vmatprep.subr.bf16.mxu0 0
      %971 = vmatpush2.bf16.xpose.msra.mxu0 0
      %972 = vmatprep.subr.bf16.mxu0 0
      %973 = vmatpush2.bf16.xpose.msra.mxu0 0
      %974 = vmatprep.subr.bf16.mxu0 0
      %975 = vmatpush2.bf16.xpose.msra.mxu0 0
      %976 = vmatprep.subr.bf16.mxu0 0
      %977 = vmatpush2.bf16.xpose.msra.mxu0 0
      %978 = vmatprep.subr.bf16.mxu0 0
      %979 = vmatpush2.bf16.xpose.msra.mxu0 0
      %980 = vmatprep.subr.bf16.mxu0 0
      %981 = vmatpush2.bf16.xpose.msra.mxu0 0
      %982 = vmatprep.subr.bf16.mxu0 0
      %983 = vmatpush2.bf16.xpose.msra.mxu0 0
      %984 = vmatprep.mubr.bf16.mxu0 0
      %985 = vmatmul.mubr.bf16.gmra.mxu0 %v947
      %v986 = vpop.f32.mrf.mxu0
      %v987 = vadd.f32 0.0, %v986
      %v988 = vpop.f32.mrf.mxu0
      %v989 = vpop.f32.mrf.mxu0
      %v990 = vpop.f32.mrf.mxu0
      %991 = vdwg.mxu0
      %v993 = vsel %vm740, %v862, 0
      %v996 = vsel %vm740, %v878, 0
      %998 = vmatprep.subr.bf16.mxu0 0
      %999 = vmatpush1.bf16.xpose.msra.mxu0 0
      %1000 = vmatprep.subr.bf16.mxu0 0
      %1001 = vmatpush1.bf16.xpose.msra.mxu0 0
      %1002 = vmatprep.subr.bf16.mxu0 0
      %1003 = vmatpush1.bf16.xpose.msra.mxu0 0
      %1004 = vmatprep.subr.bf16.mxu0 0
      %1005 = vmatpush1.bf16.xpose.msra.mxu0 0
      %1006 = vmatprep.subr.bf16.mxu0 0
      %1007 = vmatpush1.bf16.xpose.msra.mxu0 0
      %1008 = vmatprep.subr.bf16.mxu0 0
      %1009 = vmatpush1.bf16.xpose.msra.mxu0 0
      %1010 = vmatprep.subr.bf16.mxu0 0
      %1011 = vmatpush1.bf16.xpose.msra.mxu0 0
      %1012 = vmatprep.subr.bf16.mxu0 0
      %1013 = vmatpush1.bf16.xpose.msra.mxu0 %v996
      %1014 = vmatprep.subr.bf16.mxu0 0
      %1015 = vmatpush2.bf16.xpose.msra.mxu0 0
      %1016 = vmatprep.subr.bf16.mxu0 0
      %1017 = vmatpush2.bf16.xpose.msra.mxu0 0
      %1018 = vmatprep.subr.bf16.mxu0 0
      %1019 = vmatpush2.bf16.xpose.msra.mxu0 0
      %1020 = vmatprep.subr.bf16.mxu0 0
      %1021 = vmatpush2.bf16.xpose.msra.mxu0 0
      %1022 = vmatprep.subr.bf16.mxu0 0
      %1023 = vmatpush2.bf16.xpose.msra.mxu0 0
      %1024 = vmatprep.subr.bf16.mxu0 0
      %1025 = vmatpush2.bf16.xpose.msra.mxu0 0
      %1026 = vmatprep.subr.bf16.mxu0 0
      %1027 = vmatpush2.bf16.xpose.msra.mxu0 0
      %1028 = vmatprep.subr.bf16.mxu0 0
      %1029 = vmatpush2.bf16.xpose.msra.mxu0 0
      %1030 = vmatprep.mubr.bf16.mxu0 0
      %1031 = vmatmul.mubr.bf16.gmra.mxu0 %v993
      %v1032 = vpop.f32.mrf.mxu0
      %v1033 = vadd.f32 0.0, %v1032
      %v1034 = vpop.f32.mrf.mxu0
      %v1035 = vpop.f32.mrf.mxu0
      %v1036 = vpop.f32.mrf.mxu0
      %1037 = vdwg.mxu0
      %v1039 = vsel %vm740, %v863, 0
      %v1042 = vsel %vm740, %v879, 0
      %1044 = vmatprep.subr.bf16.mxu0 0
      %1045 = vmatpush1.bf16.xpose.msra.mxu0 0
      %1046 = vmatprep.subr.bf16.mxu0 0
      %1047 = vmatpush1.bf16.xpose.msra.mxu0 0
      %1048 = vmatprep.subr.bf16.mxu0 0
      %1049 = vmatpush1.bf16.xpose.msra.mxu0 0
      %1050 = vmatprep.subr.bf16.mxu0 0
      %1051 = vmatpush1.bf16.xpose.msra.mxu0 0
      %1052 = vmatprep.subr.bf16.mxu0 0
      %1053 = vmatpush1.bf16.xpose.msra.mxu0 0
      %1054 = vmatprep.subr.bf16.mxu0 0
      %1055 = vmatpush1.bf16.xpose.msra.mxu0 0
      %1056 = vmatprep.subr.bf16.mxu0 0
      %1057 = vmatpush1.bf16.xpose.msra.mxu0 0
      %1058 = vmatprep.subr.bf16.mxu0 0
      %1059 = vmatpush1.bf16.xpose.msra.mxu0 %v1042
      %1060 = vmatprep.subr.bf16.mxu0 0
      %1061 = vmatpush2.bf16.xpose.msra.mxu0 0
      %1062 = vmatprep.subr.bf16.mxu0 0
      %1063 = vmatpush2.bf16.xpose.msra.mxu0 0
      %1064 = vmatprep.subr.bf16.mxu0 0
      %1065 = vmatpush2.bf16.xpose.msra.mxu0 0
      %1066 = vmatprep.subr.bf16.mxu0 0
      %1067 = vmatpush2.bf16.xpose.msra.mxu0 0
      %1068 = vmatprep.subr.bf16.mxu0 0
      %1069 = vmatpush2.bf16.xpose.msra.mxu0 0
      %1070 = vmatprep.subr.bf16.mxu0 0
      %1071 = vmatpush2.bf16.xpose.msra.mxu0 0
      %1072 = vmatprep.subr.bf16.mxu0 0
      %1073 = vmatpush2.bf16.xpose.msra.mxu0 0
      %1074 = vmatprep.subr.bf16.mxu0 0
      %1075 = vmatpush2.bf16.xpose.msra.mxu0 0
      %1076 = vmatprep.mubr.bf16.mxu0 0
      %1077 = vmatmul.mubr.bf16.gmra.mxu0 %v1039
      %v1078 = vpop.f32.mrf.mxu0
      %v1079 = vadd.f32 0.0, %v1078
      %v1080 = vpop.f32.mrf.mxu0
      %v1081 = vpop.f32.mrf.mxu0
      %v1082 = vpop.f32.mrf.mxu0
      %1083 = vdwg.mxu0
      %v1085 = vsel %vm740, %v864, 0
      %v1088 = vsel %vm740, %v880, 0
      %1090 = vmatprep.subr.bf16.mxu0 0
      %1091 = vmatpush1.bf16.xpose.msra.mxu0 0
      %1092 = vmatprep.subr.bf16.mxu0 0
      %1093 = vmatpush1.bf16.xpose.msra.mxu0 0
      %1094 = vmatprep.subr.bf16.mxu0 0
      %1095 = vmatpush1.bf16.xpose.msra.mxu0 0
      %1096 = vmatprep.subr.bf16.mxu0 0
      %1097 = vmatpush1.bf16.xpose.msra.mxu0 0
      %1098 = vmatprep.subr.bf16.mxu0 0
      %1099 = vmatpush1.bf16.xpose.msra.mxu0 0
      %1100 = vmatprep.subr.bf16.mxu0 0
      %1101 = vmatpush1.bf16.xpose.msra.mxu0 0
      %1102 = vmatprep.subr.bf16.mxu0 0
      %1103 = vmatpush1.bf16.xpose.msra.mxu0 0
      %1104 = vmatprep.subr.bf16.mxu0 0
      %1105 = vmatpush1.bf16.xpose.msra.mxu0 %v1088
      %1106 = vmatprep.subr.bf16.mxu0 0
      %1107 = vmatpush2.bf16.xpose.msra.mxu0 0
      %1108 = vmatprep.subr.bf16.mxu0 0
      %1109 = vmatpush2.bf16.xpose.msra.mxu0 0
      %1110 = vmatprep.subr.bf16.mxu0 0
      %1111 = vmatpush2.bf16.xpose.msra.mxu0 0
      %1112 = vmatprep.subr.bf16.mxu0 0
      %1113 = vmatpush2.bf16.xpose.msra.mxu0 0
      %1114 = vmatprep.subr.bf16.mxu0 0
      %1115 = vmatpush2.bf16.xpose.msra.mxu0 0
      %1116 = vmatprep.subr.bf16.mxu0 0
      %1117 = vmatpush2.bf16.xpose.msra.mxu0 0
      %1118 = vmatprep.subr.bf16.mxu0 0
      %1119 = vmatpush2.bf16.xpose.msra.mxu0 0
      %1120 = vmatprep.subr.bf16.mxu0 0
      %1121 = vmatpush2.bf16.xpose.msra.mxu0 0
      %1122 = vmatprep.mubr.bf16.mxu0 0
      %1123 = vmatmul.mubr.bf16.gmra.mxu0 %v1085
      %v1124 = vpop.f32.mrf.mxu0
      %v1125 = vadd.f32 0.0, %v1124
      %v1126 = vpop.f32.mrf.mxu0
      %v1127 = vpop.f32.mrf.mxu0
      %v1128 = vpop.f32.mrf.mxu0
      %1129 = vdwg.mxu0
      %v1131 = vsel %vm740, %v865, 0
      %v1134 = vsel %vm740, %v881, 0
      %1136 = vmatprep.subr.bf16.mxu0 0
      %1137 = vmatpush1.bf16.xpose.msra.mxu0 0
      %1138 = vmatprep.subr.bf16.mxu0 0
      %1139 = vmatpush1.bf16.xpose.msra.mxu0 0
      %1140 = vmatprep.subr.bf16.mxu0 0
      %1141 = vmatpush1.bf16.xpose.msra.mxu0 0
      %1142 = vmatprep.subr.bf16.mxu0 0
      %1143 = vmatpush1.bf16.xpose.msra.mxu0 0
      %1144 = vmatprep.subr.bf16.mxu0 0
      %1145 = vmatpush1.bf16.xpose.msra.mxu0 0
      %1146 = vmatprep.subr.bf16.mxu0 0
      %1147 = vmatpush1.bf16.xpose.msra.mxu0 0
      %1148 = vmatprep.subr.bf16.mxu0 0
      %1149 = vmatpush1.bf16.xpose.msra.mxu0 0
      %1150 = vmatprep.subr.bf16.mxu0 0
      %1151 = vmatpush1.bf16.xpose.msra.mxu0 %v1134
      %1152 = vmatprep.subr.bf16.mxu0 0
      %1153 = vmatpush2.bf16.xpose.msra.mxu0 0
      %1154 = vmatprep.subr.bf16.mxu0 0
      %1155 = vmatpush2.bf16.xpose.msra.mxu0 0
      %1156 = vmatprep.subr.bf16.mxu0 0
      %1157 = vmatpush2.bf16.xpose.msra.mxu0 0
      %1158 = vmatprep.subr.bf16.mxu0 0
      %1159 = vmatpush2.bf16.xpose.msra.mxu0 0
      %1160 = vmatprep.subr.bf16.mxu0 0
      %1161 = vmatpush2.bf16.xpose.msra.mxu0 0
      %1162 = vmatprep.subr.bf16.mxu0 0
      %1163 = vmatpush2.bf16.xpose.msra.mxu0 0
      %1164 = vmatprep.subr.bf16.mxu0 0
      %1165 = vmatpush2.bf16.xpose.msra.mxu0 0
      %1166 = vmatprep.subr.bf16.mxu0 0
      %1167 = vmatpush2.bf16.xpose.msra.mxu0 0
      %1168 = vmatprep.mubr.bf16.mxu0 0
      %1169 = vmatmul.mubr.bf16.gmra.mxu0 %v1131
      %v1170 = vpop.f32.mrf.mxu0
      %v1171 = vadd.f32 0.0, %v1170
      %v1172 = vpop.f32.mrf.mxu0
      %v1173 = vpop.f32.mrf.mxu0
      %v1174 = vpop.f32.mrf.mxu0
      %1175 = vdwg.mxu0
      %v1177 = vsel %vm740, %v866, 0
      %v1180 = vsel %vm740, %v882, 0
      %1182 = vmatprep.subr.bf16.mxu0 0
      %1183 = vmatpush1.bf16.xpose.msra.mxu0 0
      %1184 = vmatprep.subr.bf16.mxu0 0
      %1185 = vmatpush1.bf16.xpose.msra.mxu0 0
      %1186 = vmatprep.subr.bf16.mxu0 0
      %1187 = vmatpush1.bf16.xpose.msra.mxu0 0
      %1188 = vmatprep.subr.bf16.mxu0 0
      %1189 = vmatpush1.bf16.xpose.msra.mxu0 0
      %1190 = vmatprep.subr.bf16.mxu0 0
      %1191 = vmatpush1.bf16.xpose.msra.mxu0 0
      %1192 = vmatprep.subr.bf16.mxu0 0
      %1193 = vmatpush1.bf16.xpose.msra.mxu0 0
      %1194 = vmatprep.subr.bf16.mxu0 0
      %1195 = vmatpush1.bf16.xpose.msra.mxu0 0
      %1196 = vmatprep.subr.bf16.mxu0 0
      %1197 = vmatpush1.bf16.xpose.msra.mxu0 %v1180
      %1198 = vmatprep.subr.bf16.mxu0 0
      %1199 = vmatpush2.bf16.xpose.msra.mxu0 0
      %1200 = vmatprep.subr.bf16.mxu0 0
      %1201 = vmatpush2.bf16.xpose.msra.mxu0 0
      %1202 = vmatprep.subr.bf16.mxu0 0
      %1203 = vmatpush2.bf16.xpose.msra.mxu0 0
      %1204 = vmatprep.subr.bf16.mxu0 0
      %1205 = vmatpush2.bf16.xpose.msra.mxu0 0
      %1206 = vmatprep.subr.bf16.mxu0 0
      %1207 = vmatpush2.bf16.xpose.msra.mxu0 0
      %1208 = vmatprep.subr.bf16.mxu0 0
      %1209 = vmatpush2.bf16.xpose.msra.mxu0 0
      %1210 = vmatprep.subr.bf16.mxu0 0
      %1211 = vmatpush2.bf16.xpose.msra.mxu0 0
      %1212 = vmatprep.subr.bf16.mxu0 0
      %1213 = vmatpush2.bf16.xpose.msra.mxu0 0
      %1214 = vmatprep.mubr.bf16.mxu0 0
      %1215 = vmatmul.mubr.bf16.gmra.mxu0 %v1177
      %v1216 = vpop.f32.mrf.mxu0
      %v1217 = vadd.f32 0.0, %v1216
      %v1218 = vpop.f32.mrf.mxu0
      %v1219 = vpop.f32.mrf.mxu0
      %v1220 = vpop.f32.mrf.mxu0
      %1221 = vdwg.mxu0
      %v1223 = vsel %vm740, %v867, 0
      %v1226 = vsel %vm740, %v883, 0
      %1228 = vmatprep.subr.bf16.mxu0 0
      %1229 = vmatpush1.bf16.xpose.msra.mxu0 0
      %1230 = vmatprep.subr.bf16.mxu0 0
      %1231 = vmatpush1.bf16.xpose.msra.mxu0 0
      %1232 = vmatprep.subr.bf16.mxu0 0
      %1233 = vmatpush1.bf16.xpose.msra.mxu0 0
      %1234 = vmatprep.subr.bf16.mxu0 0
      %1235 = vmatpush1.bf16.xpose.msra.mxu0 0
      %1236 = vmatprep.subr.bf16.mxu0 0
      %1237 = vmatpush1.bf16.xpose.msra.mxu0 0
      %1238 = vmatprep.subr.bf16.mxu0 0
      %1239 = vmatpush1.bf16.xpose.msra.mxu0 0
      %1240 = vmatprep.subr.bf16.mxu0 0
      %1241 = vmatpush1.bf16.xpose.msra.mxu0 0
      %1242 = vmatprep.subr.bf16.mxu0 0
      %1243 = vmatpush1.bf16.xpose.msra.mxu0 %v1226
      %1244 = vmatprep.subr.bf16.mxu0 0
      %1245 = vmatpush2.bf16.xpose.msra.mxu0 0
      %1246 = vmatprep.subr.bf16.mxu0 0
      %1247 = vmatpush2.bf16.xpose.msra.mxu0 0
      %1248 = vmatprep.subr.bf16.mxu0 0
      %1249 = vmatpush2.bf16.xpose.msra.mxu0 0
      %1250 = vmatprep.subr.bf16.mxu0 0
      %1251 = vmatpush2.bf16.xpose.msra.mxu0 0
      %1252 = vmatprep.subr.bf16.mxu0 0
      %1253 = vmatpush2.bf16.xpose.msra.mxu0 0
      %1254 = vmatprep.subr.bf16.mxu0 0
      %1255 = vmatpush2.bf16.xpose.msra.mxu0 0
      %1256 = vmatprep.subr.bf16.mxu0 0
      %1257 = vmatpush2.bf16.xpose.msra.mxu0 0
      %1258 = vmatprep.subr.bf16.mxu0 0
      %1259 = vmatpush2.bf16.xpose.msra.mxu0 0
      %1260 = vmatprep.mubr.bf16.mxu0 0
      %1261 = vmatmul.mubr.bf16.gmra.mxu0 %v1223
      %v1262 = vpop.f32.mrf.mxu0
      %v1263 = vadd.f32 0.0, %v1262
      %v1264 = vpop.f32.mrf.mxu0
      %v1265 = vpop.f32.mrf.mxu0
      %v1266 = vpop.f32.mrf.mxu0
      %1267 = vdwg.mxu0
      %v1268 = vmul.f32 %v941, 0.35355338
      %v1269 = vmul.f32 %v987, 0.35355338
      %v1270 = vmul.f32 %v1033, 0.35355338
      %v1271 = vmul.f32 %v1079, 0.35355338
      %v1272 = vmul.f32 %v1125, 0.35355338
      %v1273 = vmul.f32 %v1171, 0.35355338
      %v1274 = vmul.f32 %v1217, 0.35355338
      %v1275 = vmul.f32 %v1263, 0.35355338
      %v1276 = vsel %vm740, %v1268, -inf
      %1277 = vmax.xlane.f32.xlu0 %v1276
      %v1278 = vpop.xlane.xlu0 %1277
      %v1279 = vsel %vm740, %v1269, -inf
      %1280 = vmax.xlane.f32.xlu0 %v1279
      %v1281 = vpop.xlane.xlu0 %1280
      %v1282 = vsel %vm740, %v1270, -inf
      %1283 = vmax.xlane.f32.xlu0 %v1282
      %v1284 = vpop.xlane.xlu0 %1283
      %v1285 = vsel %vm740, %v1271, -inf
      %1286 = vmax.xlane.f32.xlu0 %v1285
      %v1287 = vpop.xlane.xlu0 %1286
      %v1288 = vsel %vm740, %v1272, -inf
      %1289 = vmax.xlane.f32.xlu0 %v1288
      %v1290 = vpop.xlane.xlu0 %1289
      %v1291 = vsel %vm740, %v1273, -inf
      %1292 = vmax.xlane.f32.xlu0 %v1291
      %v1293 = vpop.xlane.xlu0 %1292
      %v1294 = vsel %vm740, %v1274, -inf
      %1295 = vmax.xlane.f32.xlu0 %v1294
      %v1296 = vpop.xlane.xlu0 %1295
      %v1297 = vsel %vm740, %v1275, -inf
      %1298 = vmax.xlane.f32.xlu0 %v1297
      %v1299 = vpop.xlane.xlu0 %1298
      %v1300 = vsub.f32 %v1268, %v1278
      %v1301 = vsub.f32 %v1269, %v1281
      %v1302 = vsub.f32 %v1270, %v1284
      %v1303 = vsub.f32 %v1271, %v1287
      %v1304 = vsub.f32 %v1272, %v1290
      %v1305 = vsub.f32 %v1273, %v1293
      %v1306 = vsub.f32 %v1274, %v1296
      %v1307 = vsub.f32 %v1275, %v1299
      %v1308 = vmul.f32 %v1300, 1.442695
      %v1309 = vpow.pop %v1308
      %v1310 = vmul.f32 %v1301, 1.442695
      %v1311 = vpow.pop %v1310
      %v1312 = vmul.f32 %v1302, 1.442695
      %v1313 = vpow.pop %v1312
      %v1314 = vmul.f32 %v1303, 1.442695
      %v1315 = vpow.pop %v1314
      %v1316 = vmul.f32 %v1304, 1.442695
      %v1317 = vpow.pop %v1316
      %v1318 = vmul.f32 %v1305, 1.442695
      %v1319 = vpow.pop %v1318
      %v1320 = vmul.f32 %v1306, 1.442695
      %v1321 = vpow.pop %v1320
      %v1322 = vmul.f32 %v1307, 1.442695
      %v1323 = vpow.pop %v1322
      %v1324 = vsel %vm740, %v1309, 0.0
      %1325 = vadd.xlane.f32.xlu0 %v1324
      %v1326 = vpop.xlane.xlu0 %1325
      %v1327 = vsel %vm740, %v1311, 0.0
      %1328 = vadd.xlane.f32.xlu0 %v1327
      %v1329 = vpop.xlane.xlu0 %1328
      %v1330 = vsel %vm740, %v1313, 0.0
      %1331 = vadd.xlane.f32.xlu0 %v1330
      %v1332 = vpop.xlane.xlu0 %1331
      %v1333 = vsel %vm740, %v1315, 0.0
      %1334 = vadd.xlane.f32.xlu0 %v1333
      %v1335 = vpop.xlane.xlu0 %1334
      %v1336 = vsel %vm740, %v1317, 0.0
      %1337 = vadd.xlane.f32.xlu0 %v1336
      %v1338 = vpop.xlane.xlu0 %1337
      %v1339 = vsel %vm740, %v1319, 0.0
      %1340 = vadd.xlane.f32.xlu0 %v1339
      %v1341 = vpop.xlane.xlu0 %1340
      %v1342 = vsel %vm740, %v1321, 0.0
      %1343 = vadd.xlane.f32.xlu0 %v1342
      %v1344 = vpop.xlane.xlu0 %1343
      %v1345 = vsel %vm740, %v1323, 0.0
      %1346 = vadd.xlane.f32.xlu0 %v1345
      %v1347 = vpop.xlane.xlu0 %1346
      %v1348 = vrcp.pop %v1326
      %v1349 = vrcp.pop %v1329
      %v1350 = vrcp.pop %v1332
      %v1351 = vrcp.pop %v1335
      %v1352 = vrcp.pop %v1338
      %v1353 = vrcp.pop %v1341
      %v1354 = vrcp.pop %v1344
      %v1355 = vrcp.pop %v1347
      %v1356 = vmul.f32 %v1309, %v1348
      %v1357 = vmul.f32 %v1311, %v1349
      %v1358 = vmul.f32 %v1313, %v1350
      %v1359 = vmul.f32 %v1315, %v1351
      %v1360 = vmul.f32 %v1317, %v1352
      %v1361 = vmul.f32 %v1319, %v1353
      %v1362 = vmul.f32 %v1321, %v1354
      %v1363 = vmul.f32 %v1323, %v1355
      %v1364 = vpack.c.bf16 %v1356, %v1356
      %v1365 = vpack.c.bf16 %v1357, %v1357
      %v1366 = vpack.c.bf16 %v1358, %v1358
      %v1367 = vpack.c.bf16 %v1359, %v1359
      %v1368 = vpack.c.bf16 %v1360, %v1360
      %v1369 = vpack.c.bf16 %v1361, %v1361
      %v1370 = vpack.c.bf16 %v1362, %v1362
      %v1371 = vpack.c.bf16 %v1363, %v1363
      %v1373 = vsel %vm740, %v1364, 0
      %vm1375 = vcmask 1043456
      %v1377 = vsel %vm1375, %v892, 0
      %1379 = vmatprep.subr.bf16.mxu0 0
      %1380 = vmatpush1.bf16.msra.mxu0 0
      %1381 = vmatprep.subr.bf16.mxu0 0
      %1382 = vmatpush1.bf16.msra.mxu0 0
      %1383 = vmatprep.subr.bf16.mxu0 0
      %1384 = vmatpush1.bf16.msra.mxu0 0
      %1385 = vmatprep.subr.bf16.mxu0 0
      %1386 = vmatpush1.bf16.msra.mxu0 0
      %1387 = vmatprep.subr.bf16.mxu0 0
      %1388 = vmatpush1.bf16.msra.mxu0 0
      %1389 = vmatprep.subr.bf16.mxu0 0
      %1390 = vmatpush1.bf16.msra.mxu0 0
      %1391 = vmatprep.subr.bf16.mxu0 0
      %1392 = vmatpush1.bf16.msra.mxu0 0
      %1393 = vmatprep.subr.bf16.mxu0 0
      %1394 = vmatpush1.bf16.msra.mxu0 %v1377
      %1395 = vmatprep.subr.bf16.mxu0 0
      %1396 = vmatpush2.bf16.msra.mxu0 0
      %1397 = vmatprep.subr.bf16.mxu0 0
      %1398 = vmatpush2.bf16.msra.mxu0 0
      %1399 = vmatprep.subr.bf16.mxu0 0
      %1400 = vmatpush2.bf16.msra.mxu0 0
      %1401 = vmatprep.subr.bf16.mxu0 0
      %1402 = vmatpush2.bf16.msra.mxu0 0
      %1403 = vmatprep.subr.bf16.mxu0 0
      %1404 = vmatpush2.bf16.msra.mxu0 0
      %1405 = vmatprep.subr.bf16.mxu0 0
      %1406 = vmatpush2.bf16.msra.mxu0 0
      %1407 = vmatprep.subr.bf16.mxu0 0
      %1408 = vmatpush2.bf16.msra.mxu0 0
      %1409 = vmatprep.subr.bf16.mxu0 0
      %1410 = vmatpush2.bf16.msra.mxu0 0
      %1411 = vmatprep.mubr.bf16.mxu0 0
      %1412 = vmatmul.mubr.bf16.gmra.mxu0 %v1373
      %v1413 = vpop.f32.mrf.mxu0
      %v1414 = vadd.f32 0.0, %v1413
      %v1415 = vpop.f32.mrf.mxu0
      %v1416 = vpop.f32.mrf.mxu0
      %v1417 = vpop.f32.mrf.mxu0
      %1418 = vdwg.mxu0
      %v1420 = vsel %vm740, %v1365, 0
      %v1423 = vsel %vm1375, %v893, 0
      %1425 = vmatprep.subr.bf16.mxu0 0
      %1426 = vmatpush1.bf16.msra.mxu0 0
      %1427 = vmatprep.subr.bf16.mxu0 0
      %1428 = vmatpush1.bf16.msra.mxu0 0
      %1429 = vmatprep.subr.bf16.mxu0 0
      %1430 = vmatpush1.bf16.msra.mxu0 0
      %1431 = vmatprep.subr.bf16.mxu0 0
      %1432 = vmatpush1.bf16.msra.mxu0 0
      %1433 = vmatprep.subr.bf16.mxu0 0
      %1434 = vmatpush1.bf16.msra.mxu0 0
      %1435 = vmatprep.subr.bf16.mxu0 0
      %1436 = vmatpush1.bf16.msra.mxu0 0
      %1437 = vmatprep.subr.bf16.mxu0 0
      %1438 = vmatpush1.bf16.msra.mxu0 0
      %1439 = vmatprep.subr.bf16.mxu0 0
      %1440 = vmatpush1.bf16.msra.mxu0 %v1423
      %1441 = vmatprep.subr.bf16.mxu0 0
      %1442 = vmatpush2.bf16.msra.mxu0 0
      %1443 = vmatprep.subr.bf16.mxu0 0
      %1444 = vmatpush2.bf16.msra.mxu0 0
      %1445 = vmatprep.subr.bf16.mxu0 0
      %1446 = vmatpush2.bf16.msra.mxu0 0
      %1447 = vmatprep.subr.bf16.mxu0 0
      %1448 = vmatpush2.bf16.msra.mxu0 0
      %1449 = vmatprep.subr.bf16.mxu0 0
      %1450 = vmatpush2.bf16.msra.mxu0 0
      %1451 = vmatprep.subr.bf16.mxu0 0
      %1452 = vmatpush2.bf16.msra.mxu0 0
      %1453 = vmatprep.subr.bf16.mxu0 0
      %1454 = vmatpush2.bf16.msra.mxu0 0
      %1455 = vmatprep.subr.bf16.mxu0 0
      %1456 = vmatpush2.bf16.msra.mxu0 0
      %1457 = vmatprep.mubr.bf16.mxu0 0
      %1458 = vmatmul.mubr.bf16.gmra.mxu0 %v1420
      %v1459 = vpop.f32.mrf.mxu0
      %v1460 = vadd.f32 0.0, %v1459
      %v1461 = vpop.f32.mrf.mxu0
      %v1462 = vpop.f32.mrf.mxu0
      %v1463 = vpop.f32.mrf.mxu0
      %1464 = vdwg.mxu0
      %v1466 = vsel %vm740, %v1366, 0
      %v1469 = vsel %vm1375, %v894, 0
      %1471 = vmatprep.subr.bf16.mxu0 0
      %1472 = vmatpush1.bf16.msra.mxu0 0
      %1473 = vmatprep.subr.bf16.mxu0 0
      %1474 = vmatpush1.bf16.msra.mxu0 0
      %1475 = vmatprep.subr.bf16.mxu0 0
      %1476 = vmatpush1.bf16.msra.mxu0 0
      %1477 = vmatprep.subr.bf16.mxu0 0
      %1478 = vmatpush1.bf16.msra.mxu0 0
      %1479 = vmatprep.subr.bf16.mxu0 0
      %1480 = vmatpush1.bf16.msra.mxu0 0
      %1481 = vmatprep.subr.bf16.mxu0 0
      %1482 = vmatpush1.bf16.msra.mxu0 0
      %1483 = vmatprep.subr.bf16.mxu0 0
      %1484 = vmatpush1.bf16.msra.mxu0 0
      %1485 = vmatprep.subr.bf16.mxu0 0
      %1486 = vmatpush1.bf16.msra.mxu0 %v1469
      %1487 = vmatprep.subr.bf16.mxu0 0
      %1488 = vmatpush2.bf16.msra.mxu0 0
      %1489 = vmatprep.subr.bf16.mxu0 0
      %1490 = vmatpush2.bf16.msra.mxu0 0
      %1491 = vmatprep.subr.bf16.mxu0 0
      %1492 = vmatpush2.bf16.msra.mxu0 0
      %1493 = vmatprep.subr.bf16.mxu0 0
      %1494 = vmatpush2.bf16.msra.mxu0 0
      %1495 = vmatprep.subr.bf16.mxu0 0
      %1496 = vmatpush2.bf16.msra.mxu0 0
      %1497 = vmatprep.subr.bf16.mxu0 0
      %1498 = vmatpush2.bf16.msra.mxu0 0
      %1499 = vmatprep.subr.bf16.mxu0 0
      %1500 = vmatpush2.bf16.msra.mxu0 0
      %1501 = vmatprep.subr.bf16.mxu0 0
      %1502 = vmatpush2.bf16.msra.mxu0 0
      %1503 = vmatprep.mubr.bf16.mxu0 0
      %1504 = vmatmul.mubr.bf16.gmra.mxu0 %v1466
      %v1505 = vpop.f32.mrf.mxu0
      %v1506 = vadd.f32 0.0, %v1505
      %v1507 = vpop.f32.mrf.mxu0
      %v1508 = vpop.f32.mrf.mxu0
      %v1509 = vpop.f32.mrf.mxu0
      %1510 = vdwg.mxu0
      %v1512 = vsel %vm740, %v1367, 0
      %v1515 = vsel %vm1375, %v895, 0
      %1517 = vmatprep.subr.bf16.mxu0 0
      %1518 = vmatpush1.bf16.msra.mxu0 0
      %1519 = vmatprep.subr.bf16.mxu0 0
      %1520 = vmatpush1.bf16.msra.mxu0 0
      %1521 = vmatprep.subr.bf16.mxu0 0
      %1522 = vmatpush1.bf16.msra.mxu0 0
      %1523 = vmatprep.subr.bf16.mxu0 0
      %1524 = vmatpush1.bf16.msra.mxu0 0
      %1525 = vmatprep.subr.bf16.mxu0 0
      %1526 = vmatpush1.bf16.msra.mxu0 0
      %1527 = vmatprep.subr.bf16.mxu0 0
      %1528 = vmatpush1.bf16.msra.mxu0 0
      %1529 = vmatprep.subr.bf16.mxu0 0
      %1530 = vmatpush1.bf16.msra.mxu0 0
      %1531 = vmatprep.subr.bf16.mxu0 0
      %1532 = vmatpush1.bf16.msra.mxu0 %v1515
      %1533 = vmatprep.subr.bf16.mxu0 0
      %1534 = vmatpush2.bf16.msra.mxu0 0
      %1535 = vmatprep.subr.bf16.mxu0 0
      %1536 = vmatpush2.bf16.msra.mxu0 0
      %1537 = vmatprep.subr.bf16.mxu0 0
      %1538 = vmatpush2.bf16.msra.mxu0 0
      %1539 = vmatprep.subr.bf16.mxu0 0
      %1540 = vmatpush2.bf16.msra.mxu0 0
      %1541 = vmatprep.subr.bf16.mxu0 0
      %1542 = vmatpush2.bf16.msra.mxu0 0
      %1543 = vmatprep.subr.bf16.mxu0 0
      %1544 = vmatpush2.bf16.msra.mxu0 0
      %1545 = vmatprep.subr.bf16.mxu0 0
      %1546 = vmatpush2.bf16.msra.mxu0 0
      %1547 = vmatprep.subr.bf16.mxu0 0
      %1548 = vmatpush2.bf16.msra.mxu0 0
      %1549 = vmatprep.mubr.bf16.mxu0 0
      %1550 = vmatmul.mubr.bf16.gmra.mxu0 %v1512
      %v1551 = vpop.f32.mrf.mxu0
      %v1552 = vadd.f32 0.0, %v1551
      %v1553 = vpop.f32.mrf.mxu0
      %v1554 = vpop.f32.mrf.mxu0
      %v1555 = vpop.f32.mrf.mxu0
      %1556 = vdwg.mxu0
      %v1558 = vsel %vm740, %v1368, 0
      %v1561 = vsel %vm1375, %v896, 0
      %1563 = vmatprep.subr.bf16.mxu0 0
      %1564 = vmatpush1.bf16.msra.mxu0 0
      %1565 = vmatprep.subr.bf16.mxu0 0
      %1566 = vmatpush1.bf16.msra.mxu0 0
      %1567 = vmatprep.subr.bf16.mxu0 0
      %1568 = vmatpush1.bf16.msra.mxu0 0
      %1569 = vmatprep.subr.bf16.mxu0 0
      %1570 = vmatpush1.bf16.msra.mxu0 0
      %1571 = vmatprep.subr.bf16.mxu0 0
      %1572 = vmatpush1.bf16.msra.mxu0 0
      %1573 = vmatprep.subr.bf16.mxu0 0
      %1574 = vmatpush1.bf16.msra.mxu0 0
      %1575 = vmatprep.subr.bf16.mxu0 0
      %1576 = vmatpush1.bf16.msra.mxu0 0
      %1577 = vmatprep.subr.bf16.mxu0 0
      %1578 = vmatpush1.bf16.msra.mxu0 %v1561
      %1579 = vmatprep.subr.bf16.mxu0 0
      %1580 = vmatpush2.bf16.msra.mxu0 0
      %1581 = vmatprep.subr.bf16.mxu0 0
      %1582 = vmatpush2.bf16.msra.mxu0 0
      %1583 = vmatprep.subr.bf16.mxu0 0
      %1584 = vmatpush2.bf16.msra.mxu0 0
      %1585 = vmatprep.subr.bf16.mxu0 0
      %1586 = vmatpush2.bf16.msra.mxu0 0
      %1587 = vmatprep.subr.bf16.mxu0 0
      %1588 = vmatpush2.bf16.msra.mxu0 0
      %1589 = vmatprep.subr.bf16.mxu0 0
      %1590 = vmatpush2.bf16.msra.mxu0 0
      %1591 = vmatprep.subr.bf16.mxu0 0
      %1592 = vmatpush2.bf16.msra.mxu0 0
      %1593 = vmatprep.subr.bf16.mxu0 0
      %1594 = vmatpush2.bf16.msra.mxu0 0
      %1595 = vmatprep.mubr.bf16.mxu0 0
      %1596 = vmatmul.mubr.bf16.gmra.mxu0 %v1558
      %v1597 = vpop.f32.mrf.mxu0
      %v1598 = vadd.f32 0.0, %v1597
      %v1599 = vpop.f32.mrf.mxu0
      %v1600 = vpop.f32.mrf.mxu0
      %v1601 = vpop.f32.mrf.mxu0
      %1602 = vdwg.mxu0
      %v1604 = vsel %vm740, %v1369, 0
      %v1607 = vsel %vm1375, %v897, 0
      %1609 = vmatprep.subr.bf16.mxu0 0
      %1610 = vmatpush1.bf16.msra.mxu0 0
      %1611 = vmatprep.subr.bf16.mxu0 0
      %1612 = vmatpush1.bf16.msra.mxu0 0
      %1613 = vmatprep.subr.bf16.mxu0 0
      %1614 = vmatpush1.bf16.msra.mxu0 0
      %1615 = vmatprep.subr.bf16.mxu0 0
      %1616 = vmatpush1.bf16.msra.mxu0 0
      %1617 = vmatprep.subr.bf16.mxu0 0
      %1618 = vmatpush1.bf16.msra.mxu0 0
      %1619 = vmatprep.subr.bf16.mxu0 0
      %1620 = vmatpush1.bf16.msra.mxu0 0
      %1621 = vmatprep.subr.bf16.mxu0 0
      %1622 = vmatpush1.bf16.msra.mxu0 0
      %1623 = vmatprep.subr.bf16.mxu0 0
      %1624 = vmatpush1.bf16.msra.mxu0 %v1607
      %1625 = vmatprep.subr.bf16.mxu0 0
      %1626 = vmatpush2.bf16.msra.mxu0 0
      %1627 = vmatprep.subr.bf16.mxu0 0
      %1628 = vmatpush2.bf16.msra.mxu0 0
      %1629 = vmatprep.subr.bf16.mxu0 0
      %1630 = vmatpush2.bf16.msra.mxu0 0
      %1631 = vmatprep.subr.bf16.mxu0 0
      %1632 = vmatpush2.bf16.msra.mxu0 0
      %1633 = vmatprep.subr.bf16.mxu0 0
      %1634 = vmatpush2.bf16.msra.mxu0 0
      %1635 = vmatprep.subr.bf16.mxu0 0
      %1636 = vmatpush2.bf16.msra.mxu0 0
      %1637 = vmatprep.subr.bf16.mxu0 0
      %1638 = vmatpush2.bf16.msra.mxu0 0
      %1639 = vmatprep.subr.bf16.mxu0 0
      %1640 = vmatpush2.bf16.msra.mxu0 0
      %1641 = vmatprep.mubr.bf16.mxu0 0
      %1642 = vmatmul.mubr.bf16.gmra.mxu0 %v1604
      %v1643 = vpop.f32.mrf.mxu0
      %v1644 = vadd.f32 0.0, %v1643
      %v1645 = vpop.f32.mrf.mxu0
      %v1646 = vpop.f32.mrf.mxu0
      %v1647 = vpop.f32.mrf.mxu0
      %1648 = vdwg.mxu0
      %v1650 = vsel %vm740, %v1370, 0
      %v1653 = vsel %vm1375, %v898, 0
      %1655 = vmatprep.subr.bf16.mxu0 0
      %1656 = vmatpush1.bf16.msra.mxu0 0
      %1657 = vmatprep.subr.bf16.mxu0 0
      %1658 = vmatpush1.bf16.msra.mxu0 0
      %1659 = vmatprep.subr.bf16.mxu0 0
      %1660 = vmatpush1.bf16.msra.mxu0 0
      %1661 = vmatprep.subr.bf16.mxu0 0
      %1662 = vmatpush1.bf16.msra.mxu0 0
      %1663 = vmatprep.subr.bf16.mxu0 0
      %1664 = vmatpush1.bf16.msra.mxu0 0
      %1665 = vmatprep.subr.bf16.mxu0 0
      %1666 = vmatpush1.bf16.msra.mxu0 0
      %1667 = vmatprep.subr.bf16.mxu0 0
      %1668 = vmatpush1.bf16.msra.mxu0 0
      %1669 = vmatprep.subr.bf16.mxu0 0
      %1670 = vmatpush1.bf16.msra.mxu0 %v1653
      %1671 = vmatprep.subr.bf16.mxu0 0
      %1672 = vmatpush2.bf16.msra.mxu0 0
      %1673 = vmatprep.subr.bf16.mxu0 0
      %1674 = vmatpush2.bf16.msra.mxu0 0
      %1675 = vmatprep.subr.bf16.mxu0 0
      %1676 = vmatpush2.bf16.msra.mxu0 0
      %1677 = vmatprep.subr.bf16.mxu0 0
      %1678 = vmatpush2.bf16.msra.mxu0 0
      %1679 = vmatprep.subr.bf16.mxu0 0
      %1680 = vmatpush2.bf16.msra.mxu0 0
      %1681 = vmatprep.subr.bf16.mxu0 0
      %1682 = vmatpush2.bf16.msra.mxu0 0
      %1683 = vmatprep.subr.bf16.mxu0 0
      %1684 = vmatpush2.bf16.msra.mxu0 0
      %1685 = vmatprep.subr.bf16.mxu0 0
      %1686 = vmatpush2.bf16.msra.mxu0 0
      %1687 = vmatprep.mubr.bf16.mxu0 0
      %1688 = vmatmul.mubr.bf16.gmra.mxu0 %v1650
      %v1689 = vpop.f32.mrf.mxu0
      %v1690 = vadd.f32 0.0, %v1689
      %v1691 = vpop.f32.mrf.mxu0
      %v1692 = vpop.f32.mrf.mxu0
      %v1693 = vpop.f32.mrf.mxu0
      %1694 = vdwg.mxu0
      %v1696 = vsel %vm740, %v1371, 0
      %v1699 = vsel %vm1375, %v899, 0
      %1701 = vmatprep.subr.bf16.mxu0 0
      %1702 = vmatpush1.bf16.msra.mxu0 0
      %1703 = vmatprep.subr.bf16.mxu0 0
      %1704 = vmatpush1.bf16.msra.mxu0 0
      %1705 = vmatprep.subr.bf16.mxu0 0
      %1706 = vmatpush1.bf16.msra.mxu0 0
      %1707 = vmatprep.subr.bf16.mxu0 0
      %1708 = vmatpush1.bf16.msra.mxu0 0
      %1709 = vmatprep.subr.bf16.mxu0 0
      %1710 = vmatpush1.bf16.msra.mxu0 0
      %1711 = vmatprep.subr.bf16.mxu0 0
      %1712 = vmatpush1.bf16.msra.mxu0 0
      %1713 = vmatprep.subr.bf16.mxu0 0
      %1714 = vmatpush1.bf16.msra.mxu0 0
      %1715 = vmatprep.subr.bf16.mxu0 0
      %1716 = vmatpush1.bf16.msra.mxu0 %v1699
      %1717 = vmatprep.subr.bf16.mxu0 0
      %1718 = vmatpush2.bf16.msra.mxu0 0
      %1719 = vmatprep.subr.bf16.mxu0 0
      %1720 = vmatpush2.bf16.msra.mxu0 0
      %1721 = vmatprep.subr.bf16.mxu0 0
      %1722 = vmatpush2.bf16.msra.mxu0 0
      %1723 = vmatprep.subr.bf16.mxu0 0
      %1724 = vmatpush2.bf16.msra.mxu0 0
      %1725 = vmatprep.subr.bf16.mxu0 0
      %1726 = vmatpush2.bf16.msra.mxu0 0
      %1727 = vmatprep.subr.bf16.mxu0 0
      %1728 = vmatpush2.bf16.msra.mxu0 0
      %1729 = vmatprep.subr.bf16.mxu0 0
      %1730 = vmatpush2.bf16.msra.mxu0 0
      %1731 = vmatprep.subr.bf16.mxu0 0
      %1732 = vmatpush2.bf16.msra.mxu0 0
      %1733 = vmatprep.mubr.bf16.mxu0 0
      %1734 = vmatmul.mubr.bf16.gmra.mxu0 %v1696
      %v1735 = vpop.f32.mrf.mxu0
      %v1736 = vadd.f32 0.0, %v1735
      %v1737 = vpop.f32.mrf.mxu0
      %v1738 = vpop.f32.mrf.mxu0
      %v1739 = vpop.f32.mrf.mxu0
      %1740 = vdwg.mxu0
      %v1741 = vpack.c.bf16 %v1414, %v1414
      %v1742 = vpack.c.bf16 %v1460, %v1460
      %v1743 = vpack.c.bf16 %v1506, %v1506
      %v1744 = vpack.c.bf16 %v1552, %v1552
      %v1745 = vpack.c.bf16 %v1598, %v1598
      %v1746 = vpack.c.bf16 %v1644, %v1644
      %v1747 = vpack.c.bf16 %v1690, %v1690
      %v1748 = vpack.c.bf16 %v1736, %v1736
      %v1749 = vld [vmem:[%s4] sm:$0xf]
      %v1750 = vld [vmem:[%s4 + $0x4] sm:$0xf]
      %v1751 = vld [vmem:[%s4 + $0x8] sm:$0xf]
      %v1752 = vld [vmem:[%s4 + $0xc] sm:$0xf]
      %v1753 = vld [vmem:[%s4 + $0x10] sm:$0xf]
      %v1754 = vld [vmem:[%s4 + $0x14] sm:$0xf]
      %v1755 = vld [vmem:[%s4 + $0x18] sm:$0xf]
      %v1756 = vld [vmem:[%s4 + $0x1c] sm:$0xf]
      %v1758 = vsel %vm740, %v1741, 0
      %v1761 = vsel %vm1375, %v1749, 0
      %1763 = vmatprep.subr.bf16.mxu0 0
      %1764 = vmatpush1.bf16.msra.mxu0 0
      %1765 = vmatprep.subr.bf16.mxu0 0
      %1766 = vmatpush1.bf16.msra.mxu0 0
      %1767 = vmatprep.subr.bf16.mxu0 0
      %1768 = vmatpush1.bf16.msra.mxu0 0
      %1769 = vmatprep.subr.bf16.mxu0 0
      %1770 = vmatpush1.bf16.msra.mxu0 0
      %1771 = vmatprep.subr.bf16.mxu0 0
      %1772 = vmatpush1.bf16.msra.mxu0 0
      %1773 = vmatprep.subr.bf16.mxu0 0
      %1774 = vmatpush1.bf16.msra.mxu0 0
      %1775 = vmatprep.subr.bf16.mxu0 0
      %1776 = vmatpush1.bf16.msra.mxu0 0
      %1777 = vmatprep.subr.bf16.mxu0 0
      %1778 = vmatpush1.bf16.msra.mxu0 %v1761
      %1779 = vmatprep.subr.bf16.mxu0 0
      %1780 = vmatpush2.bf16.msra.mxu0 0
      %1781 = vmatprep.subr.bf16.mxu0 0
      %1782 = vmatpush2.bf16.msra.mxu0 0
      %1783 = vmatprep.subr.bf16.mxu0 0
      %1784 = vmatpush2.bf16.msra.mxu0 0
      %1785 = vmatprep.subr.bf16.mxu0 0
      %1786 = vmatpush2.bf16.msra.mxu0 0
      %1787 = vmatprep.subr.bf16.mxu0 0
      %1788 = vmatpush2.bf16.msra.mxu0 0
      %1789 = vmatprep.subr.bf16.mxu0 0
      %1790 = vmatpush2.bf16.msra.mxu0 0
      %1791 = vmatprep.subr.bf16.mxu0 0
      %1792 = vmatpush2.bf16.msra.mxu0 0
      %1793 = vmatprep.subr.bf16.mxu0 0
      %1794 = vmatpush2.bf16.msra.mxu0 0
      %1795 = vmatprep.mubr.bf16.mxu0 0
      %1796 = vmatmul.mubr.bf16.gmra.mxu0 %v1758
      %v1797 = vpop.f32.mrf.mxu0
      %v1798 = vadd.f32 0.0, %v1797
      %v1799 = vpop.f32.mrf.mxu0
      %v1800 = vpop.f32.mrf.mxu0
      %v1801 = vpop.f32.mrf.mxu0
      %1802 = vdwg.mxu0
      %v1804 = vsel %vm740, %v1742, 0
      %v1807 = vsel %vm1375, %v1750, 0
      %1809 = vmatprep.subr.bf16.mxu0 0
      %1810 = vmatpush1.bf16.msra.mxu0 0
      %1811 = vmatprep.subr.bf16.mxu0 0
      %1812 = vmatpush1.bf16.msra.mxu0 0
      %1813 = vmatprep.subr.bf16.mxu0 0
      %1814 = vmatpush1.bf16.msra.mxu0 0
      %1815 = vmatprep.subr.bf16.mxu0 0
      %1816 = vmatpush1.bf16.msra.mxu0 0
      %1817 = vmatprep.subr.bf16.mxu0 0
      %1818 = vmatpush1.bf16.msra.mxu0 0
      %1819 = vmatprep.subr.bf16.mxu0 0
      %1820 = vmatpush1.bf16.msra.mxu0 0
      %1821 = vmatprep.subr.bf16.mxu0 0
      %1822 = vmatpush1.bf16.msra.mxu0 0
      %1823 = vmatprep.subr.bf16.mxu0 0
      %1824 = vmatpush1.bf16.msra.mxu0 %v1807
      %1825 = vmatprep.subr.bf16.mxu0 0
      %1826 = vmatpush2.bf16.msra.mxu0 0
      %1827 = vmatprep.subr.bf16.mxu0 0
      %1828 = vmatpush2.bf16.msra.mxu0 0
      %1829 = vmatprep.subr.bf16.mxu0 0
      %1830 = vmatpush2.bf16.msra.mxu0 0
      %1831 = vmatprep.subr.bf16.mxu0 0
      %1832 = vmatpush2.bf16.msra.mxu0 0
      %1833 = vmatprep.subr.bf16.mxu0 0
      %1834 = vmatpush2.bf16.msra.mxu0 0
      %1835 = vmatprep.subr.bf16.mxu0 0
      %1836 = vmatpush2.bf16.msra.mxu0 0
      %1837 = vmatprep.subr.bf16.mxu0 0
      %1838 = vmatpush2.bf16.msra.mxu0 0
      %1839 = vmatprep.subr.bf16.mxu0 0
      %1840 = vmatpush2.bf16.msra.mxu0 0
      %1841 = vmatprep.mubr.bf16.mxu0 0
      %1842 = vmatmul.mubr.bf16.gmra.mxu0 %v1804
      %v1843 = vpop.f32.mrf.mxu0
      %v1844 = vadd.f32 0.0, %v1843
      %v1845 = vpop.f32.mrf.mxu0
      %v1846 = vpop.f32.mrf.mxu0
      %v1847 = vpop.f32.mrf.mxu0
      %1848 = vdwg.mxu0
      %v1850 = vsel %vm740, %v1743, 0
      %v1853 = vsel %vm1375, %v1751, 0
      %1855 = vmatprep.subr.bf16.mxu0 0
      %1856 = vmatpush1.bf16.msra.mxu0 0
      %1857 = vmatprep.subr.bf16.mxu0 0
      %1858 = vmatpush1.bf16.msra.mxu0 0
      %1859 = vmatprep.subr.bf16.mxu0 0
      %1860 = vmatpush1.bf16.msra.mxu0 0
      %1861 = vmatprep.subr.bf16.mxu0 0
      %1862 = vmatpush1.bf16.msra.mxu0 0
      %1863 = vmatprep.subr.bf16.mxu0 0
      %1864 = vmatpush1.bf16.msra.mxu0 0
      %1865 = vmatprep.subr.bf16.mxu0 0
      %1866 = vmatpush1.bf16.msra.mxu0 0
      %1867 = vmatprep.subr.bf16.mxu0 0
      %1868 = vmatpush1.bf16.msra.mxu0 0
      %1869 = vmatprep.subr.bf16.mxu0 0
      %1870 = vmatpush1.bf16.msra.mxu0 %v1853
      %1871 = vmatprep.subr.bf16.mxu0 0
      %1872 = vmatpush2.bf16.msra.mxu0 0
      %1873 = vmatprep.subr.bf16.mxu0 0
      %1874 = vmatpush2.bf16.msra.mxu0 0
      %1875 = vmatprep.subr.bf16.mxu0 0
      %1876 = vmatpush2.bf16.msra.mxu0 0
      %1877 = vmatprep.subr.bf16.mxu0 0
      %1878 = vmatpush2.bf16.msra.mxu0 0
      %1879 = vmatprep.subr.bf16.mxu0 0
      %1880 = vmatpush2.bf16.msra.mxu0 0
      %1881 = vmatprep.subr.bf16.mxu0 0
      %1882 = vmatpush2.bf16.msra.mxu0 0
      %1883 = vmatprep.subr.bf16.mxu0 0
      %1884 = vmatpush2.bf16.msra.mxu0 0
      %1885 = vmatprep.subr.bf16.mxu0 0
      %1886 = vmatpush2.bf16.msra.mxu0 0
      %1887 = vmatprep.mubr.bf16.mxu0 0
      %1888 = vmatmul.mubr.bf16.gmra.mxu0 %v1850
      %v1889 = vpop.f32.mrf.mxu0
      %v1890 = vadd.f32 0.0, %v1889
      %v1891 = vpop.f32.mrf.mxu0
      %v1892 = vpop.f32.mrf.mxu0
      %v1893 = vpop.f32.mrf.mxu0
      %1894 = vdwg.mxu0
      %v1896 = vsel %vm740, %v1744, 0
      %v1899 = vsel %vm1375, %v1752, 0
      %1901 = vmatprep.subr.bf16.mxu0 0
      %1902 = vmatpush1.bf16.msra.mxu0 0
      %1903 = vmatprep.subr.bf16.mxu0 0
      %1904 = vmatpush1.bf16.msra.mxu0 0
      %1905 = vmatprep.subr.bf16.mxu0 0
      %1906 = vmatpush1.bf16.msra.mxu0 0
      %1907 = vmatprep.subr.bf16.mxu0 0
      %1908 = vmatpush1.bf16.msra.mxu0 0
      %1909 = vmatprep.subr.bf16.mxu0 0
      %1910 = vmatpush1.bf16.msra.mxu0 0
      %1911 = vmatprep.subr.bf16.mxu0 0
      %1912 = vmatpush1.bf16.msra.mxu0 0
      %1913 = vmatprep.subr.bf16.mxu0 0
      %1914 = vmatpush1.bf16.msra.mxu0 0
      %1915 = vmatprep.subr.bf16.mxu0 0
      %1916 = vmatpush1.bf16.msra.mxu0 %v1899
      %1917 = vmatprep.subr.bf16.mxu0 0
      %1918 = vmatpush2.bf16.msra.mxu0 0
      %1919 = vmatprep.subr.bf16.mxu0 0
      %1920 = vmatpush2.bf16.msra.mxu0 0
      %1921 = vmatprep.subr.bf16.mxu0 0
      %1922 = vmatpush2.bf16.msra.mxu0 0
      %1923 = vmatprep.subr.bf16.mxu0 0
      %1924 = vmatpush2.bf16.msra.mxu0 0
      %1925 = vmatprep.subr.bf16.mxu0 0
      %1926 = vmatpush2.bf16.msra.mxu0 0
      %1927 = vmatprep.subr.bf16.mxu0 0
      %1928 = vmatpush2.bf16.msra.mxu0 0
      %1929 = vmatprep.subr.bf16.mxu0 0
      %1930 = vmatpush2.bf16.msra.mxu0 0
      %1931 = vmatprep.subr.bf16.mxu0 0
      %1932 = vmatpush2.bf16.msra.mxu0 0
      %1933 = vmatprep.mubr.bf16.mxu0 0
      %1934 = vmatmul.mubr.bf16.gmra.mxu0 %v1896
      %v1935 = vpop.f32.mrf.mxu0
      %v1936 = vadd.f32 0.0, %v1935
      %v1937 = vpop.f32.mrf.mxu0
      %v1938 = vpop.f32.mrf.mxu0
      %v1939 = vpop.f32.mrf.mxu0
      %1940 = vdwg.mxu0
      %v1942 = vsel %vm740, %v1745, 0
      %v1945 = vsel %vm1375, %v1753, 0
      %1947 = vmatprep.subr.bf16.mxu0 0
      %1948 = vmatpush1.bf16.msra.mxu0 0
      %1949 = vmatprep.subr.bf16.mxu0 0
      %1950 = vmatpush1.bf16.msra.mxu0 0
      %1951 = vmatprep.subr.bf16.mxu0 0
      %1952 = vmatpush1.bf16.msra.mxu0 0
      %1953 = vmatprep.subr.bf16.mxu0 0
      %1954 = vmatpush1.bf16.msra.mxu0 0
      %1955 = vmatprep.subr.bf16.mxu0 0
      %1956 = vmatpush1.bf16.msra.mxu0 0
      %1957 = vmatprep.subr.bf16.mxu0 0
      %1958 = vmatpush1.bf16.msra.mxu0 0
      %1959 = vmatprep.subr.bf16.mxu0 0
      %1960 = vmatpush1.bf16.msra.mxu0 0
      %1961 = vmatprep.subr.bf16.mxu0 0
      %1962 = vmatpush1.bf16.msra.mxu0 %v1945
      %1963 = vmatprep.subr.bf16.mxu0 0
      %1964 = vmatpush2.bf16.msra.mxu0 0
      %1965 = vmatprep.subr.bf16.mxu0 0
      %1966 = vmatpush2.bf16.msra.mxu0 0
      %1967 = vmatprep.subr.bf16.mxu0 0
      %1968 = vmatpush2.bf16.msra.mxu0 0
      %1969 = vmatprep.subr.bf16.mxu0 0
      %1970 = vmatpush2.bf16.msra.mxu0 0
      %1971 = vmatprep.subr.bf16.mxu0 0
      %1972 = vmatpush2.bf16.msra.mxu0 0
      %1973 = vmatprep.subr.bf16.mxu0 0
      %1974 = vmatpush2.bf16.msra.mxu0 0
      %1975 = vmatprep.subr.bf16.mxu0 0
      %1976 = vmatpush2.bf16.msra.mxu0 0
      %1977 = vmatprep.subr.bf16.mxu0 0
      %1978 = vmatpush2.bf16.msra.mxu0 0
      %1979 = vmatprep.mubr.bf16.mxu0 0
      %1980 = vmatmul.mubr.bf16.gmra.mxu0 %v1942
      %v1981 = vpop.f32.mrf.mxu0
      %v1982 = vadd.f32 0.0, %v1981
      %v1983 = vpop.f32.mrf.mxu0
      %v1984 = vpop.f32.mrf.mxu0
      %v1985 = vpop.f32.mrf.mxu0
      %1986 = vdwg.mxu0
      %v1988 = vsel %vm740, %v1746, 0
      %v1991 = vsel %vm1375, %v1754, 0
      %1993 = vmatprep.subr.bf16.mxu0 0
      %1994 = vmatpush1.bf16.msra.mxu0 0
      %1995 = vmatprep.subr.bf16.mxu0 0
      %1996 = vmatpush1.bf16.msra.mxu0 0
      %1997 = vmatprep.subr.bf16.mxu0 0
      %1998 = vmatpush1.bf16.msra.mxu0 0
      %1999 = vmatprep.subr.bf16.mxu0 0
      %2000 = vmatpush1.bf16.msra.mxu0 0
      %2001 = vmatprep.subr.bf16.mxu0 0
      %2002 = vmatpush1.bf16.msra.mxu0 0
      %2003 = vmatprep.subr.bf16.mxu0 0
      %2004 = vmatpush1.bf16.msra.mxu0 0
      %2005 = vmatprep.subr.bf16.mxu0 0
      %2006 = vmatpush1.bf16.msra.mxu0 0
      %2007 = vmatprep.subr.bf16.mxu0 0
      %2008 = vmatpush1.bf16.msra.mxu0 %v1991
      %2009 = vmatprep.subr.bf16.mxu0 0
      %2010 = vmatpush2.bf16.msra.mxu0 0
      %2011 = vmatprep.subr.bf16.mxu0 0
      %2012 = vmatpush2.bf16.msra.mxu0 0
      %2013 = vmatprep.subr.bf16.mxu0 0
      %2014 = vmatpush2.bf16.msra.mxu0 0
      %2015 = vmatprep.subr.bf16.mxu0 0
      %2016 = vmatpush2.bf16.msra.mxu0 0
      %2017 = vmatprep.subr.bf16.mxu0 0
      %2018 = vmatpush2.bf16.msra.mxu0 0
      %2019 = vmatprep.subr.bf16.mxu0 0
      %2020 = vmatpush2.bf16.msra.mxu0 0
      %2021 = vmatprep.subr.bf16.mxu0 0
      %2022 = vmatpush2.bf16.msra.mxu0 0
      %2023 = vmatprep.subr.bf16.mxu0 0
      %2024 = vmatpush2.bf16.msra.mxu0 0
      %2025 = vmatprep.mubr.bf16.mxu0 0
      %2026 = vmatmul.mubr.bf16.gmra.mxu0 %v1988
      %v2027 = vpop.f32.mrf.mxu0
      %v2028 = vadd.f32 0.0, %v2027
      %v2029 = vpop.f32.mrf.mxu0
      %v2030 = vpop.f32.mrf.mxu0
      %v2031 = vpop.f32.mrf.mxu0
      %2032 = vdwg.mxu0
      %v2034 = vsel %vm740, %v1747, 0
      %v2037 = vsel %vm1375, %v1755, 0
      %2039 = vmatprep.subr.bf16.mxu0 0
      %2040 = vmatpush1.bf16.msra.mxu0 0
      %2041 = vmatprep.subr.bf16.mxu0 0
      %2042 = vmatpush1.bf16.msra.mxu0 0
      %2043 = vmatprep.subr.bf16.mxu0 0
      %2044 = vmatpush1.bf16.msra.mxu0 0
      %2045 = vmatprep.subr.bf16.mxu0 0
      %2046 = vmatpush1.bf16.msra.mxu0 0
      %2047 = vmatprep.subr.bf16.mxu0 0
      %2048 = vmatpush1.bf16.msra.mxu0 0
      %2049 = vmatprep.subr.bf16.mxu0 0
      %2050 = vmatpush1.bf16.msra.mxu0 0
      %2051 = vmatprep.subr.bf16.mxu0 0
      %2052 = vmatpush1.bf16.msra.mxu0 0
      %2053 = vmatprep.subr.bf16.mxu0 0
      %2054 = vmatpush1.bf16.msra.mxu0 %v2037
      %2055 = vmatprep.subr.bf16.mxu0 0
      %2056 = vmatpush2.bf16.msra.mxu0 0
      %2057 = vmatprep.subr.bf16.mxu0 0
      %2058 = vmatpush2.bf16.msra.mxu0 0
      %2059 = vmatprep.subr.bf16.mxu0 0
      %2060 = vmatpush2.bf16.msra.mxu0 0
      %2061 = vmatprep.subr.bf16.mxu0 0
      %2062 = vmatpush2.bf16.msra.mxu0 0
      %2063 = vmatprep.subr.bf16.mxu0 0
      %2064 = vmatpush2.bf16.msra.mxu0 0
      %2065 = vmatprep.subr.bf16.mxu0 0
      %2066 = vmatpush2.bf16.msra.mxu0 0
      %2067 = vmatprep.subr.bf16.mxu0 0
      %2068 = vmatpush2.bf16.msra.mxu0 0
      %2069 = vmatprep.subr.bf16.mxu0 0
      %2070 = vmatpush2.bf16.msra.mxu0 0
      %2071 = vmatprep.mubr.bf16.mxu0 0
      %2072 = vmatmul.mubr.bf16.gmra.mxu0 %v2034
      %v2073 = vpop.f32.mrf.mxu0
      %v2074 = vadd.f32 0.0, %v2073
      %v2075 = vpop.f32.mrf.mxu0
      %v2076 = vpop.f32.mrf.mxu0
      %v2077 = vpop.f32.mrf.mxu0
      %2078 = vdwg.mxu0
      %v2080 = vsel %vm740, %v1748, 0
      %v2083 = vsel %vm1375, %v1756, 0
      %2085 = vmatprep.subr.bf16.mxu0 0
      %2086 = vmatpush1.bf16.msra.mxu0 0
      %2087 = vmatprep.subr.bf16.mxu0 0
      %2088 = vmatpush1.bf16.msra.mxu0 0
      %2089 = vmatprep.subr.bf16.mxu0 0
      %2090 = vmatpush1.bf16.msra.mxu0 0
      %2091 = vmatprep.subr.bf16.mxu0 0
      %2092 = vmatpush1.bf16.msra.mxu0 0
      %2093 = vmatprep.subr.bf16.mxu0 0
      %2094 = vmatpush1.bf16.msra.mxu0 0
      %2095 = vmatprep.subr.bf16.mxu0 0
      %2096 = vmatpush1.bf16.msra.mxu0 0
      %2097 = vmatprep.subr.bf16.mxu0 0
      %2098 = vmatpush1.bf16.msra.mxu0 0
      %2099 = vmatprep.subr.bf16.mxu0 0
      %2100 = vmatpush1.bf16.msra.mxu0 %v2083
      %2101 = vmatprep.subr.bf16.mxu0 0
      %2102 = vmatpush2.bf16.msra.mxu0 0
      %2103 = vmatprep.subr.bf16.mxu0 0
      %2104 = vmatpush2.bf16.msra.mxu0 0
      %2105 = vmatprep.subr.bf16.mxu0 0
      %2106 = vmatpush2.bf16.msra.mxu0 0
      %2107 = vmatprep.subr.bf16.mxu0 0
      %2108 = vmatpush2.bf16.msra.mxu0 0
      %2109 = vmatprep.subr.bf16.mxu0 0
      %2110 = vmatpush2.bf16.msra.mxu0 0
      %2111 = vmatprep.subr.bf16.mxu0 0
      %2112 = vmatpush2.bf16.msra.mxu0 0
      %2113 = vmatprep.subr.bf16.mxu0 0
      %2114 = vmatpush2.bf16.msra.mxu0 0
      %2115 = vmatprep.subr.bf16.mxu0 0
      %2116 = vmatpush2.bf16.msra.mxu0 0
      %2117 = vmatprep.mubr.bf16.mxu0 0
      %2118 = vmatmul.mubr.bf16.gmra.mxu0 %v2080
      %v2119 = vpop.f32.mrf.mxu0
      %v2120 = vadd.f32 0.0, %v2119
      %v2121 = vpop.f32.mrf.mxu0
      %v2122 = vpop.f32.mrf.mxu0
      %v2123 = vpop.f32.mrf.mxu0
      %2124 = vdwg.mxu0
      %v2125 = vsel %vm549, %v1798, 0.0
      %v2126 = vsel %vm549, %v1844, 0.0
      %v2127 = vadd.f32 %v2125, %v2126
      %v2128 = vsel %vm549, %v1890, 0.0
      %v2129 = vadd.f32 %v2127, %v2128
      %v2130 = vsel %vm549, %v1936, 0.0
      %v2131 = vadd.f32 %v2129, %v2130
      %v2132 = vsel %vm549, %v1982, 0.0
      %v2133 = vadd.f32 %v2131, %v2132
      %v2134 = vsel %vm549, %v2028, 0.0
      %v2135 = vadd.f32 %v2133, %v2134
      %v2136 = vsel %vm549, %v2074, 0.0
      %v2137 = vadd.f32 %v2135, %v2136
      %v2138 = vsel %vm549, %v2120, 0.0
      %v2139 = vadd.f32 %v2137, %v2138
      %v2140 = vadd.f32 %v514, %v2139
      %v2141 = vld [vmem:[%s5] sm:$0x1]
      %v2142 = vld [vmem:[%s6] sm:$0x1]
      %v2143 = vsel %vm549, %v2140, 0.0
      %2144 = vadd.xlane.f32.xlu0 %v2143
      %v2145 = vpop.xlane.xlu0 %2144
      %v2146 = vrcp.pop 64.0
      %v2147 = vmul.f32 %v2145, %v2146
      %v2148 = vsub.f32 %v2140, %v2147
      %v2149 = vmul.f32 %v2148, %v2148
      %v2150 = vsel %vm549, %v2149, 0.0
      %2151 = vadd.xlane.f32.xlu0 %v2150
      %v2152 = vpop.xlane.xlu0 %2151
      %v2153 = vmul.f32 %v2152, %v2146
      %v2154 = vadd.f32 %v2153, 1e-06
      %v2155 = vrsqrt.pop %v2154
      %v2156 = vmul.f32 %v2148, %v2155
      %v2158 = vlaneseq
      %v2159 = vshrl.u32 %v2158, 7
      %v2160 = vsub.s32 0, %v2159
      %v2161 = vrot.slane %v2141, %v2160
      %v2163 = vmul.f32 %v2156, %v2161
      %v2165 = vlaneseq
      %v2166 = vshrl.u32 %v2165, 7
      %v2167 = vsub.s32 0, %v2166
      %v2168 = vrot.slane %v2142, %v2167
      %v2170 = vadd.f32 %v2163, %v2168
      %v2171 = vadd.f32 %v514, %v2170
      %v2172 = vld [vmem:[%s7] sm:$0x1]
      %v2173 = vld [vmem:[%s8] sm:$0x1]
      %v2174 = vsel %vm549, %v2171, 0.0
      %2175 = vadd.xlane.f32.xlu0 %v2174
      %v2176 = vpop.xlane.xlu0 %2175
      %v2177 = vmul.f32 %v2176, %v2146
      %v2178 = vsub.f32 %v2171, %v2177
      %v2179 = vmul.f32 %v2178, %v2178
      %v2180 = vsel %vm549, %v2179, 0.0
      %2181 = vadd.xlane.f32.xlu0 %v2180
      %v2182 = vpop.xlane.xlu0 %2181
      %v2183 = vmul.f32 %v2182, %v2146
      %v2184 = vadd.f32 %v2183, 1e-05
      %v2185 = vrsqrt.pop %v2184
      %v2186 = vmul.f32 %v2178, %v2185
      %v2188 = vlaneseq
      %v2189 = vshrl.u32 %v2188, 7
      %v2190 = vsub.s32 0, %v2189
      %v2191 = vrot.slane %v2172, %v2190
      %v2193 = vmul.f32 %v2186, %v2191
      %v2195 = vlaneseq
      %v2196 = vshrl.u32 %v2195, 7
      %v2197 = vsub.s32 0, %v2196
      %v2198 = vrot.slane %v2173, %v2197
      %v2200 = vadd.f32 %v2193, %v2198
      %v2201 = vpack.c.bf16 %v2200, %v2200
      %v2202 = vld [vmem:[%s9] sm:$0xff]
      %v2203 = vld [vmem:[%s9 + $0x8] sm:$0xff]
      %v2204 = vld [vmem:[%s9 + $0x10] sm:$0xff]
      %v2205 = vld [vmem:[%s9 + $0x18] sm:$0xff]
      %v2206 = vld [vmem:[%s9 + $0x20] sm:$0xff]
      %v2207 = vld [vmem:[%s9 + $0x28] sm:$0xff]
      %v2208 = vld [vmem:[%s9 + $0x30] sm:$0xff]
      %v2209 = vld [vmem:[%s9 + $0x38] sm:$0xff]
      %v2210 = vld [vmem:[%s10] sm:$0x3]
      %v2212 = vlaneseq
      %v2213 = vshrl.u32 %v2212, 7
      %v2214 = vsub.s32 0, %v2213
      %v2215 = vrot.slane %v2210, %v2214
      %v2216 = vlaneseq
      %v2217 = vshrl.u32 %v2216, 7
      %v2218 = vsub.s32 1, %v2217
      %v2219 = vrot.slane %v2210, %v2218
      %v2230 = vunpack.c.l.b16 %v2202
      %v2231 = vunpack.c.h.b16 %v2202
      %v2232 = vunpack.c.l.b16 %v2203
      %v2233 = vunpack.c.h.b16 %v2203
      %v2234 = vunpack.c.l.b16 %v2204
      %v2235 = vunpack.c.h.b16 %v2204
      %v2236 = vunpack.c.l.b16 %v2205
      %v2237 = vunpack.c.h.b16 %v2205
      %v2238 = vunpack.c.l.b16 %v2206
      %v2239 = vunpack.c.h.b16 %v2206
      %v2240 = vunpack.c.l.b16 %v2207
      %v2241 = vunpack.c.h.b16 %v2207
      %v2242 = vunpack.c.l.b16 %v2208
      %v2243 = vunpack.c.h.b16 %v2208
      %v2244 = vunpack.c.l.b16 %v2209
      %v2245 = vunpack.c.h.b16 %v2209
      %v2246 = vpack.c.b16 %v2232, %v2230
      %v2247 = vpack.c.b16 %v2233, %v2231
      %v2248 = vpack.c.b16 %v2236, %v2234
      %v2249 = vpack.c.b16 %v2237, %v2235
      %v2250 = vpack.c.b16 %v2240, %v2238
      %v2251 = vpack.c.b16 %v2241, %v2239
      %v2252 = vpack.c.b16 %v2244, %v2242
      %v2253 = vpack.c.b16 %v2245, %v2243
      %v2263 = vsel %vm549, %v2201, 0
      %2265 = vmatprep.subr.bf16.mxu0 0
      %2266 = vmatpush1.bf16.msra.mxu0 0
      %2267 = vmatprep.subr.bf16.mxu0 0
      %2268 = vmatpush1.bf16.msra.mxu0 0
      %2269 = vmatprep.subr.bf16.mxu0 0
      %2270 = vmatpush1.bf16.msra.mxu0 0
      %2271 = vmatprep.subr.bf16.mxu0 0
      %2272 = vmatpush1.bf16.msra.mxu0 0
      %2273 = vmatprep.subr.bf16.mxu0 %v2253
      %2274 = vmatpush1.bf16.msra.mxu0 %v2252
      %2275 = vmatprep.subr.bf16.mxu0 %v2251
      %2276 = vmatpush1.bf16.msra.mxu0 %v2250
      %2277 = vmatprep.subr.bf16.mxu0 %v2249
      %2278 = vmatpush1.bf16.msra.mxu0 %v2248
      %2279 = vmatprep.subr.bf16.mxu0 %v2247
      %2280 = vmatpush1.bf16.msra.mxu0 %v2246
      %2281 = vmatprep.subr.bf16.mxu0 0
      %2282 = vmatpush2.bf16.msra.mxu0 0
      %2283 = vmatprep.subr.bf16.mxu0 0
      %2284 = vmatpush2.bf16.msra.mxu0 0
      %2285 = vmatprep.subr.bf16.mxu0 0
      %2286 = vmatpush2.bf16.msra.mxu0 0
      %2287 = vmatprep.subr.bf16.mxu0 0
      %2288 = vmatpush2.bf16.msra.mxu0 0
      %2289 = vmatprep.subr.bf16.mxu0 0
      %2290 = vmatpush2.bf16.msra.mxu0 0
      %2291 = vmatprep.subr.bf16.mxu0 0
      %2292 = vmatpush2.bf16.msra.mxu0 0
      %2293 = vmatprep.subr.bf16.mxu0 0
      %2294 = vmatpush2.bf16.msra.mxu0 0
      %2295 = vmatprep.subr.bf16.mxu0 0
      %2296 = vmatpush2.bf16.msra.mxu0 0
      %2297 = vmatprep.mubr.bf16.mxu0 0
      %2298 = vmatmul.mubr.bf16.gmra.mxu0 %v2263
      %v2299 = vpop.f32.mrf.mxu0
      %v2300 = vadd.f32 %v2215, %v2299
      %v2301 = vpop.f32.mrf.mxu0
      %v2302 = vadd.f32 %v2219, %v2301
      %v2303 = vpop.f32.mrf.mxu0
      %v2304 = vpop.f32.mrf.mxu0
      %2305 = vdwg.mxu0
      %v2306 = vmax.f32 %v2300, 0.0
      %v2307 = vmax.f32 %v2302, 0.0
      %v2308 = vpack.c.bf16 %v2306, %v2306
      %v2309 = vpack.c.bf16 %v2307, %v2307
      %v2310 = vld [vmem:[%s11] sm:$0xf]
      %v2311 = vld [vmem:[%s11 + $0x4] sm:$0xf]
      %v2312 = vld [vmem:[%s11 + $0x8] sm:$0xf]
      %v2313 = vld [vmem:[%s11 + $0xc] sm:$0xf]
      %v2314 = vld [vmem:[%s11 + $0x10] sm:$0xf]
      %v2315 = vld [vmem:[%s11 + $0x14] sm:$0xf]
      %v2316 = vld [vmem:[%s11 + $0x18] sm:$0xf]
      %v2317 = vld [vmem:[%s11 + $0x1c] sm:$0xf]
      %v2318 = vld [vmem:[%s11 + $0x20] sm:$0xf]
      %v2319 = vld [vmem:[%s11 + $0x24] sm:$0xf]
      %v2320 = vld [vmem:[%s11 + $0x28] sm:$0xf]
      %v2321 = vld [vmem:[%s11 + $0x2c] sm:$0xf]
      %v2322 = vld [vmem:[%s11 + $0x30] sm:$0xf]
      %v2323 = vld [vmem:[%s11 + $0x34] sm:$0xf]
      %v2324 = vld [vmem:[%s11 + $0x38] sm:$0xf]
      %v2325 = vld [vmem:[%s11 + $0x3c] sm:$0xf]
      %v2326 = vld [vmem:[%s11 + $0x40] sm:$0xf]
      %v2327 = vld [vmem:[%s11 + $0x44] sm:$0xf]
      %v2328 = vld [vmem:[%s11 + $0x48] sm:$0xf]
      %v2329 = vld [vmem:[%s11 + $0x4c] sm:$0xf]
      %v2330 = vld [vmem:[%s11 + $0x50] sm:$0xf]
      %v2331 = vld [vmem:[%s11 + $0x54] sm:$0xf]
      %v2332 = vld [vmem:[%s11 + $0x58] sm:$0xf]
      %v2333 = vld [vmem:[%s11 + $0x5c] sm:$0xf]
      %v2334 = vld [vmem:[%s11 + $0x60] sm:$0xf]
      %v2335 = vld [vmem:[%s11 + $0x64] sm:$0xf]
      %v2336 = vld [vmem:[%s11 + $0x68] sm:$0xf]
      %v2337 = vld [vmem:[%s11 + $0x6c] sm:$0xf]
      %v2338 = vld [vmem:[%s11 + $0x70] sm:$0xf]
      %v2339 = vld [vmem:[%s11 + $0x74] sm:$0xf]
      %v2340 = vld [vmem:[%s11 + $0x78] sm:$0xf]
      %v2341 = vld [vmem:[%s11 + $0x7c] sm:$0xf]
      %v2342 = vld [vmem:[%s12] sm:$0x1]
      %v2344 = vlaneseq
      %v2345 = vshrl.u32 %v2344, 7
      %v2346 = vsub.s32 0, %v2345
      %v2347 = vrot.slane %v2342, %v2346
      %v2381 = vunpack.c.l.b16 %v2310
      %v2382 = vunpack.c.l.b16 %v2311
      %v2383 = vunpack.c.l.b16 %v2312
      %v2384 = vunpack.c.l.b16 %v2313
      %v2385 = vunpack.c.l.b16 %v2314
      %v2386 = vunpack.c.l.b16 %v2315
      %v2387 = vunpack.c.l.b16 %v2316
      %v2388 = vunpack.c.l.b16 %v2317
      %v2389 = vunpack.c.l.b16 %v2318
      %v2390 = vunpack.c.l.b16 %v2319
      %v2391 = vunpack.c.l.b16 %v2320
      %v2392 = vunpack.c.l.b16 %v2321
      %v2393 = vunpack.c.l.b16 %v2322
      %v2394 = vunpack.c.l.b16 %v2323
      %v2395 = vunpack.c.l.b16 %v2324
      %v2396 = vunpack.c.l.b16 %v2325
      %v2397 = vunpack.c.l.b16 %v2326
      %v2398 = vunpack.c.l.b16 %v2327
      %v2399 = vunpack.c.l.b16 %v2328
      %v2400 = vunpack.c.l.b16 %v2329
      %v2401 = vunpack.c.l.b16 %v2330
      %v2402 = vunpack.c.l.b16 %v2331
      %v2403 = vunpack.c.l.b16 %v2332
      %v2404 = vunpack.c.l.b16 %v2333
      %v2405 = vunpack.c.l.b16 %v2334
      %v2406 = vunpack.c.l.b16 %v2335
      %v2407 = vunpack.c.l.b16 %v2336
      %v2408 = vunpack.c.l.b16 %v2337
      %v2409 = vunpack.c.l.b16 %v2338
      %v2410 = vunpack.c.l.b16 %v2339
      %v2411 = vunpack.c.l.b16 %v2340
      %v2412 = vunpack.c.l.b16 %v2341
      %v2413 = vpack.c.b16 %v2382, %v2381
      %v2414 = vpack.c.b16 %v2384, %v2383
      %v2415 = vpack.c.b16 %v2386, %v2385
      %v2416 = vpack.c.b16 %v2388, %v2387
      %v2417 = vpack.c.b16 %v2390, %v2389
      %v2418 = vpack.c.b16 %v2392, %v2391
      %v2419 = vpack.c.b16 %v2394, %v2393
      %v2420 = vpack.c.b16 %v2396, %v2395
      %v2421 = vpack.c.b16 %v2398, %v2397
      %v2422 = vpack.c.b16 %v2400, %v2399
      %v2423 = vpack.c.b16 %v2402, %v2401
      %v2424 = vpack.c.b16 %v2404, %v2403
      %v2425 = vpack.c.b16 %v2406, %v2405
      %v2426 = vpack.c.b16 %v2408, %v2407
      %v2427 = vpack.c.b16 %v2410, %v2409
      %v2428 = vpack.c.b16 %v2412, %v2411
      %2445 = vmatprep.subr.bf16.mxu0 0
      %2446 = vmatpush1.bf16.msra.mxu0 %v2420
      %2447 = vmatprep.subr.bf16.mxu0 0
      %2448 = vmatpush1.bf16.msra.mxu0 %v2419
      %2449 = vmatprep.subr.bf16.mxu0 0
      %2450 = vmatpush1.bf16.msra.mxu0 %v2418
      %2451 = vmatprep.subr.bf16.mxu0 0
      %2452 = vmatpush1.bf16.msra.mxu0 %v2417
      %2453 = vmatprep.subr.bf16.mxu0 0
      %2454 = vmatpush1.bf16.msra.mxu0 %v2416
      %2455 = vmatprep.subr.bf16.mxu0 0
      %2456 = vmatpush1.bf16.msra.mxu0 %v2415
      %2457 = vmatprep.subr.bf16.mxu0 0
      %2458 = vmatpush1.bf16.msra.mxu0 %v2414
      %2459 = vmatprep.subr.bf16.mxu0 0
      %2460 = vmatpush1.bf16.msra.mxu0 %v2413
      %2461 = vmatprep.subr.bf16.mxu0 0
      %2462 = vmatpush2.bf16.msra.mxu0 %v2428
      %2463 = vmatprep.subr.bf16.mxu0 0
      %2464 = vmatpush2.bf16.msra.mxu0 %v2427
      %2465 = vmatprep.subr.bf16.mxu0 0
      %2466 = vmatpush2.bf16.msra.mxu0 %v2426
      %2467 = vmatprep.subr.bf16.mxu0 0
      %2468 = vmatpush2.bf16.msra.mxu0 %v2425
      %2469 = vmatprep.subr.bf16.mxu0 0
      %2470 = vmatpush2.bf16.msra.mxu0 %v2424
      %2471 = vmatprep.subr.bf16.mxu0 0
      %2472 = vmatpush2.bf16.msra.mxu0 %v2423
      %2473 = vmatprep.subr.bf16.mxu0 0
      %2474 = vmatpush2.bf16.msra.mxu0 %v2422
      %2475 = vmatprep.subr.bf16.mxu0 0
      %2476 = vmatpush2.bf16.msra.mxu0 %v2421
      %2477 = vmatprep.mubr.bf16.mxu0 %v2309
      %2478 = vmatmul.mubr.bf16.gmra.mxu0 %v2308
      %v2479 = vpop.f32.mrf.mxu0
      %v2480 = vadd.f32 %v2347, %v2479
      %v2481 = vpop.f32.mrf.mxu0
      %v2482 = vpop.f32.mrf.mxu0
      %v2483 = vpop.f32.mrf.mxu0
      %2484 = vdwg.mxu0
      %v2485 = vadd.f32 %v2200, %v2480
      %v2486 = vld [vmem:[%s13] sm:$0x1]
      %v2487 = vld [vmem:[%s14] sm:$0x1]
      %v2488 = vsel %vm549, %v2485, 0.0
      %2489 = vadd.xlane.f32.xlu0 %v2488
      %v2490 = vpop.xlane.xlu0 %2489
      %v2491 = vmul.f32 %v2490, %v2146
      %v2492 = vsub.f32 %v2485, %v2491
      %v2493 = vmul.f32 %v2492, %v2492
      %v2494 = vsel %vm549, %v2493, 0.0
      %2495 = vadd.xlane.f32.xlu0 %v2494
      %v2496 = vpop.xlane.xlu0 %2495
      %v2497 = vmul.f32 %v2496, %v2146
      %v2498 = vadd.f32 %v2497, 1e-05
      %v2499 = vrsqrt.pop %v2498
      %v2500 = vmul.f32 %v2492, %v2499
      %v2502 = vlaneseq
      %v2503 = vshrl.u32 %v2502, 7
      %v2504 = vsub.s32 0, %v2503
      %v2505 = vrot.slane %v2486, %v2504
      %v2507 = vmul.f32 %v2500, %v2505
      %v2509 = vlaneseq
      %v2510 = vshrl.u32 %v2509, 7
      %v2511 = vsub.s32 0, %v2510
      %v2512 = vrot.slane %v2487, %v2511
      %v2514 = vadd.f32 %v2507, %v2512
      %2515 = vst.msk [vmem:[%s509] sm:$0xff] %vm549, %v2514
      %p2516 = scmp.lt.s32.totalorder %s30, 1
      %s2517 = scalar_select %p2516, %s30, 1
      %p2518 = scmp.lt.s32.totalorder %s31, 0
      %s2519 = scalar_select %p2518, %s31, 0
      %s2520 = sadd.s32 %s2519, %s2517
      %s2521 = smul.addr %s2520, 8
      %s2522 = scalar_lea.vmem %s15, %s2521
      // Predicated region
      $region81: #{multi_head_atten_forward.5} parent=79 // pred_check
        %p2523 = pneg %p378
      $region82: #{multi_head_atten_forward.5} parent=79 // pred_check_branch
        %2525 = sbr.rel (%p2523) target = $region84
      $region83: #{multi_head_atten_forward.5} parent=79 // pred_region
        _
      $region84: #{multi_head_atten_forward.5} parent=79 // pred_fallthru
        _
    $region80: #{multi_head_atten_forward.5} parent=5 // pred_fallthru
      _
    %p2526 = scmp.le.s32.totalorder 2, %s21
    // Predicated region
    $region85: #{multi_head_atten_forward.5} parent=5 // pred_check
      %p2527 = pneg %p2526
    $region86: #{multi_head_atten_forward.5} parent=5 // pred_check_branch
      %2529 = sbr.rel (%p2527) target = $region88
    $region87: #{multi_head_atten_forward.5} parent=5 // pred_region
      %s2530 = ssub.s32 %s21, 2
      // Predicated region
      $region89: #{multi_head_atten_forward.5} parent=87 // pred_check
        %p2531 = pneg %p384
      $region90: #{multi_head_atten_forward.5} parent=87 // pred_check_branch
        %2533 = sbr.rel (%p2531) target = $region92
      $region91: #{multi_head_atten_forward.5} parent=87 // pred_region
        %p2534 = scmp.lt.s32.totalorder %s32, 1
        %s2535 = scalar_select %p2534, %s32, 1
        %p2536 = scmp.lt.s32.totalorder %s33, 0
        %s2537 = scalar_select %p2536, %s33, 0
        %s2538 = sadd.s32 %s2537, %s2535
        %s2539 = smul.addr %s2538, 8
        %s2540 = scalar_lea.vmem %s15, %s2539
      $region92: #{multi_head_atten_forward.5} parent=87 // pred_fallthru
        _
    $region88: #{multi_head_atten_forward.5} parent=5 // pred_fallthru
      _
  $region6: #{multi_head_atten_forward.5} parent=0 // loop_footer
    %s25 = sadd.s32 1, %s21
  $region7: #{multi_head_atten_forward.5} parent=0 // loop_footer_branch
    %20 = sbr.rel target = $region3
  $region8: #{multi_head_atten_forward.5} parent=0 // loop_exit
    _

</llo_original>
